<compile_context>
chip_gen: v7x
topology: tpu7x:2x2x1
jax: 0.10.0
libtpu: 0.0.40
codegen_flags: <defaults>
</compile_context>

<pallas_src>
import numpy as np

import jax
import jax.numpy as jnp
from jax.experimental import pallas as pl
from jax.experimental.pallas import tpu as pltpu


# ----------------------------------------------------------------------------
# Fused kernel: avgpool + fc (accumulated over channel blocks) + label-driven
# reweight + map scaling, all in one pipelined pass over x and map.
# ----------------------------------------------------------------------------
def _fused_kernel(x_ref, m_ref, w_ref, wt_ref, b_ref, lab_ref,
                  logits_ref, o_ref, acc_ref):
    """One (batch, channel-block) step.

    x_ref:      (1, cb, HW)  activation block (NCHW, spatial on the lane axis)
    m_ref:      (1, cb, HW)  map block
    w_ref:      (K, cb)      fc-weight columns for this channel block
    wt_ref:     (cb, K)      same columns, transposed (reweight column source)
    b_ref:      (K, 1)       fc bias (column)
    lab_ref:    (1, 1, K)    multi-hot label row for this batch
    logits_ref: (1, K, 1)    fc(avgpool(x))   -- resident, written at last block
    o_ref:      (1, cb, HW)  map * reweight block
    acc_ref:    (K, 1)       VMEM scratch: running logits sum over channel blocks
    """
    j = pl.program_id(1)
    inv_hw = 1.0 / float(x_ref.shape[-1])

    # avgpool and the linear layer commute:
    #   fc(mean_hw(x)) == mean_hw(W @ x) + b
    # -> per-block MXU matmul (K, cb) @ (cb, HW), lane reduce over HW,
    #    accumulated over the channel-block ("arbitrary") grid axis.
    s = jnp.dot(w_ref[...], x_ref[0], preferred_element_type=jnp.float32)  # (K, HW)
    partial = jnp.sum(s, axis=-1, keepdims=True)                           # (K, 1)

    @pl.when(j == 0)
    def _():
        acc_ref[...] = jnp.zeros_like(acc_ref)

    acc_ref[...] += partial

    # reweight[c] = sum_k W[k, c] * (label[k] != 0), kept in column (sublane)
    # orientation so it broadcasts along the spatial lane axis of the map.
    mask = (lab_ref[0] != 0.0).astype(jnp.float32)                         # (1, K)
    rw = jnp.sum(wt_ref[...] * mask, axis=-1, keepdims=True)               # (cb, 1)

    # Scale the map block in the same pass (per-channel broadcast multiply).
    o_ref[...] = (m_ref[...] * rw[None]).astype(o_ref.dtype)

    @pl.when(j == pl.num_programs(1) - 1)
    def _():
        logits_ref[...] = (
            acc_ref[...] * inv_hw + b_ref[...])[None].astype(logits_ref.dtype)


def _pick_channel_block(C, HW, itemsize=4, budget_bytes=12 << 20):
    """Largest channel block whose double-buffered footprint of the three big
    streams (x in, map in, out) fits a conservative VMEM budget on every TPU
    generation.  If cb < C it must be a multiple of 128 (weight-block lane
    rule), so candidates are restricted accordingly."""
    cands = [C] + [c for c in (1024, 512, 384, 256, 128) if c < C and C % c == 0]
    for cb in cands:
        if 2 * 3 * cb * HW * itemsize <= budget_bytes:
            return cb
    return cands[-1]


# ----------------------------------------------------------------------------
# Forward wrapper
# ----------------------------------------------------------------------------
def classifer_forward(x, fmap, label, params):
    """JAX/Pallas equivalent of classifer.forward(x, map, label).

    x:     (B, 512, 28, 28) float32
    fmap:  (B, 512, 28, 28) float32
    label: (B, 20)          multi-hot (any dtype; nonzero entries count once)
    returns (logits (B, 20), fmap * reweight (B, 512, 28, 28))
    """
    w = params["fc_w"]                        # (K, C)
    b = params["fc_b"]                        # (K,)
    B, C, H, Wsp = x.shape
    K = w.shape[0]
    HW = H * Wsp

    x3 = x.reshape(B, C, HW)                  # free reshape (contiguous, NCHW kept)
    m3 = fmap.reshape(B, C, HW)
    lab3 = label.astype(jnp.float32).reshape(B, 1, K)
    wt = w.T                                  # tiny glue (C x K)
    b_col = b.reshape(K, 1)

    cb = _pick_channel_block(C, HW, jnp.dtype(x.dtype).itemsize)
    n_cblk = C // cb

    logits3, out3 = pl.pallas_call(
        _fused_kernel,
        out_shape=(
            jax.ShapeDtypeStruct((B, K, 1), jnp.float32),
            jax.ShapeDtypeStruct((B, C, HW), fmap.dtype),
        ),
        grid=(B, n_cblk),
        in_specs=[
            pl.BlockSpec((1, cb, HW), lambda i, j: (i, j, 0)),   # x block
            pl.BlockSpec((1, cb, HW), lambda i, j: (i, j, 0)),   # map block
            pl.BlockSpec((K, cb), lambda i, j: (0, j)),          # W columns
            pl.BlockSpec((cb, K), lambda i, j: (j, 0)),          # W.T rows
            pl.BlockSpec((K, 1), lambda i, j: (0, 0)),           # bias
            pl.BlockSpec((1, 1, K), lambda i, j: (i, 0, 0)),     # label
        ],
        out_specs=(
            pl.BlockSpec((1, K, 1), lambda i, j: (i, 0, 0)),     # logits (resident)
            pl.BlockSpec((1, cb, HW), lambda i, j: (i, j, 0)),   # scaled map
        ),
        scratch_shapes=[pltpu.VMEM((K, 1), jnp.float32)],
        compiler_params=pltpu.CompilerParams(
            # channel axis carries the logits accumulation -> "arbitrary";
            # batch stays "parallel" so both v7x TensorCores get work (B >= 2)
            # and megacore pipelining applies on all generations.
            dimension_semantics=("parallel", "arbitrary")),
    )(x3, m3, w, wt, b_col, lab3)

    return logits3.reshape(B, K), out3.reshape(B, C, H, Wsp)


# ----------------------------------------------------------------------------
# Main
# ----------------------------------------------------------------------------
if __name__ == "__main__":
    # AvgPool2d(28) + Linear(512, 20) hard-code C=512, 28x28 spatial, 20
    # classes; batch=2 keeps the run small (and gives v7x two parallel steps).
    B, C, H, Wsp, K = 2, 512, 28, 28, 20

    key = jax.random.PRNGKey(0)
    kx, km, kl, kw, kb = jax.random.split(key, 5)
    x = jax.random.normal(kx, (B, C, H, Wsp), jnp.float32)
    fmap = jax.random.normal(km, (B, C, H, Wsp), jnp.float32)
    label = (jax.random.uniform(kl, (B, K)) > 0.7).astype(jnp.float32)
    params = {
        "fc_w": jax.random.normal(kw, (K, C), jnp.float32) * (1.0 / np.sqrt(C)),
        "fc_b": jax.random.normal(kb, (K,), jnp.float32) * 0.01,
    }

    fwd = jax.jit(classifer_forward)
    logits, new_map = fwd(x, fmap, label, params)
    jax.block_until_ready((logits, new_map))

    # Pure-JAX reference (same semantics as the PyTorch module, eval mode).
    pooled = jnp.mean(x.reshape(B, C, -1), axis=-1)                 # (B, C)
    logits_ref = pooled @ params["fc_w"].T + params["fc_b"]         # (B, K)
    rw_ref = (label != 0).astype(jnp.float32) @ params["fc_w"]      # (B, C)
    map_ref = fmap * rw_ref[:, :, None, None]

    assert logits.shape == (B, K)
    assert new_map.shape == (B, C, H, Wsp)
    np.testing.assert_allclose(np.asarray(logits), np.asarray(logits_ref),
                               rtol=1e-3, atol=1e-3)
    np.testing.assert_allclose(np.asarray(new_map), np.asarray(map_ref),
                               rtol=1e-3, atol=1e-3)
    print("KERNEL_OK")
</pallas_src>

<mosaic_0001>
module attributes {stable_mosaic.version = 11 : i64} {
  func.func @_fused_kernel(%arg0: i32, %arg1: i32, %arg2: memref<1x512x784xf32, #tpu.memory_space<vmem>>, %arg3: memref<1x512x784xf32, #tpu.memory_space<vmem>>, %arg4: memref<20x512xf32, #tpu.memory_space<vmem>>, %arg5: memref<512x20xf32, #tpu.memory_space<vmem>>, %arg6: memref<20x1xf32, #tpu.memory_space<vmem>>, %arg7: memref<1x1x20xf32, #tpu.memory_space<vmem>>, %arg8: memref<1x20x1xf32, #tpu.memory_space<vmem>>, %arg9: memref<1x512x784xf32, #tpu.memory_space<vmem>>, %arg10: memref<20x1xf32, #tpu.memory_space<vmem>>) attributes {dimension_semantics = [#tpu.dimension_semantics<parallel>, #tpu.dimension_semantics<arbitrary>], iteration_bounds = array<i64: 2, 1>, scalar_prefetch = 0 : i64, scratch_operands = 1 : i64, tpu.core_type = #tpu.core_type<tc>, window_params = [{transform_indices = @transform_0, window_bounds = array<i64: 1, 512, 784>}, {transform_indices = @transform_1, window_bounds = array<i64: 1, 512, 784>}, {transform_indices = @transform_2, window_bounds = array<i64: 20, 512>}, {transform_indices = @transform_3, window_bounds = array<i64: 512, 20>}, {pipeline_mode = #tpu.pipeline_mode<synchronous>, transform_indices = @transform_4, window_bounds = array<i64: 20, 1>}, {transform_indices = @transform_5, window_bounds = array<i64: 1, 1, 20>}, {transform_indices = @transform_6, window_bounds = array<i64: 1, 20, 1>}, {transform_indices = @transform_7, window_bounds = array<i64: 1, 512, 784>}]} {
    %c0 = arith.constant 0 : index
    %c0_0 = arith.constant 0 : index
    %0 = vector.load %arg4[%c0, %c0_0] : memref<20x512xf32, #tpu.memory_space<vmem>>, vector<20x512xf32>
    %c0_1 = arith.constant 0 : index
    %c0_2 = arith.constant 0 : index
    %c0_3 = arith.constant 0 : index
    %1 = vector.load %arg2[%c0_1, %c0_2, %c0_3] : memref<1x512x784xf32, #tpu.memory_space<vmem>>, vector<1x512x784xf32>
    %2 = vector.shape_cast %1 : vector<1x512x784xf32> to vector<512x784xf32>
    %cst = arith.constant dense<0.000000e+00> : vector<20x784xf32>
    %3 = tpu.matmul %0, %2, %cst {dimension_numbers = #tpu.dot_dimension_numbers<[1], [0], [0], [1], [0, 0, 1, 1], [], []>} : vector<20x512xf32>, vector<512x784xf32>, vector<20x784xf32> -> vector<20x784xf32>
    %cst_4 = arith.constant dense<0.000000e+00> : vector<20xf32>
    %4 = vector.multi_reduction <add>, %3, %cst_4 [1] : vector<20x784xf32> to vector<20xf32>
    %5 = vector.shape_cast %4 : vector<20xf32> to vector<20x1xf32>
    %c0_i32 = arith.constant 0 : i32
    %6 = arith.cmpi eq, %arg1, %c0_i32 : i32
    %7 = arith.extui %6 : i1 to i32
    %c0_i32_5 = arith.constant 0 : i32
    %8 = arith.cmpi ne, %7, %c0_i32_5 : i32
    scf.if %8 {
      %cst_25 = arith.constant 0.000000e+00 : f32
      %31 = vector.broadcast %cst_25 : f32 to vector<20x1xf32>
      %c0_26 = arith.constant 0 : index
      %c0_27 = arith.constant 0 : index
      %32 = vector.load %arg10[%c0_26, %c0_27] : memref<20x1xf32, #tpu.memory_space<vmem>>, vector<20x1xf32>
      tpu.vector_store %arg10[%c0_26, %c0_27], %31 {strides = array<i32>} : memref<20x1xf32, #tpu.memory_space<vmem>>, vector<20x1xf32>,
    } else {
    }
    %c0_6 = arith.constant 0 : index
    %c0_7 = arith.constant 0 : index
    %9 = vector.load %arg10[%c0_6, %c0_7] : memref<20x1xf32, #tpu.memory_space<vmem>>, vector<20x1xf32>
    %10 = arith.addf %9, %5 : vector<20x1xf32>
    %c0_8 = arith.constant 0 : index
    %c0_9 = arith.constant 0 : index
    %11 = vector.load %arg10[%c0_8, %c0_9] : memref<20x1xf32, #tpu.memory_space<vmem>>, vector<20x1xf32>
    tpu.vector_store %arg10[%c0_8, %c0_9], %10 {strides = array<i32>} : memref<20x1xf32, #tpu.memory_space<vmem>>, vector<20x1xf32>,
    %c0_10 = arith.constant 0 : index
    %c0_11 = arith.constant 0 : index
    %c0_12 = arith.constant 0 : index
    %12 = vector.load %arg7[%c0_10, %c0_11, %c0_12] : memref<1x1x20xf32, #tpu.memory_space<vmem>>, vector<1x1x20xf32>
    %13 = vector.shape_cast %12 : vector<1x1x20xf32> to vector<1x20xf32>
    %cst_13 = arith.constant 0.000000e+00 : f32
    %14 = vector.broadcast %cst_13 : f32 to vector<1x20xf32>
    %15 = arith.cmpf one, %13, %14 : vector<1x20xf32>
    %16 = arith.extui %15 : vector<1x20xi1> to vector<1x20xi32>
    %17 = arith.sitofp %16 : vector<1x20xi32> to vector<1x20xf32>
    %c0_14 = arith.constant 0 : index
    %c0_15 = arith.constant 0 : index
    %18 = vector.load %arg5[%c0_14, %c0_15] : memref<512x20xf32, #tpu.memory_space<vmem>>, vector<512x20xf32>
    %19 = vector.broadcast %17 : vector<1x20xf32> to vector<512x20xf32>
    %20 = arith.mulf %18, %19 : vector<512x20xf32>
    %cst_16 = arith.constant dense<0.000000e+00> : vector<512xf32>
    %21 = vector.multi_reduction <add>, %20, %cst_16 [1] : vector<512x20xf32> to vector<512xf32>
    %22 = vector.shape_cast %21 : vector<512xf32> to vector<512x1xf32>
    %c0_17 = arith.constant 0 : index
    %c0_18 = arith.constant 0 : index
    %c0_19 = arith.constant 0 : index
    %23 = vector.load %arg3[%c0_17, %c0_18, %c0_19] : memref<1x512x784xf32, #tpu.memory_space<vmem>>, vector<1x512x784xf32>
    %24 = vector.shape_cast %22 : vector<512x1xf32> to vector<1x512x1xf32>
    %25 = vector.broadcast %24 : vector<1x512x1xf32> to vector<1x512x784xf32>
    %26 = arith.mulf %23, %25 : vector<1x512x784xf32>
    %c0_20 = arith.constant 0 : index
    %c0_21 = arith.constant 0 : index
    %c0_22 = arith.constant 0 : index
    %27 = vector.load %arg9[%c0_20, %c0_21, %c0_22] : memref<1x512x784xf32, #tpu.memory_space<vmem>>, vector<1x512x784xf32>
    tpu.vector_store %arg9[%c0_20, %c0_21, %c0_22], %26 {strides = array<i32>} : memref<1x512x784xf32, #tpu.memory_space<vmem>>, vector<1x512x784xf32>,
    %c0_i32_23 = arith.constant 0 : i32
    %28 = arith.cmpi eq, %arg1, %c0_i32_23 : i32
    %29 = arith.extui %28 : i1 to i32
    %c0_i32_24 = arith.constant 0 : i32
    %30 = arith.cmpi ne, %29, %c0_i32_24 : i32
    scf.if %30 {
      %c0_25 = arith.constant 0 : index
      %c0_26 = arith.constant 0 : index
      %31 = vector.load %arg10[%c0_25, %c0_26] : memref<20x1xf32, #tpu.memory_space<vmem>>, vector<20x1xf32>
      %cst_27 = arith.constant 0.00127551018 : f32
      %32 = vector.broadcast %cst_27 : f32 to vector<20x1xf32>
      %33 = arith.mulf %31, %32 : vector<20x1xf32>
      %c0_28 = arith.constant 0 : index
      %c0_29 = arith.constant 0 : index
      %34 = vector.load %arg6[%c0_28, %c0_29] : memref<20x1xf32, #tpu.memory_space<vmem>>, vector<20x1xf32>
      %35 = arith.addf %33, %34 : vector<20x1xf32>
      %36 = vector.shape_cast %35 : vector<20x1xf32> to vector<1x20x1xf32>
      %c0_30 = arith.constant 0 : index
      %c0_31 = arith.constant 0 : index
      %c0_32 = arith.constant 0 : index
      %37 = vector.load %arg8[%c0_30, %c0_31, %c0_32] : memref<1x20x1xf32, #tpu.memory_space<vmem>>, vector<1x20x1xf32>
      tpu.vector_store %arg8[%c0_30, %c0_31, %c0_32], %36 {strides = array<i32>} : memref<1x20x1xf32, #tpu.memory_space<vmem>>, vector<1x20x1xf32>,
    } else {
    }
    return
  }
  func.func @transform_0(%arg0: i32, %arg1: i32) -> (i32, i32, i32) {
    %c0_i32 = arith.constant 0 : i32
    %c0_i32_0 = arith.constant 0 : i32
    return %arg0, %arg1, %c0_i32 : i32, i32, i32
  }
  func.func @transform_1(%arg0: i32, %arg1: i32) -> (i32, i32, i32) {
    %c0_i32 = arith.constant 0 : i32
    %c0_i32_0 = arith.constant 0 : i32
    return %arg0, %arg1, %c0_i32 : i32, i32, i32
  }
  func.func @transform_2(%arg0: i32, %arg1: i32) -> (i32, i32) {
    %c0_i32 = arith.constant 0 : i32
    %c0_i32_0 = arith.constant 0 : i32
    return %c0_i32, %arg1 : i32, i32
  }
  func.func @transform_3(%arg0: i32, %arg1: i32) -> (i32, i32) {
    %c0_i32 = arith.constant 0 : i32
    %c0_i32_0 = arith.constant 0 : i32
    return %arg1, %c0_i32 : i32, i32
  }
  func.func @transform_4(%arg0: i32, %arg1: i32) -> (i32, i32) {
    %c0_i32 = arith.constant 0 : i32
    %c0_i32_0 = arith.constant 0 : i32
    %c0_i32_1 = arith.constant 0 : i32
    return %c0_i32, %c0_i32_0 : i32, i32
  }
  func.func @transform_5(%arg0: i32, %arg1: i32) -> (i32, i32, i32) {
    %c0_i32 = arith.constant 0 : i32
    %c0_i32_0 = arith.constant 0 : i32
    %c0_i32_1 = arith.constant 0 : i32
    return %arg0, %c0_i32, %c0_i32_0 : i32, i32, i32
  }
  func.func @transform_6(%arg0: i32, %arg1: i32) -> (i32, i32, i32) {
    %c0_i32 = arith.constant 0 : i32
    %c0_i32_0 = arith.constant 0 : i32
    %c0_i32_1 = arith.constant 0 : i32
    return %arg0, %c0_i32, %c0_i32_0 : i32, i32, i32
  }
  func.func @transform_7(%arg0: i32, %arg1: i32) -> (i32, i32, i32) {
    %c0_i32 = arith.constant 0 : i32
    %c0_i32_0 = arith.constant 0 : i32
    return %arg0, %arg1, %c0_i32 : i32, i32, i32
  }
}

</mosaic_0001>

<llo_original>
// kernel: classifer_forward.1
$region0: #{classifer_forward.1}
  #allocation0 [shape = 'u32[]', space=smem, size = 0x4, offset = 0x4, fixed_abs, tag = 'smem constant byte address 0x4 - core index']
  #allocation1 [shape = 'u32[144,128]{1,0:T(1,128)}', space=vmem, size = 0x12000, scoped, tag = 'internal scratch']
  #allocation2 [shape = 'f32[20,1]{1,0:T(8,128)}', space=vmem, size = 0x3000, scoped, tag = 'scratch operand']
  %s0 = inlined_call_operand.vmem [shape: f32[2,512,784], index: 0, kind: input, shape index: {}]
  %s1 = inlined_call_operand.vmem [shape: f32[2,512,784], index: 1, kind: input, shape index: {}]
  %s2 = inlined_call_operand.vmem [shape: f32[20,512], index: 2, kind: input, shape index: {}]
  %s3 = inlined_call_operand.vmem [shape: f32[512,20], index: 3, kind: input, shape index: {}]
  %s4 = inlined_call_operand.vmem [shape: f32[20,1], index: 4, kind: input, shape index: {}]
  %s5 = inlined_call_operand.vmem [shape: f32[2,1,20], index: 5, kind: input, shape index: {}]
  %s6 = inlined_call_operand.vmem [shape: f32[2,20,1], index: 6, kind: output, shape index: {0}]
  %s7 = inlined_call_operand.vmem [shape: f32[2,512,784], index: 7, kind: output, shape index: {1}]
  %8 = xla_tuple %s6, %s7
  %s9 = sld [smem:[#allocation0]]
  $region73: #{classifer_forward.1} parent=0
    _
  %s11 = ssub.s32 1, %s9
  %s12 = scalar_select 0, %s11, %s9
  loop: start=0, step=1, limit=4
  $region2: #{classifer_forward.1} parent=0 // loop_pre_header
    _
  $region3: #{classifer_forward.1} parent=0 // loop_header
    %s14 = sphi 0, %s18
    %p15 = scmp.ge.s32.totalorder %s14, 4
    %s21 = sphi 0, %s33
    %s22 = sphi 0, %s29
    %s23 = sphi 0, %s21
    %s24 = sphi 0, %s22
    %s25 = sphi 0, %s23
    %s26 = sphi 0, %s24
    %s38 = sphi 0, %s40
    %s41 = sphi 0, %s38
    %s42 = sphi 0, %s41
    %s58 = sphi 0, %s42
    %s66 = sphi 0, %s68
    %s69 = sphi 0, %s66
    %s70 = sphi 0, %s69
    %s86 = sphi 0, %s70
    %s92 = sphi 0, %s94
    %s95 = sphi 0, %s92
    %s96 = sphi 0, %s95
    %s112 = sphi 0, %s96
    %s118 = sphi 0, %s120
    %s121 = sphi 0, %s118
    %s122 = sphi 0, %s121
    %s138 = sphi 0, %s122
    %s142 = sphi 0, %s142
    %s144 = sphi 0, %s142
    %s145 = sphi 0, %s144
    %s159 = sphi 0, %s145
    %s165 = sphi 0, %s167
    %s168 = sphi 0, %s165
    %s169 = sphi 0, %s168
    %s185 = sphi 0, %s169
    %s191 = sphi 0, %s193
    %s194 = sphi 0, %s191
    %s195 = sphi 0, %s194
    %s211 = sphi 0, %s195
    %s219 = sphi 0, %s221
    %s222 = sphi 0, %s219
    %s223 = sphi 0, %s222
    %s239 = sphi 0, %s223
  $region4: #{classifer_forward.1} parent=0 // loop_header_branch
    %17 = sbr.rel (%p15) target = $region8
  $region5: #{classifer_forward.1} parent=0 // loop_body
    %s19 = ssub.s32 %s14, 1
    %s20 = ssub.s32 %s14, 2
    %s27 = sadd.s32 1, %s22
    %p28 = scmp.ge.s32.totalorder %s27, 1
    %s29 = scalar_select %p28, 0, %s27
    %s30 = sadd.s32 1, %s21
    %s31 = scalar_select %p28, %s30, %s21
    %p32 = scmp.ge.s32.totalorder %s31, 2
    %s33 = scalar_select %p32, 0, %s31
    %s34 = ssub.s32 %s21, %s33
    %s35 = ssub.s32 %s22, %s29
    %s36 = sor.u32 %s34, %s35
    %p37 = scmp.eq.s32.totalorder %s36, 0
    %s39 = sadd.s32 %s38, 1
    %s40 = scalar_select %p37, %s38, %s39
    %p43 = pneg %p37
    %p44 = scmp.eq.s32.totalorder %s14, 1
    %p45 = por %p43, %p44
    %p46 = scmp.ne.s32.totalorder %s38, %s41
    %p47 = scmp.eq.s32.totalorder %s14, 0
    %p48 = por %p46, %p47
    %p49 = scmp.ne.s32.totalorder %s38, %s41
    %p50 = scmp.eq.s32.totalorder %s19, 1
    %p51 = por %p49, %p50
    %p52 = scmp.ne.s32.totalorder %s41, %s42
    %p53 = scmp.eq.s32.totalorder %s19, 0
    %p54 = por %p52, %p53
    %p55 = scmp.ne.s32.totalorder %s41, %s42
    %p56 = scmp.eq.s32.totalorder %s20, 1
    %p57 = por %p55, %p56
    %p59 = scmp.ne.s32.totalorder %s42, %s58
    %p60 = scmp.eq.s32.totalorder %s20, 0
    %p61 = por %p59, %p60
    %s62 = ssub.s32 %s21, %s33
    %s63 = ssub.s32 %s22, %s29
    %s64 = sor.u32 %s62, %s63
    %p65 = scmp.eq.s32.totalorder %s64, 0
    %s67 = sadd.s32 %s66, 1
    %s68 = scalar_select %p65, %s66, %s67
    %p71 = pneg %p65
    %p72 = scmp.eq.s32.totalorder %s14, 1
    %p73 = por %p71, %p72
    %p74 = scmp.ne.s32.totalorder %s66, %s69
    %p75 = scmp.eq.s32.totalorder %s14, 0
    %p76 = por %p74, %p75
    %p77 = scmp.ne.s32.totalorder %s66, %s69
    %p78 = scmp.eq.s32.totalorder %s19, 1
    %p79 = por %p77, %p78
    %p80 = scmp.ne.s32.totalorder %s69, %s70
    %p81 = scmp.eq.s32.totalorder %s19, 0
    %p82 = por %p80, %p81
    %p83 = scmp.ne.s32.totalorder %s69, %s70
    %p84 = scmp.eq.s32.totalorder %s20, 1
    %p85 = por %p83, %p84
    %p87 = scmp.ne.s32.totalorder %s70, %s86
    %p88 = scmp.eq.s32.totalorder %s20, 0
    %p89 = por %p87, %p88
    %s90 = ssub.s32 %s22, %s29
    %p91 = scmp.eq.s32.totalorder %s90, 0
    %s93 = sadd.s32 %s92, 1
    %s94 = scalar_select %p91, %s92, %s93
    %p97 = pneg %p91
    %p98 = scmp.eq.s32.totalorder %s14, 1
    %p99 = por %p97, %p98
    %p100 = scmp.ne.s32.totalorder %s92, %s95
    %p101 = scmp.eq.s32.totalorder %s14, 0
    %p102 = por %p100, %p101
    %p103 = scmp.ne.s32.totalorder %s92, %s95
    %p104 = scmp.eq.s32.totalorder %s19, 1
    %p105 = por %p103, %p104
    %p106 = scmp.ne.s32.totalorder %s95, %s96
    %p107 = scmp.eq.s32.totalorder %s19, 0
    %p108 = por %p106, %p107
    %p109 = scmp.ne.s32.totalorder %s95, %s96
    %p110 = scmp.eq.s32.totalorder %s20, 1
    %p111 = por %p109, %p110
    %p113 = scmp.ne.s32.totalorder %s96, %s112
    %p114 = scmp.eq.s32.totalorder %s20, 0
    %p115 = por %p113, %p114
    %s116 = ssub.s32 %s22, %s29
    %p117 = scmp.eq.s32.totalorder %s116, 0
    %s119 = sadd.s32 %s118, 1
    %s120 = scalar_select %p117, %s118, %s119
    %p123 = pneg %p117
    %p124 = scmp.eq.s32.totalorder %s14, 1
    %p125 = por %p123, %p124
    %p126 = scmp.ne.s32.totalorder %s118, %s121
    %p127 = scmp.eq.s32.totalorder %s14, 0
    %p128 = por %p126, %p127
    %p129 = scmp.ne.s32.totalorder %s118, %s121
    %p130 = scmp.eq.s32.totalorder %s19, 1
    %p131 = por %p129, %p130
    %p132 = scmp.ne.s32.totalorder %s121, %s122
    %p133 = scmp.eq.s32.totalorder %s19, 0
    %p134 = por %p132, %p133
    %p135 = scmp.ne.s32.totalorder %s121, %s122
    %p136 = scmp.eq.s32.totalorder %s20, 1
    %p137 = por %p135, %p136
    %p139 = scmp.ne.s32.totalorder %s122, %s138
    %p140 = scmp.eq.s32.totalorder %s20, 0
    %p141 = por %p139, %p140
    %s143 = sadd.s32 %s142, 1
    %p146 = scmp.eq.s32.totalorder %s14, 1
    %p147 = scmp.ne.s32.totalorder %s142, %s144
    %p148 = scmp.eq.s32.totalorder %s14, 0
    %p149 = por %p147, %p148
    %p150 = scmp.ne.s32.totalorder %s142, %s144
    %p151 = scmp.eq.s32.totalorder %s19, 1
    %p152 = por %p150, %p151
    %p153 = scmp.ne.s32.totalorder %s144, %s145
    %p154 = scmp.eq.s32.totalorder %s19, 0
    %p155 = por %p153, %p154
    %p156 = scmp.ne.s32.totalorder %s144, %s145
    %p157 = scmp.eq.s32.totalorder %s20, 1
    %p158 = por %p156, %p157
    %p160 = scmp.ne.s32.totalorder %s145, %s159
    %p161 = scmp.eq.s32.totalorder %s20, 0
    %p162 = por %p160, %p161
    %s163 = ssub.s32 %s21, %s33
    %p164 = scmp.eq.s32.totalorder %s163, 0
    %s166 = sadd.s32 %s165, 1
    %s167 = scalar_select %p164, %s165, %s166
    %p170 = pneg %p164
    %p171 = scmp.eq.s32.totalorder %s14, 1
    %p172 = por %p170, %p171
    %p173 = scmp.ne.s32.totalorder %s165, %s168
    %p174 = scmp.eq.s32.totalorder %s14, 0
    %p175 = por %p173, %p174
    %p176 = scmp.ne.s32.totalorder %s165, %s168
    %p177 = scmp.eq.s32.totalorder %s19, 1
    %p178 = por %p176, %p177
    %p179 = scmp.ne.s32.totalorder %s168, %s169
    %p180 = scmp.eq.s32.totalorder %s19, 0
    %p181 = por %p179, %p180
    %p182 = scmp.ne.s32.totalorder %s168, %s169
    %p183 = scmp.eq.s32.totalorder %s20, 1
    %p184 = por %p182, %p183
    %p186 = scmp.ne.s32.totalorder %s169, %s185
    %p187 = scmp.eq.s32.totalorder %s20, 0
    %p188 = por %p186, %p187
    %s189 = ssub.s32 %s21, %s33
    %p190 = scmp.eq.s32.totalorder %s189, 0
    %s192 = sadd.s32 %s191, 1
    %s193 = scalar_select %p190, %s191, %s192
    %p196 = pneg %p190
    %p197 = scmp.eq.s32.totalorder %s14, 1
    %p198 = por %p196, %p197
    %p199 = scmp.ne.s32.totalorder %s191, %s194
    %p200 = scmp.eq.s32.totalorder %s14, 0
    %p201 = por %p199, %p200
    %p202 = scmp.ne.s32.totalorder %s191, %s194
    %p203 = scmp.eq.s32.totalorder %s19, 1
    %p204 = por %p202, %p203
    %p205 = scmp.ne.s32.totalorder %s194, %s195
    %p206 = scmp.eq.s32.totalorder %s19, 0
    %p207 = por %p205, %p206
    %p208 = scmp.ne.s32.totalorder %s194, %s195
    %p209 = scmp.eq.s32.totalorder %s20, 1
    %p210 = por %p208, %p209
    %p212 = scmp.ne.s32.totalorder %s195, %s211
    %p213 = scmp.eq.s32.totalorder %s20, 0
    %p214 = por %p212, %p213
    %s215 = ssub.s32 %s21, %s33
    %s216 = ssub.s32 %s22, %s29
    %s217 = sor.u32 %s215, %s216
    %p218 = scmp.eq.s32.totalorder %s217, 0
    %s220 = sadd.s32 %s219, 1
    %s221 = scalar_select %p218, %s219, %s220
    %p224 = pneg %p218
    %p225 = scmp.eq.s32.totalorder %s14, 1
    %p226 = por %p224, %p225
    %p227 = scmp.ne.s32.totalorder %s219, %s222
    %p228 = scmp.eq.s32.totalorder %s14, 0
    %p229 = por %p227, %p228
    %p230 = scmp.ne.s32.totalorder %s219, %s222
    %p231 = scmp.eq.s32.totalorder %s19, 1
    %p232 = por %p230, %p231
    %p233 = scmp.ne.s32.totalorder %s222, %s223
    %p234 = scmp.eq.s32.totalorder %s19, 0
    %p235 = por %p233, %p234
    %p236 = scmp.ne.s32.totalorder %s222, %s223
    %p237 = scmp.eq.s32.totalorder %s20, 1
    %p238 = por %p236, %p237
    %p240 = scmp.ne.s32.totalorder %s223, %s239
    %p241 = scmp.eq.s32.totalorder %s20, 0
    %p242 = por %p240, %p241
    %p243 = scmp.le.s32.totalorder 1, %s14
    %p244 = scmp.lt.s32.totalorder %s14, 3
    %p245 = pnand %p243, %p244
    %p246 = pneg %p245
    // Predicated region
    $region9: #{classifer_forward.1} parent=5 // pred_check
      _
    $region10: #{classifer_forward.1} parent=5 // pred_check_branch
      %248 = sbr.rel (%p245) target = $region12
    $region11: #{classifer_forward.1} parent=5 // pred_region
      %s249 = ssub.s32 %s14, 1
      // Predicated region
      $region13: #{classifer_forward.1} parent=11 // pred_check
        %p250 = pneg %p108
      $region14: #{classifer_forward.1} parent=11 // pred_check_branch
        %252 = sbr.rel (%p250) target = $region16
      $region15: #{classifer_forward.1} parent=11 // pred_region
        %s253 = smul.u32 4, %s24
        %p254 = scmp.lt.s32.totalorder %s253, 3
        %s255 = scalar_select %p254, %s253, 3
        %s256 = smul.addr %s255, 8
        %s257 = scalar_lea.vmem %s2, %s256
        %s258 = smul.u32 4, %s24
      $region16: #{classifer_forward.1} parent=11 // pred_fallthru
        _
      // Predicated region
      $region17: #{classifer_forward.1} parent=11 // pred_check
        %p259 = pneg %p134
      $region18: #{classifer_forward.1} parent=11 // pred_check_branch
        %261 = sbr.rel (%p259) target = $region20
      $region19: #{classifer_forward.1} parent=11 // pred_region
        %s262 = smul.u32 64, %s24
        %p263 = scmp.lt.s32.totalorder %s262, 63
        %s264 = scalar_select %p263, %s262, 63
        %s265 = smul.addr %s264, 8
        %s266 = scalar_lea.vmem %s3, %s265
        %s267 = smul.u32 64, %s24
      $region20: #{classifer_forward.1} parent=11 // pred_fallthru
        _
      // Predicated region
      $region21: #{classifer_forward.1} parent=11 // pred_check
        %p268 = pneg %p155
      $region22: #{classifer_forward.1} parent=11 // pred_check_branch
        %270 = sbr.rel (%p268) target = $region24
      $region23: #{classifer_forward.1} parent=11 // pred_region
        _
      $region24: #{classifer_forward.1} parent=11 // pred_fallthru
        _
    $region12: #{classifer_forward.1} parent=5 // pred_fallthru
      _
    %p271 = scmp.lt.s32.totalorder %s14, 2
    // Predicated region
    $region25: #{classifer_forward.1} parent=5 // pred_check
      %p272 = pneg %p271
    $region26: #{classifer_forward.1} parent=5 // pred_check_branch
      %274 = sbr.rel (%p272) target = $region28
    $region27: #{classifer_forward.1} parent=5 // pred_region
      // Predicated region
      $region29: #{classifer_forward.1} parent=27 // pred_check
        %p275 = pneg %p48
      $region30: #{classifer_forward.1} parent=27 // pred_check_branch
        %277 = sbr.rel (%p275) target = $region32
      $region31: #{classifer_forward.1} parent=27 // pred_region
        %s278 = smul.u32 64, %s22
        %p279 = scmp.lt.s32.totalorder %s21, 1
        %s280 = scalar_select %p279, %s21, 1
        %p281 = scmp.lt.s32.totalorder %s278, 63
        %s282 = scalar_select %p281, %s278, 63
        %s283 = smul.addr %s282, 7
        %s284 = smul.addr %s280, 448
        %s285 = sadd.s32 %s283, %s284
        %s286 = smul.addr %s285, 8
        %s287 = scalar_lea.vmem %s0, %s286
        %s288 = smul.u32 64, %s22
      $region32: #{classifer_forward.1} parent=27 // pred_fallthru
        _
      // Predicated region
      $region33: #{classifer_forward.1} parent=27 // pred_check
        %p289 = pneg %p76
      $region34: #{classifer_forward.1} parent=27 // pred_check_branch
        %291 = sbr.rel (%p289) target = $region36
      $region35: #{classifer_forward.1} parent=27 // pred_region
        %s292 = smul.u32 64, %s22
        %p293 = scmp.lt.s32.totalorder %s21, 1
        %s294 = scalar_select %p293, %s21, 1
        %p295 = scmp.lt.s32.totalorder %s292, 63
        %s296 = scalar_select %p295, %s292, 63
        %s297 = smul.addr %s296, 7
        %s298 = smul.addr %s294, 448
        %s299 = sadd.s32 %s297, %s298
        %s300 = smul.addr %s299, 8
        %s301 = scalar_lea.vmem %s1, %s300
        %s302 = smul.u32 64, %s22
      $region36: #{classifer_forward.1} parent=27 // pred_fallthru
        _
      // Predicated region
      $region37: #{classifer_forward.1} parent=27 // pred_check
        %p303 = pneg %p175
      $region38: #{classifer_forward.1} parent=27 // pred_check_branch
        %305 = sbr.rel (%p303) target = $region40
      $region39: #{classifer_forward.1} parent=27 // pred_region
        %p306 = scmp.lt.s32.totalorder %s21, 1
        %s307 = scalar_select %p306, %s21, 1
        %s308 = scalar_lea.vmem %s5, %s307
      $region40: #{classifer_forward.1} parent=27 // pred_fallthru
        _
    $region28: #{classifer_forward.1} parent=5 // pred_fallthru
      _
    %p309 = scmp.le.s32.totalorder 1, %s14
    %p310 = scmp.lt.s32.totalorder %s14, 3
    %p311 = pnand %p309, %p310
    %p312 = pneg %p311
    // Predicated region
    $region41: #{classifer_forward.1} parent=5 // pred_check
      _
    $region42: #{classifer_forward.1} parent=5 // pred_check_branch
      %314 = sbr.rel (%p311) target = $region44
    $region43: #{classifer_forward.1} parent=5 // pred_region
      %s315 = ssub.s32 %s14, 1
      %s316 = smul.u32 64, %s24
      %p317 = scmp.lt.s32.totalorder %s23, 1
      %s318 = scalar_select %p317, %s23, 1
      %p319 = scmp.lt.s32.totalorder %s316, 63
      %s320 = scalar_select %p319, %s316, 63
      %s321 = smul.addr %s320, 7
      %s322 = smul.addr %s318, 448
      %s323 = sadd.s32 %s321, %s322
      %s324 = smul.addr %s323, 8
      %s325 = scalar_lea.vmem %s0, %s324
      %p326 = pneg %p54
      %p327 = pneg %p51
      %s328 = smul.u32 64, %s24
      %p329 = scmp.lt.s32.totalorder %s23, 1
      %s330 = scalar_select %p329, %s23, 1
      %p331 = scmp.lt.s32.totalorder %s328, 63
      %s332 = scalar_select %p331, %s328, 63
      %s333 = smul.addr %s332, 7
      %s334 = smul.addr %s330, 448
      %s335 = sadd.s32 %s333, %s334
      %s336 = smul.addr %s335, 8
      %s337 = scalar_lea.vmem %s1, %s336
      %p338 = pneg %p82
      %p339 = pneg %p79
      %s340 = smul.u32 4, %s24
      %p341 = scmp.lt.s32.totalorder %s340, 3
      %s342 = scalar_select %p341, %s340, 3
      %s343 = smul.addr %s342, 8
      %s344 = scalar_lea.vmem %s2, %s343
      %p345 = pneg %p108
      %p346 = pneg %p105
      %s347 = smul.u32 64, %s24
      %p348 = scmp.lt.s32.totalorder %s347, 63
      %s349 = scalar_select %p348, %s347, 63
      %s350 = smul.addr %s349, 8
      %s351 = scalar_lea.vmem %s3, %s350
      %p352 = pneg %p134
      %p353 = pneg %p131
      %p354 = pneg %p155
      %p355 = pneg %p152
      %p356 = scmp.lt.s32.totalorder %s23, 1
      %s357 = scalar_select %p356, %s23, 1
      %s358 = scalar_lea.vmem %s5, %s357
      %p359 = pneg %p181
      %p360 = pneg %p178
      %p361 = pneg %p207
      %p362 = pneg %p204
      %p363 = scmp.lt.s32.totalorder %s23, 1
      %s364 = scalar_select %p363, %s23, 1
      %s365 = smul.addr %s364, 3
      %s366 = smul.addr %s365, 8
      %s367 = scalar_lea.vmem %s6, %s366
      %p368 = pneg %p235
      %p369 = pneg %p232
      %s370 = smul.u32 64, %s24
      %p371 = scmp.lt.s32.totalorder %s23, 1
      %s372 = scalar_select %p371, %s23, 1
      %p373 = scmp.lt.s32.totalorder %s370, 63
      %s374 = scalar_select %p373, %s370, 63
      %s375 = smul.addr %s374, 7
      %s376 = smul.addr %s372, 448
      %s377 = sadd.s32 %s375, %s376
      %s378 = smul.addr %s377, 8
      %s379 = scalar_lea.vmem %s7, %s378
      %s380 = smul.u32 64, %s24
      %p381 = scmp.lt.s32.totalorder %s23, 1
      %s382 = scalar_select %p381, %s23, 1
      %p383 = scmp.lt.s32.totalorder %s380, 63
      %s384 = scalar_select %p383, %s380, 63
      %s385 = smul.addr %s384, 7
      %s386 = smul.addr %s382, 448
      %s387 = sadd.s32 %s385, %s386
      %s388 = smul.addr %s387, 8
      %s389 = scalar_lea.vmem %s0, %s388
      %s390 = smul.u32 64, %s24
      %s391 = smul.u32 64, %s24
      %p392 = scmp.lt.s32.totalorder %s23, 1
      %s393 = scalar_select %p392, %s23, 1
      %p394 = scmp.lt.s32.totalorder %s391, 63
      %s395 = scalar_select %p394, %s391, 63
      %s396 = smul.addr %s395, 7
      %s397 = smul.addr %s393, 448
      %s398 = sadd.s32 %s396, %s397
      %s399 = smul.addr %s398, 8
      %s400 = scalar_lea.vmem %s1, %s399
      %s401 = smul.u32 64, %s24
      %s402 = smul.u32 4, %s24
      %p403 = scmp.lt.s32.totalorder %s402, 3
      %s404 = scalar_select %p403, %s402, 3
      %s405 = smul.addr %s404, 8
      %s406 = scalar_lea.vmem %s2, %s405
      %s407 = smul.u32 4, %s24
      %s408 = smul.u32 64, %s24
      %p409 = scmp.lt.s32.totalorder %s408, 63
      %s410 = scalar_select %p409, %s408, 63
      %s411 = smul.addr %s410, 8
      %s412 = scalar_lea.vmem %s3, %s411
      %s413 = smul.u32 64, %s24
      %p414 = scmp.lt.s32.totalorder %s23, 1
      %s415 = scalar_select %p414, %s23, 1
      %s416 = scalar_lea.vmem %s5, %s415
      %p417 = scmp.lt.s32.totalorder %s23, 1
      %s418 = scalar_select %p417, %s23, 1
      %s419 = smul.addr %s418, 3
      %s420 = smul.addr %s419, 8
      %s421 = scalar_lea.vmem %s6, %s420
      %s422 = smul.u32 64, %s24
      %p423 = scmp.lt.s32.totalorder %s23, 1
      %s424 = scalar_select %p423, %s23, 1
      %p425 = scmp.lt.s32.totalorder %s422, 63
      %s426 = scalar_select %p425, %s422, 63
      %s427 = smul.addr %s426, 7
      %s428 = smul.addr %s424, 448
      %s429 = sadd.s32 %s427, %s428
      %s430 = smul.addr %s429, 8
      %s431 = scalar_lea.vmem %s7, %s430
      %s432 = smul.u32 64, %s24
      %v433 = vld [vmem:[%s406] sm:$0xff]
      %v434 = vld [vmem:[%s406 + $0x8] sm:$0xff]
      %v435 = vld [vmem:[%s406 + $0x10] sm:$0xff]
      %v436 = vld [vmem:[%s406 + $0x18] sm:$0xff]
      %v437 = vld [vmem:[%s406 + $0x20] sm:$0xff]
      %v438 = vld [vmem:[%s406 + $0x28] sm:$0xff]
      %v439 = vld [vmem:[%s406 + $0x30] sm:$0xff]
      %v440 = vld [vmem:[%s406 + $0x38] sm:$0xff]
      %v441 = vld [vmem:[%s406 + $0x40] sm:$0xf]
      %v442 = vld [vmem:[%s406 + $0x48] sm:$0xf]
      %v443 = vld [vmem:[%s406 + $0x50] sm:$0xf]
      %v444 = vld [vmem:[%s406 + $0x58] sm:$0xf]
      %v445 = vld [vmem:[%s389] sm:$0xff]
      %v446 = vld [vmem:[%s389 + $0x8] sm:$0xff]
      %v447 = vld [vmem:[%s389 + $0x10] sm:$0xff]
      %v448 = vld [vmem:[%s389 + $0x18] sm:$0xff]
      %v449 = vld [vmem:[%s389 + $0x20] sm:$0xff]
      %v450 = vld [vmem:[%s389 + $0x28] sm:$0xff]
      %v451 = vld [vmem:[%s389 + $0x30] sm:$0xff]
      %v452 = vld [vmem:[%s389 + $0x38] sm:$0xff]
      %v453 = vld [vmem:[%s389 + $0x40] sm:$0xff]
      %v454 = vld [vmem:[%s389 + $0x48] sm:$0xff]
      %v455 = vld [vmem:[%s389 + $0x50] sm:$0xff]
      %v456 = vld [vmem:[%s389 + $0x58] sm:$0xff]
      %v457 = vld [vmem:[%s389 + $0x60] sm:$0xff]
      %v458 = vld [vmem:[%s389 + $0x68] sm:$0xff]
      %v459 = vld [vmem:[%s389 + $0x70] sm:$0xff]
      %v460 = vld [vmem:[%s389 + $0x78] sm:$0xff]
      %v461 = vld [vmem:[%s389 + $0x80] sm:$0xff]
      %v462 = vld [vmem:[%s389 + $0x88] sm:$0xff]
      %v463 = vld [vmem:[%s389 + $0x90] sm:$0xff]
      %v464 = vld [vmem:[%s389 + $0x98] sm:$0xff]
      %v465 = vld [vmem:[%s389 + $0xa0] sm:$0xff]
      %v466 = vld [vmem:[%s389 + $0xa8] sm:$0xff]
      %v467 = vld [vmem:[%s389 + $0xb0] sm:$0xff]
      %v468 = vld [vmem:[%s389 + $0xb8] sm:$0xff]
      %v469 = vld [vmem:[%s389 + $0xc0] sm:$0xff]
      %v470 = vld [vmem:[%s389 + $0xc8] sm:$0xff]
      %v471 = vld [vmem:[%s389 + $0xd0] sm:$0xff]
      %v472 = vld [vmem:[%s389 + $0xd8] sm:$0xff]
      %v473 = vld [vmem:[%s389 + $0xe0] sm:$0xff]
      %v474 = vld [vmem:[%s389 + $0xe8] sm:$0xff]
      %v475 = vld [vmem:[%s389 + $0xf0] sm:$0xff]
      %v476 = vld [vmem:[%s389 + $0xf8] sm:$0xff]
      %v477 = vld [vmem:[%s389 + $0x100] sm:$0xff]
      %v478 = vld [vmem:[%s389 + $0x108] sm:$0xff]
      %v479 = vld [vmem:[%s389 + $0x110] sm:$0xff]
      %v480 = vld [vmem:[%s389 + $0x118] sm:$0xff]
      %v481 = vld [vmem:[%s389 + $0x120] sm:$0xff]
      %v482 = vld [vmem:[%s389 + $0x128] sm:$0xff]
      %v483 = vld [vmem:[%s389 + $0x130] sm:$0xff]
      %v484 = vld [vmem:[%s389 + $0x138] sm:$0xff]
      %v485 = vld [vmem:[%s389 + $0x140] sm:$0xff]
      %v486 = vld [vmem:[%s389 + $0x148] sm:$0xff]
      %v487 = vld [vmem:[%s389 + $0x150] sm:$0xff]
      %v488 = vld [vmem:[%s389 + $0x158] sm:$0xff]
      %v489 = vld [vmem:[%s389 + $0x160] sm:$0xff]
      %v490 = vld [vmem:[%s389 + $0x168] sm:$0xff]
      %v491 = vld [vmem:[%s389 + $0x170] sm:$0xff]
      %v492 = vld [vmem:[%s389 + $0x178] sm:$0xff]
      %v493 = vld [vmem:[%s389 + $0x180] sm:$0xff]
      %v494 = vld [vmem:[%s389 + $0x188] sm:$0xff]
      %v495 = vld [vmem:[%s389 + $0x190] sm:$0xff]
      %v496 = vld [vmem:[%s389 + $0x198] sm:$0xff]
      %v497 = vld [vmem:[%s389 + $0x1a0] sm:$0xff]
      %v498 = vld [vmem:[%s389 + $0x1a8] sm:$0xff]
      %v499 = vld [vmem:[%s389 + $0x1b0] sm:$0xff]
      %v500 = vld [vmem:[%s389 + $0x1b8] sm:$0xff]
      %v501 = vld [vmem:[%s389 + $0x1c0] sm:$0xff]
      %v502 = vld [vmem:[%s389 + $0x1c8] sm:$0xff]
      %v503 = vld [vmem:[%s389 + $0x1d0] sm:$0xff]
      %v504 = vld [vmem:[%s389 + $0x1d8] sm:$0xff]
      %v505 = vld [vmem:[%s389 + $0x1e0] sm:$0xff]
      %v506 = vld [vmem:[%s389 + $0x1e8] sm:$0xff]
      %v507 = vld [vmem:[%s389 + $0x1f0] sm:$0xff]
      %v508 = vld [vmem:[%s389 + $0x1f8] sm:$0xff]
      %v509 = vld [vmem:[%s389 + $0x200] sm:$0xff]
      %v510 = vld [vmem:[%s389 + $0x208] sm:$0xff]
      %v511 = vld [vmem:[%s389 + $0x210] sm:$0xff]
      %v512 = vld [vmem:[%s389 + $0x218] sm:$0xff]
      %v513 = vld [vmem:[%s389 + $0x220] sm:$0xff]
      %v514 = vld [vmem:[%s389 + $0x228] sm:$0xff]
      %v515 = vld [vmem:[%s389 + $0x230] sm:$0xff]
      %v516 = vld [vmem:[%s389 + $0x238] sm:$0xff]
      %v517 = vld [vmem:[%s389 + $0x240] sm:$0xff]
      %v518 = vld [vmem:[%s389 + $0x248] sm:$0xff]
      %v519 = vld [vmem:[%s389 + $0x250] sm:$0xff]
      %v520 = vld [vmem:[%s389 + $0x258] sm:$0xff]
      %v521 = vld [vmem:[%s389 + $0x260] sm:$0xff]
      %v522 = vld [vmem:[%s389 + $0x268] sm:$0xff]
      %v523 = vld [vmem:[%s389 + $0x270] sm:$0xff]
      %v524 = vld [vmem:[%s389 + $0x278] sm:$0xff]
      %v525 = vld [vmem:[%s389 + $0x280] sm:$0xff]
      %v526 = vld [vmem:[%s389 + $0x288] sm:$0xff]
      %v527 = vld [vmem:[%s389 + $0x290] sm:$0xff]
      %v528 = vld [vmem:[%s389 + $0x298] sm:$0xff]
      %v529 = vld [vmem:[%s389 + $0x2a0] sm:$0xff]
      %v530 = vld [vmem:[%s389 + $0x2a8] sm:$0xff]
      %v531 = vld [vmem:[%s389 + $0x2b0] sm:$0xff]
      %v532 = vld [vmem:[%s389 + $0x2b8] sm:$0xff]
      %v533 = vld [vmem:[%s389 + $0x2c0] sm:$0xff]
      %v534 = vld [vmem:[%s389 + $0x2c8] sm:$0xff]
      %v535 = vld [vmem:[%s389 + $0x2d0] sm:$0xff]
      %v536 = vld [vmem:[%s389 + $0x2d8] sm:$0xff]
      %v537 = vld [vmem:[%s389 + $0x2e0] sm:$0xff]
      %v538 = vld [vmem:[%s389 + $0x2e8] sm:$0xff]
      %v539 = vld [vmem:[%s389 + $0x2f0] sm:$0xff]
      %v540 = vld [vmem:[%s389 + $0x2f8] sm:$0xff]
      %v541 = vld [vmem:[%s389 + $0x300] sm:$0xff]
      %v542 = vld [vmem:[%s389 + $0x308] sm:$0xff]
      %v543 = vld [vmem:[%s389 + $0x310] sm:$0xff]
      %v544 = vld [vmem:[%s389 + $0x318] sm:$0xff]
      %v545 = vld [vmem:[%s389 + $0x320] sm:$0xff]
      %v546 = vld [vmem:[%s389 + $0x328] sm:$0xff]
      %v547 = vld [vmem:[%s389 + $0x330] sm:$0xff]
      %v548 = vld [vmem:[%s389 + $0x338] sm:$0xff]
      %v549 = vld [vmem:[%s389 + $0x340] sm:$0xff]
      %v550 = vld [vmem:[%s389 + $0x348] sm:$0xff]
      %v551 = vld [vmem:[%s389 + $0x350] sm:$0xff]
      %v552 = vld [vmem:[%s389 + $0x358] sm:$0xff]
      %v553 = vld [vmem:[%s389 + $0x360] sm:$0xff]
      %v554 = vld [vmem:[%s389 + $0x368] sm:$0xff]
      %v555 = vld [vmem:[%s389 + $0x370] sm:$0xff]
      %v556 = vld [vmem:[%s389 + $0x378] sm:$0xff]
      %v557 = vld [vmem:[%s389 + $0x380] sm:$0xff]
      %v558 = vld [vmem:[%s389 + $0x388] sm:$0xff]
      %v559 = vld [vmem:[%s389 + $0x390] sm:$0xff]
      %v560 = vld [vmem:[%s389 + $0x398] sm:$0xff]
      %v561 = vld [vmem:[%s389 + $0x3a0] sm:$0xff]
      %v562 = vld [vmem:[%s389 + $0x3a8] sm:$0xff]
      %v563 = vld [vmem:[%s389 + $0x3b0] sm:$0xff]
      %v564 = vld [vmem:[%s389 + $0x3b8] sm:$0xff]
      %v565 = vld [vmem:[%s389 + $0x3c0] sm:$0xff]
      %v566 = vld [vmem:[%s389 + $0x3c8] sm:$0xff]
      %v567 = vld [vmem:[%s389 + $0x3d0] sm:$0xff]
      %v568 = vld [vmem:[%s389 + $0x3d8] sm:$0xff]
      %v569 = vld [vmem:[%s389 + $0x3e0] sm:$0xff]
      %v570 = vld [vmem:[%s389 + $0x3e8] sm:$0xff]
      %v571 = vld [vmem:[%s389 + $0x3f0] sm:$0xff]
      %v572 = vld [vmem:[%s389 + $0x3f8] sm:$0xff]
      %v573 = vld [vmem:[%s389 + $0x400] sm:$0xff]
      %v574 = vld [vmem:[%s389 + $0x408] sm:$0xff]
      %v575 = vld [vmem:[%s389 + $0x410] sm:$0xff]
      %v576 = vld [vmem:[%s389 + $0x418] sm:$0xff]
      %v577 = vld [vmem:[%s389 + $0x420] sm:$0xff]
      %v578 = vld [vmem:[%s389 + $0x428] sm:$0xff]
      %v579 = vld [vmem:[%s389 + $0x430] sm:$0xff]
      %v580 = vld [vmem:[%s389 + $0x438] sm:$0xff]
      %v581 = vld [vmem:[%s389 + $0x440] sm:$0xff]
      %v582 = vld [vmem:[%s389 + $0x448] sm:$0xff]
      %v583 = vld [vmem:[%s389 + $0x450] sm:$0xff]
      %v584 = vld [vmem:[%s389 + $0x458] sm:$0xff]
      %v585 = vld [vmem:[%s389 + $0x460] sm:$0xff]
      %v586 = vld [vmem:[%s389 + $0x468] sm:$0xff]
      %v587 = vld [vmem:[%s389 + $0x470] sm:$0xff]
      %v588 = vld [vmem:[%s389 + $0x478] sm:$0xff]
      %v589 = vld [vmem:[%s389 + $0x480] sm:$0xff]
      %v590 = vld [vmem:[%s389 + $0x488] sm:$0xff]
      %v591 = vld [vmem:[%s389 + $0x490] sm:$0xff]
      %v592 = vld [vmem:[%s389 + $0x498] sm:$0xff]
      %v593 = vld [vmem:[%s389 + $0x4a0] sm:$0xff]
      %v594 = vld [vmem:[%s389 + $0x4a8] sm:$0xff]
      %v595 = vld [vmem:[%s389 + $0x4b0] sm:$0xff]
      %v596 = vld [vmem:[%s389 + $0x4b8] sm:$0xff]
      %v597 = vld [vmem:[%s389 + $0x4c0] sm:$0xff]
      %v598 = vld [vmem:[%s389 + $0x4c8] sm:$0xff]
      %v599 = vld [vmem:[%s389 + $0x4d0] sm:$0xff]
      %v600 = vld [vmem:[%s389 + $0x4d8] sm:$0xff]
      %v601 = vld [vmem:[%s389 + $0x4e0] sm:$0xff]
      %v602 = vld [vmem:[%s389 + $0x4e8] sm:$0xff]
      %v603 = vld [vmem:[%s389 + $0x4f0] sm:$0xff]
      %v604 = vld [vmem:[%s389 + $0x4f8] sm:$0xff]
      %v605 = vld [vmem:[%s389 + $0x500] sm:$0xff]
      %v606 = vld [vmem:[%s389 + $0x508] sm:$0xff]
      %v607 = vld [vmem:[%s389 + $0x510] sm:$0xff]
      %v608 = vld [vmem:[%s389 + $0x518] sm:$0xff]
      %v609 = vld [vmem:[%s389 + $0x520] sm:$0xff]
      %v610 = vld [vmem:[%s389 + $0x528] sm:$0xff]
      %v611 = vld [vmem:[%s389 + $0x530] sm:$0xff]
      %v612 = vld [vmem:[%s389 + $0x538] sm:$0xff]
      %v613 = vld [vmem:[%s389 + $0x540] sm:$0xff]
      %v614 = vld [vmem:[%s389 + $0x548] sm:$0xff]
      %v615 = vld [vmem:[%s389 + $0x550] sm:$0xff]
      %v616 = vld [vmem:[%s389 + $0x558] sm:$0xff]
      %v617 = vld [vmem:[%s389 + $0x560] sm:$0xff]
      %v618 = vld [vmem:[%s389 + $0x568] sm:$0xff]
      %v619 = vld [vmem:[%s389 + $0x570] sm:$0xff]
      %v620 = vld [vmem:[%s389 + $0x578] sm:$0xff]
      %v621 = vld [vmem:[%s389 + $0x580] sm:$0xff]
      %v622 = vld [vmem:[%s389 + $0x588] sm:$0xff]
      %v623 = vld [vmem:[%s389 + $0x590] sm:$0xff]
      %v624 = vld [vmem:[%s389 + $0x598] sm:$0xff]
      %v625 = vld [vmem:[%s389 + $0x5a0] sm:$0xff]
      %v626 = vld [vmem:[%s389 + $0x5a8] sm:$0xff]
      %v627 = vld [vmem:[%s389 + $0x5b0] sm:$0xff]
      %v628 = vld [vmem:[%s389 + $0x5b8] sm:$0xff]
      %v629 = vld [vmem:[%s389 + $0x5c0] sm:$0xff]
      %v630 = vld [vmem:[%s389 + $0x5c8] sm:$0xff]
      %v631 = vld [vmem:[%s389 + $0x5d0] sm:$0xff]
      %v632 = vld [vmem:[%s389 + $0x5d8] sm:$0xff]
      %v633 = vld [vmem:[%s389 + $0x5e0] sm:$0xff]
      %v634 = vld [vmem:[%s389 + $0x5e8] sm:$0xff]
      %v635 = vld [vmem:[%s389 + $0x5f0] sm:$0xff]
      %v636 = vld [vmem:[%s389 + $0x5f8] sm:$0xff]
      %v637 = vld [vmem:[%s389 + $0x600] sm:$0xff]
      %v638 = vld [vmem:[%s389 + $0x608] sm:$0xff]
      %v639 = vld [vmem:[%s389 + $0x610] sm:$0xff]
      %v640 = vld [vmem:[%s389 + $0x618] sm:$0xff]
      %v641 = vld [vmem:[%s389 + $0x620] sm:$0xff]
      %v642 = vld [vmem:[%s389 + $0x628] sm:$0xff]
      %v643 = vld [vmem:[%s389 + $0x630] sm:$0xff]
      %v644 = vld [vmem:[%s389 + $0x638] sm:$0xff]
      %v645 = vld [vmem:[%s389 + $0x640] sm:$0xff]
      %v646 = vld [vmem:[%s389 + $0x648] sm:$0xff]
      %v647 = vld [vmem:[%s389 + $0x650] sm:$0xff]
      %v648 = vld [vmem:[%s389 + $0x658] sm:$0xff]
      %v649 = vld [vmem:[%s389 + $0x660] sm:$0xff]
      %v650 = vld [vmem:[%s389 + $0x668] sm:$0xff]
      %v651 = vld [vmem:[%s389 + $0x670] sm:$0xff]
      %v652 = vld [vmem:[%s389 + $0x678] sm:$0xff]
      %v653 = vld [vmem:[%s389 + $0x680] sm:$0xff]
      %v654 = vld [vmem:[%s389 + $0x688] sm:$0xff]
      %v655 = vld [vmem:[%s389 + $0x690] sm:$0xff]
      %v656 = vld [vmem:[%s389 + $0x698] sm:$0xff]
      %v657 = vld [vmem:[%s389 + $0x6a0] sm:$0xff]
      %v658 = vld [vmem:[%s389 + $0x6a8] sm:$0xff]
      %v659 = vld [vmem:[%s389 + $0x6b0] sm:$0xff]
      %v660 = vld [vmem:[%s389 + $0x6b8] sm:$0xff]
      %v661 = vld [vmem:[%s389 + $0x6c0] sm:$0xff]
      %v662 = vld [vmem:[%s389 + $0x6c8] sm:$0xff]
      %v663 = vld [vmem:[%s389 + $0x6d0] sm:$0xff]
      %v664 = vld [vmem:[%s389 + $0x6d8] sm:$0xff]
      %v665 = vld [vmem:[%s389 + $0x6e0] sm:$0xff]
      %v666 = vld [vmem:[%s389 + $0x6e8] sm:$0xff]
      %v667 = vld [vmem:[%s389 + $0x6f0] sm:$0xff]
      %v668 = vld [vmem:[%s389 + $0x6f8] sm:$0xff]
      %v669 = vld [vmem:[%s389 + $0x700] sm:$0xff]
      %v670 = vld [vmem:[%s389 + $0x708] sm:$0xff]
      %v671 = vld [vmem:[%s389 + $0x710] sm:$0xff]
      %v672 = vld [vmem:[%s389 + $0x718] sm:$0xff]
      %v673 = vld [vmem:[%s389 + $0x720] sm:$0xff]
      %v674 = vld [vmem:[%s389 + $0x728] sm:$0xff]
      %v675 = vld [vmem:[%s389 + $0x730] sm:$0xff]
      %v676 = vld [vmem:[%s389 + $0x738] sm:$0xff]
      %v677 = vld [vmem:[%s389 + $0x740] sm:$0xff]
      %v678 = vld [vmem:[%s389 + $0x748] sm:$0xff]
      %v679 = vld [vmem:[%s389 + $0x750] sm:$0xff]
      %v680 = vld [vmem:[%s389 + $0x758] sm:$0xff]
      %v681 = vld [vmem:[%s389 + $0x760] sm:$0xff]
      %v682 = vld [vmem:[%s389 + $0x768] sm:$0xff]
      %v683 = vld [vmem:[%s389 + $0x770] sm:$0xff]
      %v684 = vld [vmem:[%s389 + $0x778] sm:$0xff]
      %v685 = vld [vmem:[%s389 + $0x780] sm:$0xff]
      %v686 = vld [vmem:[%s389 + $0x788] sm:$0xff]
      %v687 = vld [vmem:[%s389 + $0x790] sm:$0xff]
      %v688 = vld [vmem:[%s389 + $0x798] sm:$0xff]
      %v689 = vld [vmem:[%s389 + $0x7a0] sm:$0xff]
      %v690 = vld [vmem:[%s389 + $0x7a8] sm:$0xff]
      %v691 = vld [vmem:[%s389 + $0x7b0] sm:$0xff]
      %v692 = vld [vmem:[%s389 + $0x7b8] sm:$0xff]
      %v693 = vld [vmem:[%s389 + $0x7c0] sm:$0xff]
      %v694 = vld [vmem:[%s389 + $0x7c8] sm:$0xff]
      %v695 = vld [vmem:[%s389 + $0x7d0] sm:$0xff]
      %v696 = vld [vmem:[%s389 + $0x7d8] sm:$0xff]
      %v697 = vld [vmem:[%s389 + $0x7e0] sm:$0xff]
      %v698 = vld [vmem:[%s389 + $0x7e8] sm:$0xff]
      %v699 = vld [vmem:[%s389 + $0x7f0] sm:$0xff]
      %v700 = vld [vmem:[%s389 + $0x7f8] sm:$0xff]
      %v701 = vld [vmem:[%s389 + $0x800] sm:$0xff]
      %v702 = vld [vmem:[%s389 + $0x808] sm:$0xff]
      %v703 = vld [vmem:[%s389 + $0x810] sm:$0xff]
      %v704 = vld [vmem:[%s389 + $0x818] sm:$0xff]
      %v705 = vld [vmem:[%s389 + $0x820] sm:$0xff]
      %v706 = vld [vmem:[%s389 + $0x828] sm:$0xff]
      %v707 = vld [vmem:[%s389 + $0x830] sm:$0xff]
      %v708 = vld [vmem:[%s389 + $0x838] sm:$0xff]
      %v709 = vld [vmem:[%s389 + $0x840] sm:$0xff]
      %v710 = vld [vmem:[%s389 + $0x848] sm:$0xff]
      %v711 = vld [vmem:[%s389 + $0x850] sm:$0xff]
      %v712 = vld [vmem:[%s389 + $0x858] sm:$0xff]
      %v713 = vld [vmem:[%s389 + $0x860] sm:$0xff]
      %v714 = vld [vmem:[%s389 + $0x868] sm:$0xff]
      %v715 = vld [vmem:[%s389 + $0x870] sm:$0xff]
      %v716 = vld [vmem:[%s389 + $0x878] sm:$0xff]
      %v717 = vld [vmem:[%s389 + $0x880] sm:$0xff]
      %v718 = vld [vmem:[%s389 + $0x888] sm:$0xff]
      %v719 = vld [vmem:[%s389 + $0x890] sm:$0xff]
      %v720 = vld [vmem:[%s389 + $0x898] sm:$0xff]
      %v721 = vld [vmem:[%s389 + $0x8a0] sm:$0xff]
      %v722 = vld [vmem:[%s389 + $0x8a8] sm:$0xff]
      %v723 = vld [vmem:[%s389 + $0x8b0] sm:$0xff]
      %v724 = vld [vmem:[%s389 + $0x8b8] sm:$0xff]
      %v725 = vld [vmem:[%s389 + $0x8c0] sm:$0xff]
      %v726 = vld [vmem:[%s389 + $0x8c8] sm:$0xff]
      %v727 = vld [vmem:[%s389 + $0x8d0] sm:$0xff]
      %v728 = vld [vmem:[%s389 + $0x8d8] sm:$0xff]
      %v729 = vld [vmem:[%s389 + $0x8e0] sm:$0xff]
      %v730 = vld [vmem:[%s389 + $0x8e8] sm:$0xff]
      %v731 = vld [vmem:[%s389 + $0x8f0] sm:$0xff]
      %v732 = vld [vmem:[%s389 + $0x8f8] sm:$0xff]
      %v733 = vld [vmem:[%s389 + $0x900] sm:$0xff]
      %v734 = vld [vmem:[%s389 + $0x908] sm:$0xff]
      %v735 = vld [vmem:[%s389 + $0x910] sm:$0xff]
      %v736 = vld [vmem:[%s389 + $0x918] sm:$0xff]
      %v737 = vld [vmem:[%s389 + $0x920] sm:$0xff]
      %v738 = vld [vmem:[%s389 + $0x928] sm:$0xff]
      %v739 = vld [vmem:[%s389 + $0x930] sm:$0xff]
      %v740 = vld [vmem:[%s389 + $0x938] sm:$0xff]
      %v741 = vld [vmem:[%s389 + $0x940] sm:$0xff]
      %v742 = vld [vmem:[%s389 + $0x948] sm:$0xff]
      %v743 = vld [vmem:[%s389 + $0x950] sm:$0xff]
      %v744 = vld [vmem:[%s389 + $0x958] sm:$0xff]
      %v745 = vld [vmem:[%s389 + $0x960] sm:$0xff]
      %v746 = vld [vmem:[%s389 + $0x968] sm:$0xff]
      %v747 = vld [vmem:[%s389 + $0x970] sm:$0xff]
      %v748 = vld [vmem:[%s389 + $0x978] sm:$0xff]
      %v749 = vld [vmem:[%s389 + $0x980] sm:$0xff]
      %v750 = vld [vmem:[%s389 + $0x988] sm:$0xff]
      %v751 = vld [vmem:[%s389 + $0x990] sm:$0xff]
      %v752 = vld [vmem:[%s389 + $0x998] sm:$0xff]
      %v753 = vld [vmem:[%s389 + $0x9a0] sm:$0xff]
      %v754 = vld [vmem:[%s389 + $0x9a8] sm:$0xff]
      %v755 = vld [vmem:[%s389 + $0x9b0] sm:$0xff]
      %v756 = vld [vmem:[%s389 + $0x9b8] sm:$0xff]
      %v757 = vld [vmem:[%s389 + $0x9c0] sm:$0xff]
      %v758 = vld [vmem:[%s389 + $0x9c8] sm:$0xff]
      %v759 = vld [vmem:[%s389 + $0x9d0] sm:$0xff]
      %v760 = vld [vmem:[%s389 + $0x9d8] sm:$0xff]
      %v761 = vld [vmem:[%s389 + $0x9e0] sm:$0xff]
      %v762 = vld [vmem:[%s389 + $0x9e8] sm:$0xff]
      %v763 = vld [vmem:[%s389 + $0x9f0] sm:$0xff]
      %v764 = vld [vmem:[%s389 + $0x9f8] sm:$0xff]
      %v765 = vld [vmem:[%s389 + $0xa00] sm:$0xff]
      %v766 = vld [vmem:[%s389 + $0xa08] sm:$0xff]
      %v767 = vld [vmem:[%s389 + $0xa10] sm:$0xff]
      %v768 = vld [vmem:[%s389 + $0xa18] sm:$0xff]
      %v769 = vld [vmem:[%s389 + $0xa20] sm:$0xff]
      %v770 = vld [vmem:[%s389 + $0xa28] sm:$0xff]
      %v771 = vld [vmem:[%s389 + $0xa30] sm:$0xff]
      %v772 = vld [vmem:[%s389 + $0xa38] sm:$0xff]
      %v773 = vld [vmem:[%s389 + $0xa40] sm:$0xff]
      %v774 = vld [vmem:[%s389 + $0xa48] sm:$0xff]
      %v775 = vld [vmem:[%s389 + $0xa50] sm:$0xff]
      %v776 = vld [vmem:[%s389 + $0xa58] sm:$0xff]
      %v777 = vld [vmem:[%s389 + $0xa60] sm:$0xff]
      %v778 = vld [vmem:[%s389 + $0xa68] sm:$0xff]
      %v779 = vld [vmem:[%s389 + $0xa70] sm:$0xff]
      %v780 = vld [vmem:[%s389 + $0xa78] sm:$0xff]
      %v781 = vld [vmem:[%s389 + $0xa80] sm:$0xff]
      %v782 = vld [vmem:[%s389 + $0xa88] sm:$0xff]
      %v783 = vld [vmem:[%s389 + $0xa90] sm:$0xff]
      %v784 = vld [vmem:[%s389 + $0xa98] sm:$0xff]
      %v785 = vld [vmem:[%s389 + $0xaa0] sm:$0xff]
      %v786 = vld [vmem:[%s389 + $0xaa8] sm:$0xff]
      %v787 = vld [vmem:[%s389 + $0xab0] sm:$0xff]
      %v788 = vld [vmem:[%s389 + $0xab8] sm:$0xff]
      %v789 = vld [vmem:[%s389 + $0xac0] sm:$0xff]
      %v790 = vld [vmem:[%s389 + $0xac8] sm:$0xff]
      %v791 = vld [vmem:[%s389 + $0xad0] sm:$0xff]
      %v792 = vld [vmem:[%s389 + $0xad8] sm:$0xff]
      %v793 = vld [vmem:[%s389 + $0xae0] sm:$0xff]
      %v794 = vld [vmem:[%s389 + $0xae8] sm:$0xff]
      %v795 = vld [vmem:[%s389 + $0xaf0] sm:$0xff]
      %v796 = vld [vmem:[%s389 + $0xaf8] sm:$0xff]
      %v797 = vld [vmem:[%s389 + $0xb00] sm:$0xff]
      %v798 = vld [vmem:[%s389 + $0xb08] sm:$0xff]
      %v799 = vld [vmem:[%s389 + $0xb10] sm:$0xff]
      %v800 = vld [vmem:[%s389 + $0xb18] sm:$0xff]
      %v801 = vld [vmem:[%s389 + $0xb20] sm:$0xff]
      %v802 = vld [vmem:[%s389 + $0xb28] sm:$0xff]
      %v803 = vld [vmem:[%s389 + $0xb30] sm:$0xff]
      %v804 = vld [vmem:[%s389 + $0xb38] sm:$0xff]
      %v805 = vld [vmem:[%s389 + $0xb40] sm:$0xff]
      %v806 = vld [vmem:[%s389 + $0xb48] sm:$0xff]
      %v807 = vld [vmem:[%s389 + $0xb50] sm:$0xff]
      %v808 = vld [vmem:[%s389 + $0xb58] sm:$0xff]
      %v809 = vld [vmem:[%s389 + $0xb60] sm:$0xff]
      %v810 = vld [vmem:[%s389 + $0xb68] sm:$0xff]
      %v811 = vld [vmem:[%s389 + $0xb70] sm:$0xff]
      %v812 = vld [vmem:[%s389 + $0xb78] sm:$0xff]
      %v813 = vld [vmem:[%s389 + $0xb80] sm:$0xff]
      %v814 = vld [vmem:[%s389 + $0xb88] sm:$0xff]
      %v815 = vld [vmem:[%s389 + $0xb90] sm:$0xff]
      %v816 = vld [vmem:[%s389 + $0xb98] sm:$0xff]
      %v817 = vld [vmem:[%s389 + $0xba0] sm:$0xff]
      %v818 = vld [vmem:[%s389 + $0xba8] sm:$0xff]
      %v819 = vld [vmem:[%s389 + $0xbb0] sm:$0xff]
      %v820 = vld [vmem:[%s389 + $0xbb8] sm:$0xff]
      %v821 = vld [vmem:[%s389 + $0xbc0] sm:$0xff]
      %v822 = vld [vmem:[%s389 + $0xbc8] sm:$0xff]
      %v823 = vld [vmem:[%s389 + $0xbd0] sm:$0xff]
      %v824 = vld [vmem:[%s389 + $0xbd8] sm:$0xff]
      %v825 = vld [vmem:[%s389 + $0xbe0] sm:$0xff]
      %v826 = vld [vmem:[%s389 + $0xbe8] sm:$0xff]
      %v827 = vld [vmem:[%s389 + $0xbf0] sm:$0xff]
      %v828 = vld [vmem:[%s389 + $0xbf8] sm:$0xff]
      %v829 = vld [vmem:[%s389 + $0xc00] sm:$0xff]
      %v830 = vld [vmem:[%s389 + $0xc08] sm:$0xff]
      %v831 = vld [vmem:[%s389 + $0xc10] sm:$0xff]
      %v832 = vld [vmem:[%s389 + $0xc18] sm:$0xff]
      %v833 = vld [vmem:[%s389 + $0xc20] sm:$0xff]
      %v834 = vld [vmem:[%s389 + $0xc28] sm:$0xff]
      %v835 = vld [vmem:[%s389 + $0xc30] sm:$0xff]
      %v836 = vld [vmem:[%s389 + $0xc38] sm:$0xff]
      %v837 = vld [vmem:[%s389 + $0xc40] sm:$0xff]
      %v838 = vld [vmem:[%s389 + $0xc48] sm:$0xff]
      %v839 = vld [vmem:[%s389 + $0xc50] sm:$0xff]
      %v840 = vld [vmem:[%s389 + $0xc58] sm:$0xff]
      %v841 = vld [vmem:[%s389 + $0xc60] sm:$0xff]
      %v842 = vld [vmem:[%s389 + $0xc68] sm:$0xff]
      %v843 = vld [vmem:[%s389 + $0xc70] sm:$0xff]
      %v844 = vld [vmem:[%s389 + $0xc78] sm:$0xff]
      %v845 = vld [vmem:[%s389 + $0xc80] sm:$0xff]
      %v846 = vld [vmem:[%s389 + $0xc88] sm:$0xff]
      %v847 = vld [vmem:[%s389 + $0xc90] sm:$0xff]
      %v848 = vld [vmem:[%s389 + $0xc98] sm:$0xff]
      %v849 = vld [vmem:[%s389 + $0xca0] sm:$0xff]
      %v850 = vld [vmem:[%s389 + $0xca8] sm:$0xff]
      %v851 = vld [vmem:[%s389 + $0xcb0] sm:$0xff]
      %v852 = vld [vmem:[%s389 + $0xcb8] sm:$0xff]
      %v853 = vld [vmem:[%s389 + $0xcc0] sm:$0xff]
      %v854 = vld [vmem:[%s389 + $0xcc8] sm:$0xff]
      %v855 = vld [vmem:[%s389 + $0xcd0] sm:$0xff]
      %v856 = vld [vmem:[%s389 + $0xcd8] sm:$0xff]
      %v857 = vld [vmem:[%s389 + $0xce0] sm:$0xff]
      %v858 = vld [vmem:[%s389 + $0xce8] sm:$0xff]
      %v859 = vld [vmem:[%s389 + $0xcf0] sm:$0xff]
      %v860 = vld [vmem:[%s389 + $0xcf8] sm:$0xff]
      %v861 = vld [vmem:[%s389 + $0xd00] sm:$0xff]
      %v862 = vld [vmem:[%s389 + $0xd08] sm:$0xff]
      %v863 = vld [vmem:[%s389 + $0xd10] sm:$0xff]
      %v864 = vld [vmem:[%s389 + $0xd18] sm:$0xff]
      %v865 = vld [vmem:[%s389 + $0xd20] sm:$0xff]
      %v866 = vld [vmem:[%s389 + $0xd28] sm:$0xff]
      %v867 = vld [vmem:[%s389 + $0xd30] sm:$0xff]
      %v868 = vld [vmem:[%s389 + $0xd38] sm:$0xff]
      %v869 = vld [vmem:[%s389 + $0xd40] sm:$0xff]
      %v870 = vld [vmem:[%s389 + $0xd48] sm:$0xff]
      %v871 = vld [vmem:[%s389 + $0xd50] sm:$0xff]
      %v872 = vld [vmem:[%s389 + $0xd58] sm:$0xff]
      %v873 = vld [vmem:[%s389 + $0xd60] sm:$0xff]
      %v874 = vld [vmem:[%s389 + $0xd68] sm:$0xff]
      %v875 = vld [vmem:[%s389 + $0xd70] sm:$0xff]
      %v876 = vld [vmem:[%s389 + $0xd78] sm:$0xff]
      %v877 = vld [vmem:[%s389 + $0xd80] sm:$0xff]
      %v878 = vld [vmem:[%s389 + $0xd88] sm:$0xff]
      %v879 = vld [vmem:[%s389 + $0xd90] sm:$0xff]
      %v880 = vld [vmem:[%s389 + $0xd98] sm:$0xff]
      %v881 = vld [vmem:[%s389 + $0xda0] sm:$0xff]
      %v882 = vld [vmem:[%s389 + $0xda8] sm:$0xff]
      %v883 = vld [vmem:[%s389 + $0xdb0] sm:$0xff]
      %v884 = vld [vmem:[%s389 + $0xdb8] sm:$0xff]
      %v885 = vld [vmem:[%s389 + $0xdc0] sm:$0xff]
      %v886 = vld [vmem:[%s389 + $0xdc8] sm:$0xff]
      %v887 = vld [vmem:[%s389 + $0xdd0] sm:$0xff]
      %v888 = vld [vmem:[%s389 + $0xdd8] sm:$0xff]
      %v889 = vld [vmem:[%s389 + $0xde0] sm:$0xff]
      %v890 = vld [vmem:[%s389 + $0xde8] sm:$0xff]
      %v891 = vld [vmem:[%s389 + $0xdf0] sm:$0xff]
      %v892 = vld [vmem:[%s389 + $0xdf8] sm:$0xff]
      %893 = vmatprep.subr.mxu0 %v446
      %894 = vmatpush1.msra.mxu0 %v445
      %895 = vmatprep.subr.mxu0 %v453
      %896 = vmatpush1.msra.mxu0 %v452
      %897 = vmatprep.subr.mxu0 %v460
      %898 = vmatpush1.msra.mxu0 %v459
      %899 = vmatprep.subr.mxu0 %v467
      %900 = vmatpush1.msra.mxu0 %v466
      %901 = vmatprep.subr.mxu0 %v474
      %902 = vmatpush1.msra.mxu0 %v473
      %903 = vmatprep.subr.mxu0 %v481
      %904 = vmatpush1.msra.mxu0 %v480
      %905 = vmatprep.subr.mxu0 %v488
      %906 = vmatpush1.msra.mxu0 %v487
      %907 = vmatprep.subr.mxu0 %v495
      %908 = vmatpush1.msra.mxu0 %v494
      %909 = vmatprep.subr.mxu0 %v502
      %910 = vmatpush1.msra.mxu0 %v501
      %911 = vmatprep.subr.mxu0 %v509
      %912 = vmatpush1.msra.mxu0 %v508
      %913 = vmatprep.subr.mxu0 %v516
      %914 = vmatpush1.msra.mxu0 %v515
      %915 = vmatprep.subr.mxu0 %v523
      %916 = vmatpush1.msra.mxu0 %v522
      %917 = vmatprep.subr.mxu0 %v530
      %918 = vmatpush1.msra.mxu0 %v529
      %919 = vmatprep.subr.mxu0 %v537
      %920 = vmatpush1.msra.mxu0 %v536
      %921 = vmatprep.subr.mxu0 %v544
      %922 = vmatpush1.msra.mxu0 %v543
      %923 = vmatprep.subr.mxu0 %v551
      %924 = vmatpush1.msra.mxu0 %v550
      %925 = vmatprep.subr.mxu0 %v558
      %926 = vmatpush1.msra.mxu0 %v557
      %927 = vmatprep.subr.mxu0 %v565
      %928 = vmatpush1.msra.mxu0 %v564
      %929 = vmatprep.subr.mxu0 %v572
      %930 = vmatpush1.msra.mxu0 %v571
      %931 = vmatprep.subr.mxu0 %v579
      %932 = vmatpush1.msra.mxu0 %v578
      %933 = vmatprep.subr.mxu0 %v586
      %934 = vmatpush1.msra.mxu0 %v585
      %935 = vmatprep.subr.mxu0 %v593
      %936 = vmatpush1.msra.mxu0 %v592
      %937 = vmatprep.subr.mxu0 %v600
      %938 = vmatpush1.msra.mxu0 %v599
      %939 = vmatprep.subr.mxu0 %v607
      %940 = vmatpush1.msra.mxu0 %v606
      %941 = vmatprep.subr.mxu0 %v614
      %942 = vmatpush1.msra.mxu0 %v613
      %943 = vmatprep.subr.mxu0 %v621
      %944 = vmatpush1.msra.mxu0 %v620
      %945 = vmatprep.subr.mxu0 %v628
      %946 = vmatpush1.msra.mxu0 %v627
      %947 = vmatprep.subr.mxu0 %v635
      %948 = vmatpush1.msra.mxu0 %v634
      %949 = vmatprep.subr.mxu0 %v642
      %950 = vmatpush1.msra.mxu0 %v641
      %951 = vmatprep.subr.mxu0 %v649
      %952 = vmatpush1.msra.mxu0 %v648
      %953 = vmatprep.subr.mxu0 %v656
      %954 = vmatpush1.msra.mxu0 %v655
      %955 = vmatprep.subr.mxu0 %v663
      %956 = vmatpush1.msra.mxu0 %v662
      %957 = vmatprep.mubr.f32.mxu0 %v434
      %958 = vmatmul.mubr.f32.gmra.mrb[0].mxu0 %v433
      %v959 = vpop.f32.mrb[0].mxu0
      %v960 = vadd.f32 0.0, %v959
      %v961 = vpop.f32.mrb[0].mxu0
      %v962 = vadd.f32 0.0, %v961
      %963 = vmatprep.mubr.f32.mxu0 %v438
      %964 = vmatmul.mubr.f32.gmra.mrb[0].mxu0 %v437
      %v965 = vpop.f32.mrb[0].mxu0
      %v966 = vadd.f32 0.0, %v965
      %v967 = vpop.f32.mrb[0].mxu0
      %v968 = vadd.f32 0.0, %v967
      %969 = vmatprep.mubr.f32.mxu0 %v442
      %970 = vmatmul.mubr.f32.gmra.mrb[0].mxu0 %v441
      %v971 = vpop.f32.mrb[0].mxu0
      %v972 = vadd.f32 0.0, %v971
      %v973 = vpop.f32.mrb[0].mxu0
      %v974 = vadd.f32 0.0, %v973
      %975 = vdwg.mxu0
      %976 = vmatprep.subr.mxu0 %v670
      %977 = vmatpush1.msra.mxu0 %v669
      %978 = vmatprep.subr.mxu0 %v677
      %979 = vmatpush1.msra.mxu0 %v676
      %980 = vmatprep.subr.mxu0 %v684
      %981 = vmatpush1.msra.mxu0 %v683
      %982 = vmatprep.subr.mxu0 %v691
      %983 = vmatpush1.msra.mxu0 %v690
      %984 = vmatprep.subr.mxu0 %v698
      %985 = vmatpush1.msra.mxu0 %v697
      %986 = vmatprep.subr.mxu0 %v705
      %987 = vmatpush1.msra.mxu0 %v704
      %988 = vmatprep.subr.mxu0 %v712
      %989 = vmatpush1.msra.mxu0 %v711
      %990 = vmatprep.subr.mxu0 %v719
      %991 = vmatpush1.msra.mxu0 %v718
      %992 = vmatprep.subr.mxu0 %v726
      %993 = vmatpush1.msra.mxu0 %v725
      %994 = vmatprep.subr.mxu0 %v733
      %995 = vmatpush1.msra.mxu0 %v732
      %996 = vmatprep.subr.mxu0 %v740
      %997 = vmatpush1.msra.mxu0 %v739
      %998 = vmatprep.subr.mxu0 %v747
      %999 = vmatpush1.msra.mxu0 %v746
      %1000 = vmatprep.subr.mxu0 %v754
      %1001 = vmatpush1.msra.mxu0 %v753
      %1002 = vmatprep.subr.mxu0 %v761
      %1003 = vmatpush1.msra.mxu0 %v760
      %1004 = vmatprep.subr.mxu0 %v768
      %1005 = vmatpush1.msra.mxu0 %v767
      %1006 = vmatprep.subr.mxu0 %v775
      %1007 = vmatpush1.msra.mxu0 %v774
      %1008 = vmatprep.subr.mxu0 %v782
      %1009 = vmatpush1.msra.mxu0 %v781
      %1010 = vmatprep.subr.mxu0 %v789
      %1011 = vmatpush1.msra.mxu0 %v788
      %1012 = vmatprep.subr.mxu0 %v796
      %1013 = vmatpush1.msra.mxu0 %v795
      %1014 = vmatprep.subr.mxu0 %v803
      %1015 = vmatpush1.msra.mxu0 %v802
      %1016 = vmatprep.subr.mxu0 %v810
      %1017 = vmatpush1.msra.mxu0 %v809
      %1018 = vmatprep.subr.mxu0 %v817
      %1019 = vmatpush1.msra.mxu0 %v816
      %1020 = vmatprep.subr.mxu0 %v824
      %1021 = vmatpush1.msra.mxu0 %v823
      %1022 = vmatprep.subr.mxu0 %v831
      %1023 = vmatpush1.msra.mxu0 %v830
      %1024 = vmatprep.subr.mxu0 %v838
      %1025 = vmatpush1.msra.mxu0 %v837
      %1026 = vmatprep.subr.mxu0 %v845
      %1027 = vmatpush1.msra.mxu0 %v844
      %1028 = vmatprep.subr.mxu0 %v852
      %1029 = vmatpush1.msra.mxu0 %v851
      %1030 = vmatprep.subr.mxu0 %v859
      %1031 = vmatpush1.msra.mxu0 %v858
      %1032 = vmatprep.subr.mxu0 %v866
      %1033 = vmatpush1.msra.mxu0 %v865
      %1034 = vmatprep.subr.mxu0 %v873
      %1035 = vmatpush1.msra.mxu0 %v872
      %1036 = vmatprep.subr.mxu0 %v880
      %1037 = vmatpush1.msra.mxu0 %v879
      %1038 = vmatprep.subr.mxu0 %v887
      %1039 = vmatpush1.msra.mxu0 %v886
      %1040 = vmatprep.mubr.f32.mxu0 %v436
      %1041 = vmatmul.mubr.f32.gmra.mrb[0].mxu0 %v435
      %v1042 = vpop.f32.mrb[0].mxu0
      %v1043 = vadd.f32 %v960, %v1042
      %v1044 = vpop.f32.mrb[0].mxu0
      %v1045 = vadd.f32 %v962, %v1044
      %1046 = vmatprep.mubr.f32.mxu0 %v440
      %1047 = vmatmul.mubr.f32.gmra.mrb[0].mxu0 %v439
      %v1048 = vpop.f32.mrb[0].mxu0
      %v1049 = vadd.f32 %v966, %v1048
      %v1050 = vpop.f32.mrb[0].mxu0
      %v1051 = vadd.f32 %v968, %v1050
      %1052 = vmatprep.mubr.f32.mxu0 %v444
      %1053 = vmatmul.mubr.f32.gmra.mrb[0].mxu0 %v443
      %v1054 = vpop.f32.mrb[0].mxu0
      %v1055 = vadd.f32 %v972, %v1054
      %v1056 = vpop.f32.mrb[0].mxu0
      %v1057 = vadd.f32 %v974, %v1056
      %1058 = vdwg.mxu0
      %1059 = vmatprep.subr.mxu0 %v448
      %1060 = vmatpush1.msra.mxu0 %v447
      %1061 = vmatprep.subr.mxu0 %v455
      %1062 = vmatpush1.msra.mxu0 %v454
      %1063 = vmatprep.subr.mxu0 %v462
      %1064 = vmatpush1.msra.mxu0 %v461
      %1065 = vmatprep.subr.mxu0 %v469
      %1066 = vmatpush1.msra.mxu0 %v468
      %1067 = vmatprep.subr.mxu0 %v476
      %1068 = vmatpush1.msra.mxu0 %v475
      %1069 = vmatprep.subr.mxu0 %v483
      %1070 = vmatpush1.msra.mxu0 %v482
      %1071 = vmatprep.subr.mxu0 %v490
      %1072 = vmatpush1.msra.mxu0 %v489
      %1073 = vmatprep.subr.mxu0 %v497
      %1074 = vmatpush1.msra.mxu0 %v496
      %1075 = vmatprep.subr.mxu0 %v504
      %1076 = vmatpush1.msra.mxu0 %v503
      %1077 = vmatprep.subr.mxu0 %v511
      %1078 = vmatpush1.msra.mxu0 %v510
      %1079 = vmatprep.subr.mxu0 %v518
      %1080 = vmatpush1.msra.mxu0 %v517
      %1081 = vmatprep.subr.mxu0 %v525
      %1082 = vmatpush1.msra.mxu0 %v524
      %1083 = vmatprep.subr.mxu0 %v532
      %1084 = vmatpush1.msra.mxu0 %v531
      %1085 = vmatprep.subr.mxu0 %v539
      %1086 = vmatpush1.msra.mxu0 %v538
      %1087 = vmatprep.subr.mxu0 %v546
      %1088 = vmatpush1.msra.mxu0 %v545
      %1089 = vmatprep.subr.mxu0 %v553
      %1090 = vmatpush1.msra.mxu0 %v552
      %1091 = vmatprep.subr.mxu0 %v560
      %1092 = vmatpush1.msra.mxu0 %v559
      %1093 = vmatprep.subr.mxu0 %v567
      %1094 = vmatpush1.msra.mxu0 %v566
      %1095 = vmatprep.subr.mxu0 %v574
      %1096 = vmatpush1.msra.mxu0 %v573
      %1097 = vmatprep.subr.mxu0 %v581
      %1098 = vmatpush1.msra.mxu0 %v580
      %1099 = vmatprep.subr.mxu0 %v588
      %1100 = vmatpush1.msra.mxu0 %v587
      %1101 = vmatprep.subr.mxu0 %v595
      %1102 = vmatpush1.msra.mxu0 %v594
      %1103 = vmatprep.subr.mxu0 %v602
      %1104 = vmatpush1.msra.mxu0 %v601
      %1105 = vmatprep.subr.mxu0 %v609
      %1106 = vmatpush1.msra.mxu0 %v608
      %1107 = vmatprep.subr.mxu0 %v616
      %1108 = vmatpush1.msra.mxu0 %v615
      %1109 = vmatprep.subr.mxu0 %v623
      %1110 = vmatpush1.msra.mxu0 %v622
      %1111 = vmatprep.subr.mxu0 %v630
      %1112 = vmatpush1.msra.mxu0 %v629
      %1113 = vmatprep.subr.mxu0 %v637
      %1114 = vmatpush1.msra.mxu0 %v636
      %1115 = vmatprep.subr.mxu0 %v644
      %1116 = vmatpush1.msra.mxu0 %v643
      %1117 = vmatprep.subr.mxu0 %v651
      %1118 = vmatpush1.msra.mxu0 %v650
      %1119 = vmatprep.subr.mxu0 %v658
      %1120 = vmatpush1.msra.mxu0 %v657
      %1121 = vmatprep.subr.mxu0 %v665
      %1122 = vmatpush1.msra.mxu0 %v664
      %1123 = vmatprep.mubr.f32.mxu0 %v434
      %1124 = vmatmul.mubr.f32.gmra.mrb[0].mxu0 %v433
      %v1125 = vpop.f32.mrb[0].mxu0
      %v1126 = vadd.f32 0.0, %v1125
      %v1127 = vpop.f32.mrb[0].mxu0
      %v1128 = vadd.f32 0.0, %v1127
      %1129 = vmatprep.mubr.f32.mxu0 %v438
      %1130 = vmatmul.mubr.f32.gmra.mrb[0].mxu0 %v437
      %v1131 = vpop.f32.mrb[0].mxu0
      %v1132 = vadd.f32 0.0, %v1131
      %v1133 = vpop.f32.mrb[0].mxu0
      %v1134 = vadd.f32 0.0, %v1133
      %1135 = vmatprep.mubr.f32.mxu0 %v442
      %1136 = vmatmul.mubr.f32.gmra.mrb[0].mxu0 %v441
      %v1137 = vpop.f32.mrb[0].mxu0
      %v1138 = vadd.f32 0.0, %v1137
      %v1139 = vpop.f32.mrb[0].mxu0
      %v1140 = vadd.f32 0.0, %v1139
      %1141 = vdwg.mxu0
      %1142 = vmatprep.subr.mxu0 %v672
      %1143 = vmatpush1.msra.mxu0 %v671
      %1144 = vmatprep.subr.mxu0 %v679
      %1145 = vmatpush1.msra.mxu0 %v678
      %1146 = vmatprep.subr.mxu0 %v686
      %1147 = vmatpush1.msra.mxu0 %v685
      %1148 = vmatprep.subr.mxu0 %v693
      %1149 = vmatpush1.msra.mxu0 %v692
      %1150 = vmatprep.subr.mxu0 %v700
      %1151 = vmatpush1.msra.mxu0 %v699
      %1152 = vmatprep.subr.mxu0 %v707
      %1153 = vmatpush1.msra.mxu0 %v706
      %1154 = vmatprep.subr.mxu0 %v714
      %1155 = vmatpush1.msra.mxu0 %v713
      %1156 = vmatprep.subr.mxu0 %v721
      %1157 = vmatpush1.msra.mxu0 %v720
      %1158 = vmatprep.subr.mxu0 %v728
      %1159 = vmatpush1.msra.mxu0 %v727
      %1160 = vmatprep.subr.mxu0 %v735
      %1161 = vmatpush1.msra.mxu0 %v734
      %1162 = vmatprep.subr.mxu0 %v742
      %1163 = vmatpush1.msra.mxu0 %v741
      %1164 = vmatprep.subr.mxu0 %v749
      %1165 = vmatpush1.msra.mxu0 %v748
      %1166 = vmatprep.subr.mxu0 %v756
      %1167 = vmatpush1.msra.mxu0 %v755
      %1168 = vmatprep.subr.mxu0 %v763
      %1169 = vmatpush1.msra.mxu0 %v762
      %1170 = vmatprep.subr.mxu0 %v770
      %1171 = vmatpush1.msra.mxu0 %v769
      %1172 = vmatprep.subr.mxu0 %v777
      %1173 = vmatpush1.msra.mxu0 %v776
      %1174 = vmatprep.subr.mxu0 %v784
      %1175 = vmatpush1.msra.mxu0 %v783
      %1176 = vmatprep.subr.mxu0 %v791
      %1177 = vmatpush1.msra.mxu0 %v790
      %1178 = vmatprep.subr.mxu0 %v798
      %1179 = vmatpush1.msra.mxu0 %v797
      %1180 = vmatprep.subr.mxu0 %v805
      %1181 = vmatpush1.msra.mxu0 %v804
      %1182 = vmatprep.subr.mxu0 %v812
      %1183 = vmatpush1.msra.mxu0 %v811
      %1184 = vmatprep.subr.mxu0 %v819
      %1185 = vmatpush1.msra.mxu0 %v818
      %1186 = vmatprep.subr.mxu0 %v826
      %1187 = vmatpush1.msra.mxu0 %v825
      %1188 = vmatprep.subr.mxu0 %v833
      %1189 = vmatpush1.msra.mxu0 %v832
      %1190 = vmatprep.subr.mxu0 %v840
      %1191 = vmatpush1.msra.mxu0 %v839
      %1192 = vmatprep.subr.mxu0 %v847
      %1193 = vmatpush1.msra.mxu0 %v846
      %1194 = vmatprep.subr.mxu0 %v854
      %1195 = vmatpush1.msra.mxu0 %v853
      %1196 = vmatprep.subr.mxu0 %v861
      %1197 = vmatpush1.msra.mxu0 %v860
      %1198 = vmatprep.subr.mxu0 %v868
      %1199 = vmatpush1.msra.mxu0 %v867
      %1200 = vmatprep.subr.mxu0 %v875
      %1201 = vmatpush1.msra.mxu0 %v874
      %1202 = vmatprep.subr.mxu0 %v882
      %1203 = vmatpush1.msra.mxu0 %v881
      %1204 = vmatprep.subr.mxu0 %v889
      %1205 = vmatpush1.msra.mxu0 %v888
      %1206 = vmatprep.mubr.f32.mxu0 %v436
      %1207 = vmatmul.mubr.f32.gmra.mrb[0].mxu0 %v435
      %v1208 = vpop.f32.mrb[0].mxu0
      %v1209 = vadd.f32 %v1126, %v1208
      %v1210 = vpop.f32.mrb[0].mxu0
      %v1211 = vadd.f32 %v1128, %v1210
      %1212 = vmatprep.mubr.f32.mxu0 %v440
      %1213 = vmatmul.mubr.f32.gmra.mrb[0].mxu0 %v439
      %v1214 = vpop.f32.mrb[0].mxu0
      %v1215 = vadd.f32 %v1132, %v1214
      %v1216 = vpop.f32.mrb[0].mxu0
      %v1217 = vadd.f32 %v1134, %v1216
      %1218 = vmatprep.mubr.f32.mxu0 %v444
      %1219 = vmatmul.mubr.f32.gmra.mrb[0].mxu0 %v443
      %v1220 = vpop.f32.mrb[0].mxu0
      %v1221 = vadd.f32 %v1138, %v1220
      %v1222 = vpop.f32.mrb[0].mxu0
      %v1223 = vadd.f32 %v1140, %v1222
      %1224 = vdwg.mxu0
      %1225 = vmatprep.subr.mxu0 %v450
      %1226 = vmatpush1.msra.mxu0 %v449
      %1227 = vmatprep.subr.mxu0 %v457
      %1228 = vmatpush1.msra.mxu0 %v456
      %1229 = vmatprep.subr.mxu0 %v464
      %1230 = vmatpush1.msra.mxu0 %v463
      %1231 = vmatprep.subr.mxu0 %v471
      %1232 = vmatpush1.msra.mxu0 %v470
      %1233 = vmatprep.subr.mxu0 %v478
      %1234 = vmatpush1.msra.mxu0 %v477
      %1235 = vmatprep.subr.mxu0 %v485
      %1236 = vmatpush1.msra.mxu0 %v484
      %1237 = vmatprep.subr.mxu0 %v492
      %1238 = vmatpush1.msra.mxu0 %v491
      %1239 = vmatprep.subr.mxu0 %v499
      %1240 = vmatpush1.msra.mxu0 %v498
      %1241 = vmatprep.subr.mxu0 %v506
      %1242 = vmatpush1.msra.mxu0 %v505
      %1243 = vmatprep.subr.mxu0 %v513
      %1244 = vmatpush1.msra.mxu0 %v512
      %1245 = vmatprep.subr.mxu0 %v520
      %1246 = vmatpush1.msra.mxu0 %v519
      %1247 = vmatprep.subr.mxu0 %v527
      %1248 = vmatpush1.msra.mxu0 %v526
      %1249 = vmatprep.subr.mxu0 %v534
      %1250 = vmatpush1.msra.mxu0 %v533
      %1251 = vmatprep.subr.mxu0 %v541
      %1252 = vmatpush1.msra.mxu0 %v540
      %1253 = vmatprep.subr.mxu0 %v548
      %1254 = vmatpush1.msra.mxu0 %v547
      %1255 = vmatprep.subr.mxu0 %v555
      %1256 = vmatpush1.msra.mxu0 %v554
      %1257 = vmatprep.subr.mxu0 %v562
      %1258 = vmatpush1.msra.mxu0 %v561
      %1259 = vmatprep.subr.mxu0 %v569
      %1260 = vmatpush1.msra.mxu0 %v568
      %1261 = vmatprep.subr.mxu0 %v576
      %1262 = vmatpush1.msra.mxu0 %v575
      %1263 = vmatprep.subr.mxu0 %v583
      %1264 = vmatpush1.msra.mxu0 %v582
      %1265 = vmatprep.subr.mxu0 %v590
      %1266 = vmatpush1.msra.mxu0 %v589
      %1267 = vmatprep.subr.mxu0 %v597
      %1268 = vmatpush1.msra.mxu0 %v596
      %1269 = vmatprep.subr.mxu0 %v604
      %1270 = vmatpush1.msra.mxu0 %v603
      %1271 = vmatprep.subr.mxu0 %v611
      %1272 = vmatpush1.msra.mxu0 %v610
      %1273 = vmatprep.subr.mxu0 %v618
      %1274 = vmatpush1.msra.mxu0 %v617
      %1275 = vmatprep.subr.mxu0 %v625
      %1276 = vmatpush1.msra.mxu0 %v624
      %1277 = vmatprep.subr.mxu0 %v632
      %1278 = vmatpush1.msra.mxu0 %v631
      %1279 = vmatprep.subr.mxu0 %v639
      %1280 = vmatpush1.msra.mxu0 %v638
      %1281 = vmatprep.subr.mxu0 %v646
      %1282 = vmatpush1.msra.mxu0 %v645
      %1283 = vmatprep.subr.mxu0 %v653
      %1284 = vmatpush1.msra.mxu0 %v652
      %1285 = vmatprep.subr.mxu0 %v660
      %1286 = vmatpush1.msra.mxu0 %v659
      %1287 = vmatprep.subr.mxu0 %v667
      %1288 = vmatpush1.msra.mxu0 %v666
      %1289 = vmatprep.mubr.f32.mxu0 %v434
      %1290 = vmatmul.mubr.f32.gmra.mrb[0].mxu0 %v433
      %v1291 = vpop.f32.mrb[0].mxu0
      %v1292 = vadd.f32 0.0, %v1291
      %v1293 = vpop.f32.mrb[0].mxu0
      %v1294 = vadd.f32 0.0, %v1293
      %1295 = vmatprep.mubr.f32.mxu0 %v438
      %1296 = vmatmul.mubr.f32.gmra.mrb[0].mxu0 %v437
      %v1297 = vpop.f32.mrb[0].mxu0
      %v1298 = vadd.f32 0.0, %v1297
      %v1299 = vpop.f32.mrb[0].mxu0
      %v1300 = vadd.f32 0.0, %v1299
      %1301 = vmatprep.mubr.f32.mxu0 %v442
      %1302 = vmatmul.mubr.f32.gmra.mrb[0].mxu0 %v441
      %v1303 = vpop.f32.mrb[0].mxu0
      %v1304 = vadd.f32 0.0, %v1303
      %v1305 = vpop.f32.mrb[0].mxu0
      %v1306 = vadd.f32 0.0, %v1305
      %1307 = vdwg.mxu0
      %1308 = vmatprep.subr.mxu0 %v674
      %1309 = vmatpush1.msra.mxu0 %v673
      %1310 = vmatprep.subr.mxu0 %v681
      %1311 = vmatpush1.msra.mxu0 %v680
      %1312 = vmatprep.subr.mxu0 %v688
      %1313 = vmatpush1.msra.mxu0 %v687
      %1314 = vmatprep.subr.mxu0 %v695
      %1315 = vmatpush1.msra.mxu0 %v694
      %1316 = vmatprep.subr.mxu0 %v702
      %1317 = vmatpush1.msra.mxu0 %v701
      %1318 = vmatprep.subr.mxu0 %v709
      %1319 = vmatpush1.msra.mxu0 %v708
      %1320 = vmatprep.subr.mxu0 %v716
      %1321 = vmatpush1.msra.mxu0 %v715
      %1322 = vmatprep.subr.mxu0 %v723
      %1323 = vmatpush1.msra.mxu0 %v722
      %1324 = vmatprep.subr.mxu0 %v730
      %1325 = vmatpush1.msra.mxu0 %v729
      %1326 = vmatprep.subr.mxu0 %v737
      %1327 = vmatpush1.msra.mxu0 %v736
      %1328 = vmatprep.subr.mxu0 %v744
      %1329 = vmatpush1.msra.mxu0 %v743
      %1330 = vmatprep.subr.mxu0 %v751
      %1331 = vmatpush1.msra.mxu0 %v750
      %1332 = vmatprep.subr.mxu0 %v758
      %1333 = vmatpush1.msra.mxu0 %v757
      %1334 = vmatprep.subr.mxu0 %v765
      %1335 = vmatpush1.msra.mxu0 %v764
      %1336 = vmatprep.subr.mxu0 %v772
      %1337 = vmatpush1.msra.mxu0 %v771
      %1338 = vmatprep.subr.mxu0 %v779
      %1339 = vmatpush1.msra.mxu0 %v778
      %1340 = vmatprep.subr.mxu0 %v786
      %1341 = vmatpush1.msra.mxu0 %v785
      %1342 = vmatprep.subr.mxu0 %v793
      %1343 = vmatpush1.msra.mxu0 %v792
      %1344 = vmatprep.subr.mxu0 %v800
      %1345 = vmatpush1.msra.mxu0 %v799
      %1346 = vmatprep.subr.mxu0 %v807
      %1347 = vmatpush1.msra.mxu0 %v806
      %1348 = vmatprep.subr.mxu0 %v814
      %1349 = vmatpush1.msra.mxu0 %v813
      %1350 = vmatprep.subr.mxu0 %v821
      %1351 = vmatpush1.msra.mxu0 %v820
      %1352 = vmatprep.subr.mxu0 %v828
      %1353 = vmatpush1.msra.mxu0 %v827
      %1354 = vmatprep.subr.mxu0 %v835
      %1355 = vmatpush1.msra.mxu0 %v834
      %1356 = vmatprep.subr.mxu0 %v842
      %1357 = vmatpush1.msra.mxu0 %v841
      %1358 = vmatprep.subr.mxu0 %v849
      %1359 = vmatpush1.msra.mxu0 %v848
      %1360 = vmatprep.subr.mxu0 %v856
      %1361 = vmatpush1.msra.mxu0 %v855
      %1362 = vmatprep.subr.mxu0 %v863
      %1363 = vmatpush1.msra.mxu0 %v862
      %1364 = vmatprep.subr.mxu0 %v870
      %1365 = vmatpush1.msra.mxu0 %v869
      %1366 = vmatprep.subr.mxu0 %v877
      %1367 = vmatpush1.msra.mxu0 %v876
      %1368 = vmatprep.subr.mxu0 %v884
      %1369 = vmatpush1.msra.mxu0 %v883
      %1370 = vmatprep.subr.mxu0 %v891
      %1371 = vmatpush1.msra.mxu0 %v890
      %1372 = vmatprep.mubr.f32.mxu0 %v436
      %1373 = vmatmul.mubr.f32.gmra.mrb[0].mxu0 %v435
      %v1374 = vpop.f32.mrb[0].mxu0
      %v1375 = vadd.f32 %v1292, %v1374
      %v1376 = vpop.f32.mrb[0].mxu0
      %v1377 = vadd.f32 %v1294, %v1376
      %1378 = vmatprep.mubr.f32.mxu0 %v440
      %1379 = vmatmul.mubr.f32.gmra.mrb[0].mxu0 %v439
      %v1380 = vpop.f32.mrb[0].mxu0
      %v1381 = vadd.f32 %v1298, %v1380
      %v1382 = vpop.f32.mrb[0].mxu0
      %v1383 = vadd.f32 %v1300, %v1382
      %1384 = vmatprep.mubr.f32.mxu0 %v444
      %1385 = vmatmul.mubr.f32.gmra.mrb[0].mxu0 %v443
      %v1386 = vpop.f32.mrb[0].mxu0
      %v1387 = vadd.f32 %v1304, %v1386
      %v1388 = vpop.f32.mrb[0].mxu0
      %v1389 = vadd.f32 %v1306, %v1388
      %1390 = vdwg.mxu0
      %1391 = vmatprep.subr.mxu0 0.0
      %1392 = vmatpush1.msra.mxu0 %v451
      %1393 = vmatprep.subr.mxu0 0.0
      %1394 = vmatpush1.msra.mxu0 %v458
      %1395 = vmatprep.subr.mxu0 0.0
      %1396 = vmatpush1.msra.mxu0 %v465
      %1397 = vmatprep.subr.mxu0 0.0
      %1398 = vmatpush1.msra.mxu0 %v472
      %1399 = vmatprep.subr.mxu0 0.0
      %1400 = vmatpush1.msra.mxu0 %v479
      %1401 = vmatprep.subr.mxu0 0.0
      %1402 = vmatpush1.msra.mxu0 %v486
      %1403 = vmatprep.subr.mxu0 0.0
      %1404 = vmatpush1.msra.mxu0 %v493
      %1405 = vmatprep.subr.mxu0 0.0
      %1406 = vmatpush1.msra.mxu0 %v500
      %1407 = vmatprep.subr.mxu0 0.0
      %1408 = vmatpush1.msra.mxu0 %v507
      %1409 = vmatprep.subr.mxu0 0.0
      %1410 = vmatpush1.msra.mxu0 %v514
      %1411 = vmatprep.subr.mxu0 0.0
      %1412 = vmatpush1.msra.mxu0 %v521
      %1413 = vmatprep.subr.mxu0 0.0
      %1414 = vmatpush1.msra.mxu0 %v528
      %1415 = vmatprep.subr.mxu0 0.0
      %1416 = vmatpush1.msra.mxu0 %v535
      %1417 = vmatprep.subr.mxu0 0.0
      %1418 = vmatpush1.msra.mxu0 %v542
      %1419 = vmatprep.subr.mxu0 0.0
      %1420 = vmatpush1.msra.mxu0 %v549
      %1421 = vmatprep.subr.mxu0 0.0
      %1422 = vmatpush1.msra.mxu0 %v556
      %1423 = vmatprep.subr.mxu0 0.0
      %1424 = vmatpush1.msra.mxu0 %v563
      %1425 = vmatprep.subr.mxu0 0.0
      %1426 = vmatpush1.msra.mxu0 %v570
      %1427 = vmatprep.subr.mxu0 0.0
      %1428 = vmatpush1.msra.mxu0 %v577
      %1429 = vmatprep.subr.mxu0 0.0
      %1430 = vmatpush1.msra.mxu0 %v584
      %1431 = vmatprep.subr.mxu0 0.0
      %1432 = vmatpush1.msra.mxu0 %v591
      %1433 = vmatprep.subr.mxu0 0.0
      %1434 = vmatpush1.msra.mxu0 %v598
      %1435 = vmatprep.subr.mxu0 0.0
      %1436 = vmatpush1.msra.mxu0 %v605
      %1437 = vmatprep.subr.mxu0 0.0
      %1438 = vmatpush1.msra.mxu0 %v612
      %1439 = vmatprep.subr.mxu0 0.0
      %1440 = vmatpush1.msra.mxu0 %v619
      %1441 = vmatprep.subr.mxu0 0.0
      %1442 = vmatpush1.msra.mxu0 %v626
      %1443 = vmatprep.subr.mxu0 0.0
      %1444 = vmatpush1.msra.mxu0 %v633
      %1445 = vmatprep.subr.mxu0 0.0
      %1446 = vmatpush1.msra.mxu0 %v640
      %1447 = vmatprep.subr.mxu0 0.0
      %1448 = vmatpush1.msra.mxu0 %v647
      %1449 = vmatprep.subr.mxu0 0.0
      %1450 = vmatpush1.msra.mxu0 %v654
      %1451 = vmatprep.subr.mxu0 0.0
      %1452 = vmatpush1.msra.mxu0 %v661
      %1453 = vmatprep.subr.mxu0 0.0
      %1454 = vmatpush1.msra.mxu0 %v668
      %1455 = vmatprep.mubr.f32.mxu0 %v434
      %1456 = vmatmul.mubr.f32.gmra.mrb[0].mxu0 %v433
      %v1457 = vpop.f32.mrb[0].mxu0
      %v1458 = vadd.f32 0.0, %v1457
      %v1459 = vpop.f32.mrb[0].mxu0
      %1460 = vmatprep.mubr.f32.mxu0 %v438
      %1461 = vmatmul.mubr.f32.gmra.mrb[0].mxu0 %v437
      %v1462 = vpop.f32.mrb[0].mxu0
      %v1463 = vadd.f32 0.0, %v1462
      %v1464 = vpop.f32.mrb[0].mxu0
      %1465 = vmatprep.mubr.f32.mxu0 %v442
      %1466 = vmatmul.mubr.f32.gmra.mrb[0].mxu0 %v441
      %v1467 = vpop.f32.mrb[0].mxu0
      %v1468 = vadd.f32 0.0, %v1467
      %v1469 = vpop.f32.mrb[0].mxu0
      %1470 = vdwg.mxu0
      %1471 = vmatprep.subr.mxu0 0.0
      %1472 = vmatpush1.msra.mxu0 %v675
      %1473 = vmatprep.subr.mxu0 0.0
      %1474 = vmatpush1.msra.mxu0 %v682
      %1475 = vmatprep.subr.mxu0 0.0
      %1476 = vmatpush1.msra.mxu0 %v689
      %1477 = vmatprep.subr.mxu0 0.0
      %1478 = vmatpush1.msra.mxu0 %v696
      %1479 = vmatprep.subr.mxu0 0.0
      %1480 = vmatpush1.msra.mxu0 %v703
      %1481 = vmatprep.subr.mxu0 0.0
      %1482 = vmatpush1.msra.mxu0 %v710
      %1483 = vmatprep.subr.mxu0 0.0
      %1484 = vmatpush1.msra.mxu0 %v717
      %1485 = vmatprep.subr.mxu0 0.0
      %1486 = vmatpush1.msra.mxu0 %v724
      %1487 = vmatprep.subr.mxu0 0.0
      %1488 = vmatpush1.msra.mxu0 %v731
      %1489 = vmatprep.subr.mxu0 0.0
      %1490 = vmatpush1.msra.mxu0 %v738
      %1491 = vmatprep.subr.mxu0 0.0
      %1492 = vmatpush1.msra.mxu0 %v745
      %1493 = vmatprep.subr.mxu0 0.0
      %1494 = vmatpush1.msra.mxu0 %v752
      %1495 = vmatprep.subr.mxu0 0.0
      %1496 = vmatpush1.msra.mxu0 %v759
      %1497 = vmatprep.subr.mxu0 0.0
      %1498 = vmatpush1.msra.mxu0 %v766
      %1499 = vmatprep.subr.mxu0 0.0
      %1500 = vmatpush1.msra.mxu0 %v773
      %1501 = vmatprep.subr.mxu0 0.0
      %1502 = vmatpush1.msra.mxu0 %v780
      %1503 = vmatprep.subr.mxu0 0.0
      %1504 = vmatpush1.msra.mxu0 %v787
      %1505 = vmatprep.subr.mxu0 0.0
      %1506 = vmatpush1.msra.mxu0 %v794
      %1507 = vmatprep.subr.mxu0 0.0
      %1508 = vmatpush1.msra.mxu0 %v801
      %1509 = vmatprep.subr.mxu0 0.0
      %1510 = vmatpush1.msra.mxu0 %v808
      %1511 = vmatprep.subr.mxu0 0.0
      %1512 = vmatpush1.msra.mxu0 %v815
      %1513 = vmatprep.subr.mxu0 0.0
      %1514 = vmatpush1.msra.mxu0 %v822
      %1515 = vmatprep.subr.mxu0 0.0
      %1516 = vmatpush1.msra.mxu0 %v829
      %1517 = vmatprep.subr.mxu0 0.0
      %1518 = vmatpush1.msra.mxu0 %v836
      %1519 = vmatprep.subr.mxu0 0.0
      %1520 = vmatpush1.msra.mxu0 %v843
      %1521 = vmatprep.subr.mxu0 0.0
      %1522 = vmatpush1.msra.mxu0 %v850
      %1523 = vmatprep.subr.mxu0 0.0
      %1524 = vmatpush1.msra.mxu0 %v857
      %1525 = vmatprep.subr.mxu0 0.0
      %1526 = vmatpush1.msra.mxu0 %v864
      %1527 = vmatprep.subr.mxu0 0.0
      %1528 = vmatpush1.msra.mxu0 %v871
      %1529 = vmatprep.subr.mxu0 0.0
      %1530 = vmatpush1.msra.mxu0 %v878
      %1531 = vmatprep.subr.mxu0 0.0
      %1532 = vmatpush1.msra.mxu0 %v885
      %1533 = vmatprep.subr.mxu0 0.0
      %1534 = vmatpush1.msra.mxu0 %v892
      %1535 = vmatprep.mubr.f32.mxu0 %v436
      %1536 = vmatmul.mubr.f32.gmra.mrb[0].mxu0 %v435
      %v1537 = vpop.f32.mrb[0].mxu0
      %v1538 = vadd.f32 %v1458, %v1537
      %v1539 = vpop.f32.mrb[0].mxu0
      %1540 = vmatprep.mubr.f32.mxu0 %v440
      %1541 = vmatmul.mubr.f32.gmra.mrb[0].mxu0 %v439
      %v1542 = vpop.f32.mrb[0].mxu0
      %v1543 = vadd.f32 %v1463, %v1542
      %v1544 = vpop.f32.mrb[0].mxu0
      %1545 = vmatprep.mubr.f32.mxu0 %v444
      %1546 = vmatmul.mubr.f32.gmra.mrb[0].mxu0 %v443
      %v1547 = vpop.f32.mrb[0].mxu0
      %v1548 = vadd.f32 %v1468, %v1547
      %v1549 = vpop.f32.mrb[0].mxu0
      %1550 = vdwg.mxu0
      %v1551 = vadd.f32 %v1043, %v1045
      %v1552 = vadd.f32 %v1551, %v1209
      %v1553 = vadd.f32 %v1552, %v1211
      %v1554 = vadd.f32 %v1553, %v1375
      %v1555 = vadd.f32 %v1554, %v1377
      %vm1556 = vcmask 130048
      %v1557 = vsel %vm1556, %v1538, 0.0
      %v1558 = vadd.f32 %v1555, %v1557
      %1559 = vadd.xlane.f32.xlu0 %v1558
      %v1560 = vpop.xlane.xlu0 %1559
      %v1561 = vadd.f32 %v1049, %v1051
      %v1562 = vadd.f32 %v1561, %v1215
      %v1563 = vadd.f32 %v1562, %v1217
      %v1564 = vadd.f32 %v1563, %v1381
      %v1565 = vadd.f32 %v1564, %v1383
      %v1566 = vsel %vm1556, %v1543, 0.0
      %v1567 = vadd.f32 %v1565, %v1566
      %1568 = vadd.xlane.f32.xlu0 %v1567
      %v1569 = vpop.xlane.xlu0 %1568
      %vm1570 = vcmask 1043456
      %v1571 = vsel %vm1570, %v1055, 0.0
      %v1572 = vsel %vm1570, %v1057, 0.0
      %v1573 = vadd.f32 %v1571, %v1572
      %v1574 = vsel %vm1570, %v1221, 0.0
      %v1575 = vadd.f32 %v1573, %v1574
      %v1576 = vsel %vm1570, %v1223, 0.0
      %v1577 = vadd.f32 %v1575, %v1576
      %v1578 = vsel %vm1570, %v1387, 0.0
      %v1579 = vadd.f32 %v1577, %v1578
      %v1580 = vsel %vm1570, %v1389, 0.0
      %v1581 = vadd.f32 %v1579, %v1580
      %vm1582 = vcmask 125952
      %v1583 = vsel %vm1582, %v1548, 0.0
      %v1584 = vadd.f32 %v1581, %v1583
      %1585 = vadd.xlane.f32.xlu0 %v1584
      %v1586 = vpop.xlane.xlu0 %1585
      %p1587 = scmp.eq.s32.totalorder %s24, 0
      // Predicated region
      $region45: #{classifer_forward.1} parent=43 // pred_check
        %p1588 = pneg %p1587
      $region46: #{classifer_forward.1} parent=43 // pred_check_branch
        %1590 = sbr.rel (%p1588) target = $region48
      $region47: #{classifer_forward.1} parent=43 // pred_region
        %vm1591 = vcmask 7168
        %1592 = vst.msk [vmem:[#allocation2] sm:$0xff] %vm1591, 0.0
        %1593 = vst.msk [vmem:[#allocation2 + $0x8] sm:$0xff] %vm1591, 0.0
        %vm1594 = vcmask 3072
        %1595 = vst.msk [vmem:[#allocation2 + $0x10] sm:$0xf] %vm1594, 0.0
      $region48: #{classifer_forward.1} parent=43 // pred_fallthru
        _
      %v1596 = vld [vmem:[#allocation2] sm:$0xff]
      %v1597 = vld [vmem:[#allocation2 + $0x8] sm:$0xff]
      %v1598 = vld [vmem:[#allocation2 + $0x10] sm:$0xf]
      %v1599 = vadd.f32 %v1596, %v1560
      %v1600 = vadd.f32 %v1597, %v1569
      %v1601 = vadd.f32 %v1598, %v1586
      %vm1602 = vcmask 7168
      %1603 = vst.msk [vmem:[#allocation2] sm:$0xff] %vm1602, %v1599
      %1604 = vst.msk [vmem:[#allocation2 + $0x8] sm:$0xff] %vm1602, %v1600
      %vm1605 = vcmask 3072
      %1606 = vst.msk [vmem:[#allocation2 + $0x10] sm:$0xf] %vm1605, %v1601
      %v1607 = vld [vmem:[%s416] sm:$0x1]
      %vm1608 = vcmp.ne.f32.partialorder %v1607, 0.0
      %v1609 = vsel %vm1608, 1, 0
      %v1610 = vcvt.s32.f32 %v1609
      %v1611 = vld [vmem:[%s412] sm:$0xff]
      %v1612 = vld [vmem:[%s412 + $0x8] sm:$0xff]
      %v1613 = vld [vmem:[%s412 + $0x10] sm:$0xff]
      %v1614 = vld [vmem:[%s412 + $0x18] sm:$0xff]
      %v1615 = vld [vmem:[%s412 + $0x20] sm:$0xff]
      %v1616 = vld [vmem:[%s412 + $0x28] sm:$0xff]
      %v1617 = vld [vmem:[%s412 + $0x30] sm:$0xff]
      %v1618 = vld [vmem:[%s412 + $0x38] sm:$0xff]
      %v1619 = vld [vmem:[%s412 + $0x40] sm:$0xff]
      %v1620 = vld [vmem:[%s412 + $0x48] sm:$0xff]
      %v1621 = vld [vmem:[%s412 + $0x50] sm:$0xff]
      %v1622 = vld [vmem:[%s412 + $0x58] sm:$0xff]
      %v1623 = vld [vmem:[%s412 + $0x60] sm:$0xff]
      %v1624 = vld [vmem:[%s412 + $0x68] sm:$0xff]
      %v1625 = vld [vmem:[%s412 + $0x70] sm:$0xff]
      %v1626 = vld [vmem:[%s412 + $0x78] sm:$0xff]
      %v1627 = vld [vmem:[%s412 + $0x80] sm:$0xff]
      %v1628 = vld [vmem:[%s412 + $0x88] sm:$0xff]
      %v1629 = vld [vmem:[%s412 + $0x90] sm:$0xff]
      %v1630 = vld [vmem:[%s412 + $0x98] sm:$0xff]
      %v1631 = vld [vmem:[%s412 + $0xa0] sm:$0xff]
      %v1632 = vld [vmem:[%s412 + $0xa8] sm:$0xff]
      %v1633 = vld [vmem:[%s412 + $0xb0] sm:$0xff]
      %v1634 = vld [vmem:[%s412 + $0xb8] sm:$0xff]
      %v1635 = vld [vmem:[%s412 + $0xc0] sm:$0xff]
      %v1636 = vld [vmem:[%s412 + $0xc8] sm:$0xff]
      %v1637 = vld [vmem:[%s412 + $0xd0] sm:$0xff]
      %v1638 = vld [vmem:[%s412 + $0xd8] sm:$0xff]
      %v1639 = vld [vmem:[%s412 + $0xe0] sm:$0xff]
      %v1640 = vld [vmem:[%s412 + $0xe8] sm:$0xff]
      %v1641 = vld [vmem:[%s412 + $0xf0] sm:$0xff]
      %v1642 = vld [vmem:[%s412 + $0xf8] sm:$0xff]
      %v1643 = vld [vmem:[%s412 + $0x100] sm:$0xff]
      %v1644 = vld [vmem:[%s412 + $0x108] sm:$0xff]
      %v1645 = vld [vmem:[%s412 + $0x110] sm:$0xff]
      %v1646 = vld [vmem:[%s412 + $0x118] sm:$0xff]
      %v1647 = vld [vmem:[%s412 + $0x120] sm:$0xff]
      %v1648 = vld [vmem:[%s412 + $0x128] sm:$0xff]
      %v1649 = vld [vmem:[%s412 + $0x130] sm:$0xff]
      %v1650 = vld [vmem:[%s412 + $0x138] sm:$0xff]
      %v1651 = vld [vmem:[%s412 + $0x140] sm:$0xff]
      %v1652 = vld [vmem:[%s412 + $0x148] sm:$0xff]
      %v1653 = vld [vmem:[%s412 + $0x150] sm:$0xff]
      %v1654 = vld [vmem:[%s412 + $0x158] sm:$0xff]
      %v1655 = vld [vmem:[%s412 + $0x160] sm:$0xff]
      %v1656 = vld [vmem:[%s412 + $0x168] sm:$0xff]
      %v1657 = vld [vmem:[%s412 + $0x170] sm:$0xff]
      %v1658 = vld [vmem:[%s412 + $0x178] sm:$0xff]
      %v1659 = vld [vmem:[%s412 + $0x180] sm:$0xff]
      %v1660 = vld [vmem:[%s412 + $0x188] sm:$0xff]
      %v1661 = vld [vmem:[%s412 + $0x190] sm:$0xff]
      %v1662 = vld [vmem:[%s412 + $0x198] sm:$0xff]
      %v1663 = vld [vmem:[%s412 + $0x1a0] sm:$0xff]
      %v1664 = vld [vmem:[%s412 + $0x1a8] sm:$0xff]
      %v1665 = vld [vmem:[%s412 + $0x1b0] sm:$0xff]
      %v1666 = vld [vmem:[%s412 + $0x1b8] sm:$0xff]
      %v1667 = vld [vmem:[%s412 + $0x1c0] sm:$0xff]
      %v1668 = vld [vmem:[%s412 + $0x1c8] sm:$0xff]
      %v1669 = vld [vmem:[%s412 + $0x1d0] sm:$0xff]
      %v1670 = vld [vmem:[%s412 + $0x1d8] sm:$0xff]
      %v1671 = vld [vmem:[%s412 + $0x1e0] sm:$0xff]
      %v1672 = vld [vmem:[%s412 + $0x1e8] sm:$0xff]
      %v1673 = vld [vmem:[%s412 + $0x1f0] sm:$0xff]
      %v1674 = vld [vmem:[%s412 + $0x1f8] sm:$0xff]
      %v1676 = vlaneseq
      %v1677 = vshrl.u32 %v1676, 7
      %v1678 = vsub.s32 0, %v1677
      %v1679 = vrot.slane %v1610, %v1678
      %v1681 = vmul.f32 %v1611, %v1679
      %v1682 = vmul.f32 %v1612, %v1679
      %v1683 = vmul.f32 %v1613, %v1679
      %v1684 = vmul.f32 %v1614, %v1679
      %v1685 = vmul.f32 %v1615, %v1679
      %v1686 = vmul.f32 %v1616, %v1679
      %v1687 = vmul.f32 %v1617, %v1679
      %v1688 = vmul.f32 %v1618, %v1679
      %v1689 = vmul.f32 %v1619, %v1679
      %v1690 = vmul.f32 %v1620, %v1679
      %v1691 = vmul.f32 %v1621, %v1679
      %v1692 = vmul.f32 %v1622, %v1679
      %v1693 = vmul.f32 %v1623, %v1679
      %v1694 = vmul.f32 %v1624, %v1679
      %v1695 = vmul.f32 %v1625, %v1679
      %v1696 = vmul.f32 %v1626, %v1679
      %v1697 = vmul.f32 %v1627, %v1679
      %v1698 = vmul.f32 %v1628, %v1679
      %v1699 = vmul.f32 %v1629, %v1679
      %v1700 = vmul.f32 %v1630, %v1679
      %v1701 = vmul.f32 %v1631, %v1679
      %v1702 = vmul.f32 %v1632, %v1679
      %v1703 = vmul.f32 %v1633, %v1679
      %v1704 = vmul.f32 %v1634, %v1679
      %v1705 = vmul.f32 %v1635, %v1679
      %v1706 = vmul.f32 %v1636, %v1679
      %v1707 = vmul.f32 %v1637, %v1679
      %v1708 = vmul.f32 %v1638, %v1679
      %v1709 = vmul.f32 %v1639, %v1679
      %v1710 = vmul.f32 %v1640, %v1679
      %v1711 = vmul.f32 %v1641, %v1679
      %v1712 = vmul.f32 %v1642, %v1679
      %v1713 = vmul.f32 %v1643, %v1679
      %v1714 = vmul.f32 %v1644, %v1679
      %v1715 = vmul.f32 %v1645, %v1679
      %v1716 = vmul.f32 %v1646, %v1679
      %v1717 = vmul.f32 %v1647, %v1679
      %v1718 = vmul.f32 %v1648, %v1679
      %v1719 = vmul.f32 %v1649, %v1679
      %v1720 = vmul.f32 %v1650, %v1679
      %v1721 = vmul.f32 %v1651, %v1679
      %v1722 = vmul.f32 %v1652, %v1679
      %v1723 = vmul.f32 %v1653, %v1679
      %v1724 = vmul.f32 %v1654, %v1679
      %v1725 = vmul.f32 %v1655, %v1679
      %v1726 = vmul.f32 %v1656, %v1679
      %v1727 = vmul.f32 %v1657, %v1679
      %v1728 = vmul.f32 %v1658, %v1679
      %v1729 = vmul.f32 %v1659, %v1679
      %v1730 = vmul.f32 %v1660, %v1679
      %v1731 = vmul.f32 %v1661, %v1679
      %v1732 = vmul.f32 %v1662, %v1679
      %v1733 = vmul.f32 %v1663, %v1679
      %v1734 = vmul.f32 %v1664, %v1679
      %v1735 = vmul.f32 %v1665, %v1679
      %v1736 = vmul.f32 %v1666, %v1679
      %v1737 = vmul.f32 %v1667, %v1679
      %v1738 = vmul.f32 %v1668, %v1679
      %v1739 = vmul.f32 %v1669, %v1679
      %v1740 = vmul.f32 %v1670, %v1679
      %v1741 = vmul.f32 %v1671, %v1679
      %v1742 = vmul.f32 %v1672, %v1679
      %v1743 = vmul.f32 %v1673, %v1679
      %v1744 = vmul.f32 %v1674, %v1679
      %vm1745 = vcmask 162816
      %v1746 = vsel %vm1745, %v1681, 0.0
      %1747 = vadd.xlane.f32.xlu0 %v1746
      %v1748 = vpop.xlane.xlu0 %1747
      %v1749 = vsel %vm1745, %v1682, 0.0
      %1750 = vadd.xlane.f32.xlu0 %v1749
      %v1751 = vpop.xlane.xlu0 %1750
      %v1752 = vsel %vm1745, %v1683, 0.0
      %1753 = vadd.xlane.f32.xlu0 %v1752
      %v1754 = vpop.xlane.xlu0 %1753
      %v1755 = vsel %vm1745, %v1684, 0.0
      %1756 = vadd.xlane.f32.xlu0 %v1755
      %v1757 = vpop.xlane.xlu0 %1756
      %v1758 = vsel %vm1745, %v1685, 0.0
      %1759 = vadd.xlane.f32.xlu0 %v1758
      %v1760 = vpop.xlane.xlu0 %1759
      %v1761 = vsel %vm1745, %v1686, 0.0
      %1762 = vadd.xlane.f32.xlu0 %v1761
      %v1763 = vpop.xlane.xlu0 %1762
      %v1764 = vsel %vm1745, %v1687, 0.0
      %1765 = vadd.xlane.f32.xlu0 %v1764
      %v1766 = vpop.xlane.xlu0 %1765
      %v1767 = vsel %vm1745, %v1688, 0.0
      %1768 = vadd.xlane.f32.xlu0 %v1767
      %v1769 = vpop.xlane.xlu0 %1768
      %v1770 = vsel %vm1745, %v1689, 0.0
      %1771 = vadd.xlane.f32.xlu0 %v1770
      %v1772 = vpop.xlane.xlu0 %1771
      %v1773 = vsel %vm1745, %v1690, 0.0
      %1774 = vadd.xlane.f32.xlu0 %v1773
      %v1775 = vpop.xlane.xlu0 %1774
      %v1776 = vsel %vm1745, %v1691, 0.0
      %1777 = vadd.xlane.f32.xlu0 %v1776
      %v1778 = vpop.xlane.xlu0 %1777
      %v1779 = vsel %vm1745, %v1692, 0.0
      %1780 = vadd.xlane.f32.xlu0 %v1779
      %v1781 = vpop.xlane.xlu0 %1780
      %v1782 = vsel %vm1745, %v1693, 0.0
      %1783 = vadd.xlane.f32.xlu0 %v1782
      %v1784 = vpop.xlane.xlu0 %1783
      %v1785 = vsel %vm1745, %v1694, 0.0
      %1786 = vadd.xlane.f32.xlu0 %v1785
      %v1787 = vpop.xlane.xlu0 %1786
      %v1788 = vsel %vm1745, %v1695, 0.0
      %1789 = vadd.xlane.f32.xlu0 %v1788
      %v1790 = vpop.xlane.xlu0 %1789
      %v1791 = vsel %vm1745, %v1696, 0.0
      %1792 = vadd.xlane.f32.xlu0 %v1791
      %v1793 = vpop.xlane.xlu0 %1792
      %v1794 = vsel %vm1745, %v1697, 0.0
      %1795 = vadd.xlane.f32.xlu0 %v1794
      %v1796 = vpop.xlane.xlu0 %1795
      %v1797 = vsel %vm1745, %v1698, 0.0
      %1798 = vadd.xlane.f32.xlu0 %v1797
      %v1799 = vpop.xlane.xlu0 %1798
      %v1800 = vsel %vm1745, %v1699, 0.0
      %1801 = vadd.xlane.f32.xlu0 %v1800
      %v1802 = vpop.xlane.xlu0 %1801
      %v1803 = vsel %vm1745, %v1700, 0.0
      %1804 = vadd.xlane.f32.xlu0 %v1803
      %v1805 = vpop.xlane.xlu0 %1804
      %v1806 = vsel %vm1745, %v1701, 0.0
      %1807 = vadd.xlane.f32.xlu0 %v1806
      %v1808 = vpop.xlane.xlu0 %1807
      %v1809 = vsel %vm1745, %v1702, 0.0
      %1810 = vadd.xlane.f32.xlu0 %v1809
      %v1811 = vpop.xlane.xlu0 %1810
      %v1812 = vsel %vm1745, %v1703, 0.0
      %1813 = vadd.xlane.f32.xlu0 %v1812
      %v1814 = vpop.xlane.xlu0 %1813
      %v1815 = vsel %vm1745, %v1704, 0.0
      %1816 = vadd.xlane.f32.xlu0 %v1815
      %v1817 = vpop.xlane.xlu0 %1816
      %v1818 = vsel %vm1745, %v1705, 0.0
      %1819 = vadd.xlane.f32.xlu0 %v1818
      %v1820 = vpop.xlane.xlu0 %1819
      %v1821 = vsel %vm1745, %v1706, 0.0
      %1822 = vadd.xlane.f32.xlu0 %v1821
      %v1823 = vpop.xlane.xlu0 %1822
      %v1824 = vsel %vm1745, %v1707, 0.0
      %1825 = vadd.xlane.f32.xlu0 %v1824
      %v1826 = vpop.xlane.xlu0 %1825
      %v1827 = vsel %vm1745, %v1708, 0.0
      %1828 = vadd.xlane.f32.xlu0 %v1827
      %v1829 = vpop.xlane.xlu0 %1828
      %v1830 = vsel %vm1745, %v1709, 0.0
      %1831 = vadd.xlane.f32.xlu0 %v1830
      %v1832 = vpop.xlane.xlu0 %1831
      %v1833 = vsel %vm1745, %v1710, 0.0
      %1834 = vadd.xlane.f32.xlu0 %v1833
      %v1835 = vpop.xlane.xlu0 %1834
      %v1836 = vsel %vm1745, %v1711, 0.0
      %1837 = vadd.xlane.f32.xlu0 %v1836
      %v1838 = vpop.xlane.xlu0 %1837
      %v1839 = vsel %vm1745, %v1712, 0.0
      %1840 = vadd.xlane.f32.xlu0 %v1839
      %v1841 = vpop.xlane.xlu0 %1840
      %v1842 = vsel %vm1745, %v1713, 0.0
      %1843 = vadd.xlane.f32.xlu0 %v1842
      %v1844 = vpop.xlane.xlu0 %1843
      %v1845 = vsel %vm1745, %v1714, 0.0
      %1846 = vadd.xlane.f32.xlu0 %v1845
      %v1847 = vpop.xlane.xlu0 %1846
      %v1848 = vsel %vm1745, %v1715, 0.0
      %1849 = vadd.xlane.f32.xlu0 %v1848
      %v1850 = vpop.xlane.xlu0 %1849
      %v1851 = vsel %vm1745, %v1716, 0.0
      %1852 = vadd.xlane.f32.xlu0 %v1851
      %v1853 = vpop.xlane.xlu0 %1852
      %v1854 = vsel %vm1745, %v1717, 0.0
      %1855 = vadd.xlane.f32.xlu0 %v1854
      %v1856 = vpop.xlane.xlu0 %1855
      %v1857 = vsel %vm1745, %v1718, 0.0
      %1858 = vadd.xlane.f32.xlu0 %v1857
      %v1859 = vpop.xlane.xlu0 %1858
      %v1860 = vsel %vm1745, %v1719, 0.0
      %1861 = vadd.xlane.f32.xlu0 %v1860
      %v1862 = vpop.xlane.xlu0 %1861
      %v1863 = vsel %vm1745, %v1720, 0.0
      %1864 = vadd.xlane.f32.xlu0 %v1863
      %v1865 = vpop.xlane.xlu0 %1864
      %v1866 = vsel %vm1745, %v1721, 0.0
      %1867 = vadd.xlane.f32.xlu0 %v1866
      %v1868 = vpop.xlane.xlu0 %1867
      %v1869 = vsel %vm1745, %v1722, 0.0
      %1870 = vadd.xlane.f32.xlu0 %v1869
      %v1871 = vpop.xlane.xlu0 %1870
      %v1872 = vsel %vm1745, %v1723, 0.0
      %1873 = vadd.xlane.f32.xlu0 %v1872
      %v1874 = vpop.xlane.xlu0 %1873
      %v1875 = vsel %vm1745, %v1724, 0.0
      %1876 = vadd.xlane.f32.xlu0 %v1875
      %v1877 = vpop.xlane.xlu0 %1876
      %v1878 = vsel %vm1745, %v1725, 0.0
      %1879 = vadd.xlane.f32.xlu0 %v1878
      %v1880 = vpop.xlane.xlu0 %1879
      %v1881 = vsel %vm1745, %v1726, 0.0
      %1882 = vadd.xlane.f32.xlu0 %v1881
      %v1883 = vpop.xlane.xlu0 %1882
      %v1884 = vsel %vm1745, %v1727, 0.0
      %1885 = vadd.xlane.f32.xlu0 %v1884
      %v1886 = vpop.xlane.xlu0 %1885
      %v1887 = vsel %vm1745, %v1728, 0.0
      %1888 = vadd.xlane.f32.xlu0 %v1887
      %v1889 = vpop.xlane.xlu0 %1888
      %v1890 = vsel %vm1745, %v1729, 0.0
      %1891 = vadd.xlane.f32.xlu0 %v1890
      %v1892 = vpop.xlane.xlu0 %1891
      %v1893 = vsel %vm1745, %v1730, 0.0
      %1894 = vadd.xlane.f32.xlu0 %v1893
      %v1895 = vpop.xlane.xlu0 %1894
      %v1896 = vsel %vm1745, %v1731, 0.0
      %1897 = vadd.xlane.f32.xlu0 %v1896
      %v1898 = vpop.xlane.xlu0 %1897
      %v1899 = vsel %vm1745, %v1732, 0.0
      %1900 = vadd.xlane.f32.xlu0 %v1899
      %v1901 = vpop.xlane.xlu0 %1900
      %v1902 = vsel %vm1745, %v1733, 0.0
      %1903 = vadd.xlane.f32.xlu0 %v1902
      %v1904 = vpop.xlane.xlu0 %1903
      %v1905 = vsel %vm1745, %v1734, 0.0
      %1906 = vadd.xlane.f32.xlu0 %v1905
      %v1907 = vpop.xlane.xlu0 %1906
      %v1908 = vsel %vm1745, %v1735, 0.0
      %1909 = vadd.xlane.f32.xlu0 %v1908
      %v1910 = vpop.xlane.xlu0 %1909
      %v1911 = vsel %vm1745, %v1736, 0.0
      %1912 = vadd.xlane.f32.xlu0 %v1911
      %v1913 = vpop.xlane.xlu0 %1912
      %v1914 = vsel %vm1745, %v1737, 0.0
      %1915 = vadd.xlane.f32.xlu0 %v1914
      %v1916 = vpop.xlane.xlu0 %1915
      %v1917 = vsel %vm1745, %v1738, 0.0
      %1918 = vadd.xlane.f32.xlu0 %v1917
      %v1919 = vpop.xlane.xlu0 %1918
      %v1920 = vsel %vm1745, %v1739, 0.0
      %1921 = vadd.xlane.f32.xlu0 %v1920
      %v1922 = vpop.xlane.xlu0 %1921
      %v1923 = vsel %vm1745, %v1740, 0.0
      %1924 = vadd.xlane.f32.xlu0 %v1923
      %v1925 = vpop.xlane.xlu0 %1924
      %v1926 = vsel %vm1745, %v1741, 0.0
      %1927 = vadd.xlane.f32.xlu0 %v1926
      %v1928 = vpop.xlane.xlu0 %1927
      %v1929 = vsel %vm1745, %v1742, 0.0
      %1930 = vadd.xlane.f32.xlu0 %v1929
      %v1931 = vpop.xlane.xlu0 %1930
      %v1932 = vsel %vm1745, %v1743, 0.0
      %1933 = vadd.xlane.f32.xlu0 %v1932
      %v1934 = vpop.xlane.xlu0 %1933
      %v1935 = vsel %vm1745, %v1744, 0.0
      %1936 = vadd.xlane.f32.xlu0 %v1935
      %v1937 = vpop.xlane.xlu0 %1936
      %v1938 = vld [vmem:[%s400] sm:$0xff]
      %v1939 = vld [vmem:[%s400 + $0x8] sm:$0xff]
      %v1940 = vld [vmem:[%s400 + $0x10] sm:$0xff]
      %v1941 = vld [vmem:[%s400 + $0x18] sm:$0xff]
      %v1942 = vld [vmem:[%s400 + $0x20] sm:$0xff]
      %v1943 = vld [vmem:[%s400 + $0x28] sm:$0xff]
      %v1944 = vld [vmem:[%s400 + $0x30] sm:$0xff]
      %v1945 = vld [vmem:[%s400 + $0x38] sm:$0xff]
      %v1946 = vld [vmem:[%s400 + $0x40] sm:$0xff]
      %v1947 = vld [vmem:[%s400 + $0x48] sm:$0xff]
      %v1948 = vld [vmem:[%s400 + $0x50] sm:$0xff]
      %v1949 = vld [vmem:[%s400 + $0x58] sm:$0xff]
      %v1950 = vld [vmem:[%s400 + $0x60] sm:$0xff]
      %v1951 = vld [vmem:[%s400 + $0x68] sm:$0xff]
      %v1952 = vld [vmem:[%s400 + $0x70] sm:$0xff]
      %v1953 = vld [vmem:[%s400 + $0x78] sm:$0xff]
      %v1954 = vld [vmem:[%s400 + $0x80] sm:$0xff]
      %v1955 = vld [vmem:[%s400 + $0x88] sm:$0xff]
      %v1956 = vld [vmem:[%s400 + $0x90] sm:$0xff]
      %v1957 = vld [vmem:[%s400 + $0x98] sm:$0xff]
      %v1958 = vld [vmem:[%s400 + $0xa0] sm:$0xff]
      %v1959 = vld [vmem:[%s400 + $0xa8] sm:$0xff]
      %v1960 = vld [vmem:[%s400 + $0xb0] sm:$0xff]
      %v1961 = vld [vmem:[%s400 + $0xb8] sm:$0xff]
      %v1962 = vld [vmem:[%s400 + $0xc0] sm:$0xff]
      %v1963 = vld [vmem:[%s400 + $0xc8] sm:$0xff]
      %v1964 = vld [vmem:[%s400 + $0xd0] sm:$0xff]
      %v1965 = vld [vmem:[%s400 + $0xd8] sm:$0xff]
      %v1966 = vld [vmem:[%s400 + $0xe0] sm:$0xff]
      %v1967 = vld [vmem:[%s400 + $0xe8] sm:$0xff]
      %v1968 = vld [vmem:[%s400 + $0xf0] sm:$0xff]
      %v1969 = vld [vmem:[%s400 + $0xf8] sm:$0xff]
      %v1970 = vld [vmem:[%s400 + $0x100] sm:$0xff]
      %v1971 = vld [vmem:[%s400 + $0x108] sm:$0xff]
      %v1972 = vld [vmem:[%s400 + $0x110] sm:$0xff]
      %v1973 = vld [vmem:[%s400 + $0x118] sm:$0xff]
      %v1974 = vld [vmem:[%s400 + $0x120] sm:$0xff]
      %v1975 = vld [vmem:[%s400 + $0x128] sm:$0xff]
      %v1976 = vld [vmem:[%s400 + $0x130] sm:$0xff]
      %v1977 = vld [vmem:[%s400 + $0x138] sm:$0xff]
      %v1978 = vld [vmem:[%s400 + $0x140] sm:$0xff]
      %v1979 = vld [vmem:[%s400 + $0x148] sm:$0xff]
      %v1980 = vld [vmem:[%s400 + $0x150] sm:$0xff]
      %v1981 = vld [vmem:[%s400 + $0x158] sm:$0xff]
      %v1982 = vld [vmem:[%s400 + $0x160] sm:$0xff]
      %v1983 = vld [vmem:[%s400 + $0x168] sm:$0xff]
      %v1984 = vld [vmem:[%s400 + $0x170] sm:$0xff]
      %v1985 = vld [vmem:[%s400 + $0x178] sm:$0xff]
      %v1986 = vld [vmem:[%s400 + $0x180] sm:$0xff]
      %v1987 = vld [vmem:[%s400 + $0x188] sm:$0xff]
      %v1988 = vld [vmem:[%s400 + $0x190] sm:$0xff]
      %v1989 = vld [vmem:[%s400 + $0x198] sm:$0xff]
      %v1990 = vld [vmem:[%s400 + $0x1a0] sm:$0xff]
      %v1991 = vld [vmem:[%s400 + $0x1a8] sm:$0xff]
      %v1992 = vld [vmem:[%s400 + $0x1b0] sm:$0xff]
      %v1993 = vld [vmem:[%s400 + $0x1b8] sm:$0xff]
      %v1994 = vld [vmem:[%s400 + $0x1c0] sm:$0xff]
      %v1995 = vld [vmem:[%s400 + $0x1c8] sm:$0xff]
      %v1996 = vld [vmem:[%s400 + $0x1d0] sm:$0xff]
      %v1997 = vld [vmem:[%s400 + $0x1d8] sm:$0xff]
      %v1998 = vld [vmem:[%s400 + $0x1e0] sm:$0xff]
      %v1999 = vld [vmem:[%s400 + $0x1e8] sm:$0xff]
      %v2000 = vld [vmem:[%s400 + $0x1f0] sm:$0xff]
      %v2001 = vld [vmem:[%s400 + $0x1f8] sm:$0xff]
      %v2002 = vld [vmem:[%s400 + $0x200] sm:$0xff]
      %v2003 = vld [vmem:[%s400 + $0x208] sm:$0xff]
      %v2004 = vld [vmem:[%s400 + $0x210] sm:$0xff]
      %v2005 = vld [vmem:[%s400 + $0x218] sm:$0xff]
      %v2006 = vld [vmem:[%s400 + $0x220] sm:$0xff]
      %v2007 = vld [vmem:[%s400 + $0x228] sm:$0xff]
      %v2008 = vld [vmem:[%s400 + $0x230] sm:$0xff]
      %v2009 = vld [vmem:[%s400 + $0x238] sm:$0xff]
      %v2010 = vld [vmem:[%s400 + $0x240] sm:$0xff]
      %v2011 = vld [vmem:[%s400 + $0x248] sm:$0xff]
      %v2012 = vld [vmem:[%s400 + $0x250] sm:$0xff]
      %v2013 = vld [vmem:[%s400 + $0x258] sm:$0xff]
      %v2014 = vld [vmem:[%s400 + $0x260] sm:$0xff]
      %v2015 = vld [vmem:[%s400 + $0x268] sm:$0xff]
      %v2016 = vld [vmem:[%s400 + $0x270] sm:$0xff]
      %v2017 = vld [vmem:[%s400 + $0x278] sm:$0xff]
      %v2018 = vld [vmem:[%s400 + $0x280] sm:$0xff]
      %v2019 = vld [vmem:[%s400 + $0x288] sm:$0xff]
      %v2020 = vld [vmem:[%s400 + $0x290] sm:$0xff]
      %v2021 = vld [vmem:[%s400 + $0x298] sm:$0xff]
      %v2022 = vld [vmem:[%s400 + $0x2a0] sm:$0xff]
      %v2023 = vld [vmem:[%s400 + $0x2a8] sm:$0xff]
      %v2024 = vld [vmem:[%s400 + $0x2b0] sm:$0xff]
      %v2025 = vld [vmem:[%s400 + $0x2b8] sm:$0xff]
      %v2026 = vld [vmem:[%s400 + $0x2c0] sm:$0xff]
      %v2027 = vld [vmem:[%s400 + $0x2c8] sm:$0xff]
      %v2028 = vld [vmem:[%s400 + $0x2d0] sm:$0xff]
      %v2029 = vld [vmem:[%s400 + $0x2d8] sm:$0xff]
      %v2030 = vld [vmem:[%s400 + $0x2e0] sm:$0xff]
      %v2031 = vld [vmem:[%s400 + $0x2e8] sm:$0xff]
      %v2032 = vld [vmem:[%s400 + $0x2f0] sm:$0xff]
      %v2033 = vld [vmem:[%s400 + $0x2f8] sm:$0xff]
      %v2034 = vld [vmem:[%s400 + $0x300] sm:$0xff]
      %v2035 = vld [vmem:[%s400 + $0x308] sm:$0xff]
      %v2036 = vld [vmem:[%s400 + $0x310] sm:$0xff]
      %v2037 = vld [vmem:[%s400 + $0x318] sm:$0xff]
      %v2038 = vld [vmem:[%s400 + $0x320] sm:$0xff]
      %v2039 = vld [vmem:[%s400 + $0x328] sm:$0xff]
      %v2040 = vld [vmem:[%s400 + $0x330] sm:$0xff]
      %v2041 = vld [vmem:[%s400 + $0x338] sm:$0xff]
      %v2042 = vld [vmem:[%s400 + $0x340] sm:$0xff]
      %v2043 = vld [vmem:[%s400 + $0x348] sm:$0xff]
      %v2044 = vld [vmem:[%s400 + $0x350] sm:$0xff]
      %v2045 = vld [vmem:[%s400 + $0x358] sm:$0xff]
      %v2046 = vld [vmem:[%s400 + $0x360] sm:$0xff]
      %v2047 = vld [vmem:[%s400 + $0x368] sm:$0xff]
      %v2048 = vld [vmem:[%s400 + $0x370] sm:$0xff]
      %v2049 = vld [vmem:[%s400 + $0x378] sm:$0xff]
      %v2050 = vld [vmem:[%s400 + $0x380] sm:$0xff]
      %v2051 = vld [vmem:[%s400 + $0x388] sm:$0xff]
      %v2052 = vld [vmem:[%s400 + $0x390] sm:$0xff]
      %v2053 = vld [vmem:[%s400 + $0x398] sm:$0xff]
      %v2054 = vld [vmem:[%s400 + $0x3a0] sm:$0xff]
      %v2055 = vld [vmem:[%s400 + $0x3a8] sm:$0xff]
      %v2056 = vld [vmem:[%s400 + $0x3b0] sm:$0xff]
      %v2057 = vld [vmem:[%s400 + $0x3b8] sm:$0xff]
      %v2058 = vld [vmem:[%s400 + $0x3c0] sm:$0xff]
      %v2059 = vld [vmem:[%s400 + $0x3c8] sm:$0xff]
      %v2060 = vld [vmem:[%s400 + $0x3d0] sm:$0xff]
      %v2061 = vld [vmem:[%s400 + $0x3d8] sm:$0xff]
      %v2062 = vld [vmem:[%s400 + $0x3e0] sm:$0xff]
      %v2063 = vld [vmem:[%s400 + $0x3e8] sm:$0xff]
      %v2064 = vld [vmem:[%s400 + $0x3f0] sm:$0xff]
      %v2065 = vld [vmem:[%s400 + $0x3f8] sm:$0xff]
      %v2066 = vld [vmem:[%s400 + $0x400] sm:$0xff]
      %v2067 = vld [vmem:[%s400 + $0x408] sm:$0xff]
      %v2068 = vld [vmem:[%s400 + $0x410] sm:$0xff]
      %v2069 = vld [vmem:[%s400 + $0x418] sm:$0xff]
      %v2070 = vld [vmem:[%s400 + $0x420] sm:$0xff]
      %v2071 = vld [vmem:[%s400 + $0x428] sm:$0xff]
      %v2072 = vld [vmem:[%s400 + $0x430] sm:$0xff]
      %v2073 = vld [vmem:[%s400 + $0x438] sm:$0xff]
      %v2074 = vld [vmem:[%s400 + $0x440] sm:$0xff]
      %v2075 = vld [vmem:[%s400 + $0x448] sm:$0xff]
      %v2076 = vld [vmem:[%s400 + $0x450] sm:$0xff]
      %v2077 = vld [vmem:[%s400 + $0x458] sm:$0xff]
      %v2078 = vld [vmem:[%s400 + $0x460] sm:$0xff]
      %v2079 = vld [vmem:[%s400 + $0x468] sm:$0xff]
      %v2080 = vld [vmem:[%s400 + $0x470] sm:$0xff]
      %v2081 = vld [vmem:[%s400 + $0x478] sm:$0xff]
      %v2082 = vld [vmem:[%s400 + $0x480] sm:$0xff]
      %v2083 = vld [vmem:[%s400 + $0x488] sm:$0xff]
      %v2084 = vld [vmem:[%s400 + $0x490] sm:$0xff]
      %v2085 = vld [vmem:[%s400 + $0x498] sm:$0xff]
      %v2086 = vld [vmem:[%s400 + $0x4a0] sm:$0xff]
      %v2087 = vld [vmem:[%s400 + $0x4a8] sm:$0xff]
      %v2088 = vld [vmem:[%s400 + $0x4b0] sm:$0xff]
      %v2089 = vld [vmem:[%s400 + $0x4b8] sm:$0xff]
      %v2090 = vld [vmem:[%s400 + $0x4c0] sm:$0xff]
      %v2091 = vld [vmem:[%s400 + $0x4c8] sm:$0xff]
      %v2092 = vld [vmem:[%s400 + $0x4d0] sm:$0xff]
      %v2093 = vld [vmem:[%s400 + $0x4d8] sm:$0xff]
      %v2094 = vld [vmem:[%s400 + $0x4e0] sm:$0xff]
      %v2095 = vld [vmem:[%s400 + $0x4e8] sm:$0xff]
      %v2096 = vld [vmem:[%s400 + $0x4f0] sm:$0xff]
      %v2097 = vld [vmem:[%s400 + $0x4f8] sm:$0xff]
      %v2098 = vld [vmem:[%s400 + $0x500] sm:$0xff]
      %v2099 = vld [vmem:[%s400 + $0x508] sm:$0xff]
      %v2100 = vld [vmem:[%s400 + $0x510] sm:$0xff]
      %v2101 = vld [vmem:[%s400 + $0x518] sm:$0xff]
      %v2102 = vld [vmem:[%s400 + $0x520] sm:$0xff]
      %v2103 = vld [vmem:[%s400 + $0x528] sm:$0xff]
      %v2104 = vld [vmem:[%s400 + $0x530] sm:$0xff]
      %v2105 = vld [vmem:[%s400 + $0x538] sm:$0xff]
      %v2106 = vld [vmem:[%s400 + $0x540] sm:$0xff]
      %v2107 = vld [vmem:[%s400 + $0x548] sm:$0xff]
      %v2108 = vld [vmem:[%s400 + $0x550] sm:$0xff]
      %v2109 = vld [vmem:[%s400 + $0x558] sm:$0xff]
      %v2110 = vld [vmem:[%s400 + $0x560] sm:$0xff]
      %v2111 = vld [vmem:[%s400 + $0x568] sm:$0xff]
      %v2112 = vld [vmem:[%s400 + $0x570] sm:$0xff]
      %v2113 = vld [vmem:[%s400 + $0x578] sm:$0xff]
      %v2114 = vld [vmem:[%s400 + $0x580] sm:$0xff]
      %v2115 = vld [vmem:[%s400 + $0x588] sm:$0xff]
      %v2116 = vld [vmem:[%s400 + $0x590] sm:$0xff]
      %v2117 = vld [vmem:[%s400 + $0x598] sm:$0xff]
      %v2118 = vld [vmem:[%s400 + $0x5a0] sm:$0xff]
      %v2119 = vld [vmem:[%s400 + $0x5a8] sm:$0xff]
      %v2120 = vld [vmem:[%s400 + $0x5b0] sm:$0xff]
      %v2121 = vld [vmem:[%s400 + $0x5b8] sm:$0xff]
      %v2122 = vld [vmem:[%s400 + $0x5c0] sm:$0xff]
      %v2123 = vld [vmem:[%s400 + $0x5c8] sm:$0xff]
      %v2124 = vld [vmem:[%s400 + $0x5d0] sm:$0xff]
      %v2125 = vld [vmem:[%s400 + $0x5d8] sm:$0xff]
      %v2126 = vld [vmem:[%s400 + $0x5e0] sm:$0xff]
      %v2127 = vld [vmem:[%s400 + $0x5e8] sm:$0xff]
      %v2128 = vld [vmem:[%s400 + $0x5f0] sm:$0xff]
      %v2129 = vld [vmem:[%s400 + $0x5f8] sm:$0xff]
      %v2130 = vld [vmem:[%s400 + $0x600] sm:$0xff]
      %v2131 = vld [vmem:[%s400 + $0x608] sm:$0xff]
      %v2132 = vld [vmem:[%s400 + $0x610] sm:$0xff]
      %v2133 = vld [vmem:[%s400 + $0x618] sm:$0xff]
      %v2134 = vld [vmem:[%s400 + $0x620] sm:$0xff]
      %v2135 = vld [vmem:[%s400 + $0x628] sm:$0xff]
      %v2136 = vld [vmem:[%s400 + $0x630] sm:$0xff]
      %v2137 = vld [vmem:[%s400 + $0x638] sm:$0xff]
      %v2138 = vld [vmem:[%s400 + $0x640] sm:$0xff]
      %v2139 = vld [vmem:[%s400 + $0x648] sm:$0xff]
      %v2140 = vld [vmem:[%s400 + $0x650] sm:$0xff]
      %v2141 = vld [vmem:[%s400 + $0x658] sm:$0xff]
      %v2142 = vld [vmem:[%s400 + $0x660] sm:$0xff]
      %v2143 = vld [vmem:[%s400 + $0x668] sm:$0xff]
      %v2144 = vld [vmem:[%s400 + $0x670] sm:$0xff]
      %v2145 = vld [vmem:[%s400 + $0x678] sm:$0xff]
      %v2146 = vld [vmem:[%s400 + $0x680] sm:$0xff]
      %v2147 = vld [vmem:[%s400 + $0x688] sm:$0xff]
      %v2148 = vld [vmem:[%s400 + $0x690] sm:$0xff]
      %v2149 = vld [vmem:[%s400 + $0x698] sm:$0xff]
      %v2150 = vld [vmem:[%s400 + $0x6a0] sm:$0xff]
      %v2151 = vld [vmem:[%s400 + $0x6a8] sm:$0xff]
      %v2152 = vld [vmem:[%s400 + $0x6b0] sm:$0xff]
      %v2153 = vld [vmem:[%s400 + $0x6b8] sm:$0xff]
      %v2154 = vld [vmem:[%s400 + $0x6c0] sm:$0xff]
      %v2155 = vld [vmem:[%s400 + $0x6c8] sm:$0xff]
      %v2156 = vld [vmem:[%s400 + $0x6d0] sm:$0xff]
      %v2157 = vld [vmem:[%s400 + $0x6d8] sm:$0xff]
      %v2158 = vld [vmem:[%s400 + $0x6e0] sm:$0xff]
      %v2159 = vld [vmem:[%s400 + $0x6e8] sm:$0xff]
      %v2160 = vld [vmem:[%s400 + $0x6f0] sm:$0xff]
      %v2161 = vld [vmem:[%s400 + $0x6f8] sm:$0xff]
      %v2162 = vld [vmem:[%s400 + $0x700] sm:$0xff]
      %v2163 = vld [vmem:[%s400 + $0x708] sm:$0xff]
      %v2164 = vld [vmem:[%s400 + $0x710] sm:$0xff]
      %v2165 = vld [vmem:[%s400 + $0x718] sm:$0xff]
      %v2166 = vld [vmem:[%s400 + $0x720] sm:$0xff]
      %v2167 = vld [vmem:[%s400 + $0x728] sm:$0xff]
      %v2168 = vld [vmem:[%s400 + $0x730] sm:$0xff]
      %v2169 = vld [vmem:[%s400 + $0x738] sm:$0xff]
      %v2170 = vld [vmem:[%s400 + $0x740] sm:$0xff]
      %v2171 = vld [vmem:[%s400 + $0x748] sm:$0xff]
      %v2172 = vld [vmem:[%s400 + $0x750] sm:$0xff]
      %v2173 = vld [vmem:[%s400 + $0x758] sm:$0xff]
      %v2174 = vld [vmem:[%s400 + $0x760] sm:$0xff]
      %v2175 = vld [vmem:[%s400 + $0x768] sm:$0xff]
      %v2176 = vld [vmem:[%s400 + $0x770] sm:$0xff]
      %v2177 = vld [vmem:[%s400 + $0x778] sm:$0xff]
      %v2178 = vld [vmem:[%s400 + $0x780] sm:$0xff]
      %v2179 = vld [vmem:[%s400 + $0x788] sm:$0xff]
      %v2180 = vld [vmem:[%s400 + $0x790] sm:$0xff]
      %v2181 = vld [vmem:[%s400 + $0x798] sm:$0xff]
      %v2182 = vld [vmem:[%s400 + $0x7a0] sm:$0xff]
      %v2183 = vld [vmem:[%s400 + $0x7a8] sm:$0xff]
      %v2184 = vld [vmem:[%s400 + $0x7b0] sm:$0xff]
      %v2185 = vld [vmem:[%s400 + $0x7b8] sm:$0xff]
      %v2186 = vld [vmem:[%s400 + $0x7c0] sm:$0xff]
      %v2187 = vld [vmem:[%s400 + $0x7c8] sm:$0xff]
      %v2188 = vld [vmem:[%s400 + $0x7d0] sm:$0xff]
      %v2189 = vld [vmem:[%s400 + $0x7d8] sm:$0xff]
      %v2190 = vld [vmem:[%s400 + $0x7e0] sm:$0xff]
      %v2191 = vld [vmem:[%s400 + $0x7e8] sm:$0xff]
      %v2192 = vld [vmem:[%s400 + $0x7f0] sm:$0xff]
      %v2193 = vld [vmem:[%s400 + $0x7f8] sm:$0xff]
      %v2194 = vld [vmem:[%s400 + $0x800] sm:$0xff]
      %v2195 = vld [vmem:[%s400 + $0x808] sm:$0xff]
      %v2196 = vld [vmem:[%s400 + $0x810] sm:$0xff]
      %v2197 = vld [vmem:[%s400 + $0x818] sm:$0xff]
      %v2198 = vld [vmem:[%s400 + $0x820] sm:$0xff]
      %v2199 = vld [vmem:[%s400 + $0x828] sm:$0xff]
      %v2200 = vld [vmem:[%s400 + $0x830] sm:$0xff]
      %v2201 = vld [vmem:[%s400 + $0x838] sm:$0xff]
      %v2202 = vld [vmem:[%s400 + $0x840] sm:$0xff]
      %v2203 = vld [vmem:[%s400 + $0x848] sm:$0xff]
      %v2204 = vld [vmem:[%s400 + $0x850] sm:$0xff]
      %v2205 = vld [vmem:[%s400 + $0x858] sm:$0xff]
      %v2206 = vld [vmem:[%s400 + $0x860] sm:$0xff]
      %v2207 = vld [vmem:[%s400 + $0x868] sm:$0xff]
      %v2208 = vld [vmem:[%s400 + $0x870] sm:$0xff]
      %v2209 = vld [vmem:[%s400 + $0x878] sm:$0xff]
      %v2210 = vld [vmem:[%s400 + $0x880] sm:$0xff]
      %v2211 = vld [vmem:[%s400 + $0x888] sm:$0xff]
      %v2212 = vld [vmem:[%s400 + $0x890] sm:$0xff]
      %v2213 = vld [vmem:[%s400 + $0x898] sm:$0xff]
      %v2214 = vld [vmem:[%s400 + $0x8a0] sm:$0xff]
      %v2215 = vld [vmem:[%s400 + $0x8a8] sm:$0xff]
      %v2216 = vld [vmem:[%s400 + $0x8b0] sm:$0xff]
      %v2217 = vld [vmem:[%s400 + $0x8b8] sm:$0xff]
      %v2218 = vld [vmem:[%s400 + $0x8c0] sm:$0xff]
      %v2219 = vld [vmem:[%s400 + $0x8c8] sm:$0xff]
      %v2220 = vld [vmem:[%s400 + $0x8d0] sm:$0xff]
      %v2221 = vld [vmem:[%s400 + $0x8d8] sm:$0xff]
      %v2222 = vld [vmem:[%s400 + $0x8e0] sm:$0xff]
      %v2223 = vld [vmem:[%s400 + $0x8e8] sm:$0xff]
      %v2224 = vld [vmem:[%s400 + $0x8f0] sm:$0xff]
      %v2225 = vld [vmem:[%s400 + $0x8f8] sm:$0xff]
      %v2226 = vld [vmem:[%s400 + $0x900] sm:$0xff]
      %v2227 = vld [vmem:[%s400 + $0x908] sm:$0xff]
      %v2228 = vld [vmem:[%s400 + $0x910] sm:$0xff]
      %v2229 = vld [vmem:[%s400 + $0x918] sm:$0xff]
      %v2230 = vld [vmem:[%s400 + $0x920] sm:$0xff]
      %v2231 = vld [vmem:[%s400 + $0x928] sm:$0xff]
      %v2232 = vld [vmem:[%s400 + $0x930] sm:$0xff]
      %v2233 = vld [vmem:[%s400 + $0x938] sm:$0xff]
      %v2234 = vld [vmem:[%s400 + $0x940] sm:$0xff]
      %v2235 = vld [vmem:[%s400 + $0x948] sm:$0xff]
      %v2236 = vld [vmem:[%s400 + $0x950] sm:$0xff]
      %v2237 = vld [vmem:[%s400 + $0x958] sm:$0xff]
      %v2238 = vld [vmem:[%s400 + $0x960] sm:$0xff]
      %v2239 = vld [vmem:[%s400 + $0x968] sm:$0xff]
      %v2240 = vld [vmem:[%s400 + $0x970] sm:$0xff]
      %v2241 = vld [vmem:[%s400 + $0x978] sm:$0xff]
      %v2242 = vld [vmem:[%s400 + $0x980] sm:$0xff]
      %v2243 = vld [vmem:[%s400 + $0x988] sm:$0xff]
      %v2244 = vld [vmem:[%s400 + $0x990] sm:$0xff]
      %v2245 = vld [vmem:[%s400 + $0x998] sm:$0xff]
      %v2246 = vld [vmem:[%s400 + $0x9a0] sm:$0xff]
      %v2247 = vld [vmem:[%s400 + $0x9a8] sm:$0xff]
      %v2248 = vld [vmem:[%s400 + $0x9b0] sm:$0xff]
      %v2249 = vld [vmem:[%s400 + $0x9b8] sm:$0xff]
      %v2250 = vld [vmem:[%s400 + $0x9c0] sm:$0xff]
      %v2251 = vld [vmem:[%s400 + $0x9c8] sm:$0xff]
      %v2252 = vld [vmem:[%s400 + $0x9d0] sm:$0xff]
      %v2253 = vld [vmem:[%s400 + $0x9d8] sm:$0xff]
      %v2254 = vld [vmem:[%s400 + $0x9e0] sm:$0xff]
      %v2255 = vld [vmem:[%s400 + $0x9e8] sm:$0xff]
      %v2256 = vld [vmem:[%s400 + $0x9f0] sm:$0xff]
      %v2257 = vld [vmem:[%s400 + $0x9f8] sm:$0xff]
      %v2258 = vld [vmem:[%s400 + $0xa00] sm:$0xff]
      %v2259 = vld [vmem:[%s400 + $0xa08] sm:$0xff]
      %v2260 = vld [vmem:[%s400 + $0xa10] sm:$0xff]
      %v2261 = vld [vmem:[%s400 + $0xa18] sm:$0xff]
      %v2262 = vld [vmem:[%s400 + $0xa20] sm:$0xff]
      %v2263 = vld [vmem:[%s400 + $0xa28] sm:$0xff]
      %v2264 = vld [vmem:[%s400 + $0xa30] sm:$0xff]
      %v2265 = vld [vmem:[%s400 + $0xa38] sm:$0xff]
      %v2266 = vld [vmem:[%s400 + $0xa40] sm:$0xff]
      %v2267 = vld [vmem:[%s400 + $0xa48] sm:$0xff]
      %v2268 = vld [vmem:[%s400 + $0xa50] sm:$0xff]
      %v2269 = vld [vmem:[%s400 + $0xa58] sm:$0xff]
      %v2270 = vld [vmem:[%s400 + $0xa60] sm:$0xff]
      %v2271 = vld [vmem:[%s400 + $0xa68] sm:$0xff]
      %v2272 = vld [vmem:[%s400 + $0xa70] sm:$0xff]
      %v2273 = vld [vmem:[%s400 + $0xa78] sm:$0xff]
      %v2274 = vld [vmem:[%s400 + $0xa80] sm:$0xff]
      %v2275 = vld [vmem:[%s400 + $0xa88] sm:$0xff]
      %v2276 = vld [vmem:[%s400 + $0xa90] sm:$0xff]
      %v2277 = vld [vmem:[%s400 + $0xa98] sm:$0xff]
      %v2278 = vld [vmem:[%s400 + $0xaa0] sm:$0xff]
      %v2279 = vld [vmem:[%s400 + $0xaa8] sm:$0xff]
      %v2280 = vld [vmem:[%s400 + $0xab0] sm:$0xff]
      %v2281 = vld [vmem:[%s400 + $0xab8] sm:$0xff]
      %v2282 = vld [vmem:[%s400 + $0xac0] sm:$0xff]
      %v2283 = vld [vmem:[%s400 + $0xac8] sm:$0xff]
      %v2284 = vld [vmem:[%s400 + $0xad0] sm:$0xff]
      %v2285 = vld [vmem:[%s400 + $0xad8] sm:$0xff]
      %v2286 = vld [vmem:[%s400 + $0xae0] sm:$0xff]
      %v2287 = vld [vmem:[%s400 + $0xae8] sm:$0xff]
      %v2288 = vld [vmem:[%s400 + $0xaf0] sm:$0xff]
      %v2289 = vld [vmem:[%s400 + $0xaf8] sm:$0xff]
      %v2290 = vld [vmem:[%s400 + $0xb00] sm:$0xff]
      %v2291 = vld [vmem:[%s400 + $0xb08] sm:$0xff]
      %v2292 = vld [vmem:[%s400 + $0xb10] sm:$0xff]
      %v2293 = vld [vmem:[%s400 + $0xb18] sm:$0xff]
      %v2294 = vld [vmem:[%s400 + $0xb20] sm:$0xff]
      %v2295 = vld [vmem:[%s400 + $0xb28] sm:$0xff]
      %v2296 = vld [vmem:[%s400 + $0xb30] sm:$0xff]
      %v2297 = vld [vmem:[%s400 + $0xb38] sm:$0xff]
      %v2298 = vld [vmem:[%s400 + $0xb40] sm:$0xff]
      %v2299 = vld [vmem:[%s400 + $0xb48] sm:$0xff]
      %v2300 = vld [vmem:[%s400 + $0xb50] sm:$0xff]
      %v2301 = vld [vmem:[%s400 + $0xb58] sm:$0xff]
      %v2302 = vld [vmem:[%s400 + $0xb60] sm:$0xff]
      %v2303 = vld [vmem:[%s400 + $0xb68] sm:$0xff]
      %v2304 = vld [vmem:[%s400 + $0xb70] sm:$0xff]
      %v2305 = vld [vmem:[%s400 + $0xb78] sm:$0xff]
      %v2306 = vld [vmem:[%s400 + $0xb80] sm:$0xff]
      %v2307 = vld [vmem:[%s400 + $0xb88] sm:$0xff]
      %v2308 = vld [vmem:[%s400 + $0xb90] sm:$0xff]
      %v2309 = vld [vmem:[%s400 + $0xb98] sm:$0xff]
      %v2310 = vld [vmem:[%s400 + $0xba0] sm:$0xff]
      %v2311 = vld [vmem:[%s400 + $0xba8] sm:$0xff]
      %v2312 = vld [vmem:[%s400 + $0xbb0] sm:$0xff]
      %v2313 = vld [vmem:[%s400 + $0xbb8] sm:$0xff]
      %v2314 = vld [vmem:[%s400 + $0xbc0] sm:$0xff]
      %v2315 = vld [vmem:[%s400 + $0xbc8] sm:$0xff]
      %v2316 = vld [vmem:[%s400 + $0xbd0] sm:$0xff]
      %v2317 = vld [vmem:[%s400 + $0xbd8] sm:$0xff]
      %v2318 = vld [vmem:[%s400 + $0xbe0] sm:$0xff]
      %v2319 = vld [vmem:[%s400 + $0xbe8] sm:$0xff]
      %v2320 = vld [vmem:[%s400 + $0xbf0] sm:$0xff]
      %v2321 = vld [vmem:[%s400 + $0xbf8] sm:$0xff]
      %v2322 = vld [vmem:[%s400 + $0xc00] sm:$0xff]
      %v2323 = vld [vmem:[%s400 + $0xc08] sm:$0xff]
      %v2324 = vld [vmem:[%s400 + $0xc10] sm:$0xff]
      %v2325 = vld [vmem:[%s400 + $0xc18] sm:$0xff]
      %v2326 = vld [vmem:[%s400 + $0xc20] sm:$0xff]
      %v2327 = vld [vmem:[%s400 + $0xc28] sm:$0xff]
      %v2328 = vld [vmem:[%s400 + $0xc30] sm:$0xff]
      %v2329 = vld [vmem:[%s400 + $0xc38] sm:$0xff]
      %v2330 = vld [vmem:[%s400 + $0xc40] sm:$0xff]
      %v2331 = vld [vmem:[%s400 + $0xc48] sm:$0xff]
      %v2332 = vld [vmem:[%s400 + $0xc50] sm:$0xff]
      %v2333 = vld [vmem:[%s400 + $0xc58] sm:$0xff]
      %v2334 = vld [vmem:[%s400 + $0xc60] sm:$0xff]
      %v2335 = vld [vmem:[%s400 + $0xc68] sm:$0xff]
      %v2336 = vld [vmem:[%s400 + $0xc70] sm:$0xff]
      %v2337 = vld [vmem:[%s400 + $0xc78] sm:$0xff]
      %v2338 = vld [vmem:[%s400 + $0xc80] sm:$0xff]
      %v2339 = vld [vmem:[%s400 + $0xc88] sm:$0xff]
      %v2340 = vld [vmem:[%s400 + $0xc90] sm:$0xff]
      %v2341 = vld [vmem:[%s400 + $0xc98] sm:$0xff]
      %v2342 = vld [vmem:[%s400 + $0xca0] sm:$0xff]
      %v2343 = vld [vmem:[%s400 + $0xca8] sm:$0xff]
      %v2344 = vld [vmem:[%s400 + $0xcb0] sm:$0xff]
      %v2345 = vld [vmem:[%s400 + $0xcb8] sm:$0xff]
      %v2346 = vld [vmem:[%s400 + $0xcc0] sm:$0xff]
      %v2347 = vld [vmem:[%s400 + $0xcc8] sm:$0xff]
      %v2348 = vld [vmem:[%s400 + $0xcd0] sm:$0xff]
      %v2349 = vld [vmem:[%s400 + $0xcd8] sm:$0xff]
      %v2350 = vld [vmem:[%s400 + $0xce0] sm:$0xff]
      %v2351 = vld [vmem:[%s400 + $0xce8] sm:$0xff]
      %v2352 = vld [vmem:[%s400 + $0xcf0] sm:$0xff]
      %v2353 = vld [vmem:[%s400 + $0xcf8] sm:$0xff]
      %v2354 = vld [vmem:[%s400 + $0xd00] sm:$0xff]
      %v2355 = vld [vmem:[%s400 + $0xd08] sm:$0xff]
      %v2356 = vld [vmem:[%s400 + $0xd10] sm:$0xff]
      %v2357 = vld [vmem:[%s400 + $0xd18] sm:$0xff]
      %v2358 = vld [vmem:[%s400 + $0xd20] sm:$0xff]
      %v2359 = vld [vmem:[%s400 + $0xd28] sm:$0xff]
      %v2360 = vld [vmem:[%s400 + $0xd30] sm:$0xff]
      %v2361 = vld [vmem:[%s400 + $0xd38] sm:$0xff]
      %v2362 = vld [vmem:[%s400 + $0xd40] sm:$0xff]
      %v2363 = vld [vmem:[%s400 + $0xd48] sm:$0xff]
      %v2364 = vld [vmem:[%s400 + $0xd50] sm:$0xff]
      %v2365 = vld [vmem:[%s400 + $0xd58] sm:$0xff]
      %v2366 = vld [vmem:[%s400 + $0xd60] sm:$0xff]
      %v2367 = vld [vmem:[%s400 + $0xd68] sm:$0xff]
      %v2368 = vld [vmem:[%s400 + $0xd70] sm:$0xff]
      %v2369 = vld [vmem:[%s400 + $0xd78] sm:$0xff]
      %v2370 = vld [vmem:[%s400 + $0xd80] sm:$0xff]
      %v2371 = vld [vmem:[%s400 + $0xd88] sm:$0xff]
      %v2372 = vld [vmem:[%s400 + $0xd90] sm:$0xff]
      %v2373 = vld [vmem:[%s400 + $0xd98] sm:$0xff]
      %v2374 = vld [vmem:[%s400 + $0xda0] sm:$0xff]
      %v2375 = vld [vmem:[%s400 + $0xda8] sm:$0xff]
      %v2376 = vld [vmem:[%s400 + $0xdb0] sm:$0xff]
      %v2377 = vld [vmem:[%s400 + $0xdb8] sm:$0xff]
      %v2378 = vld [vmem:[%s400 + $0xdc0] sm:$0xff]
      %v2379 = vld [vmem:[%s400 + $0xdc8] sm:$0xff]
      %v2380 = vld [vmem:[%s400 + $0xdd0] sm:$0xff]
      %v2381 = vld [vmem:[%s400 + $0xdd8] sm:$0xff]
      %v2382 = vld [vmem:[%s400 + $0xde0] sm:$0xff]
      %v2383 = vld [vmem:[%s400 + $0xde8] sm:$0xff]
      %v2384 = vld [vmem:[%s400 + $0xdf0] sm:$0xff]
      %v2385 = vld [vmem:[%s400 + $0xdf8] sm:$0xff]
      %v2386 = vmul.f32 %v1938, %v1748
      %v2387 = vmul.f32 %v1939, %v1748
      %v2388 = vmul.f32 %v1940, %v1748
      %v2389 = vmul.f32 %v1941, %v1748
      %v2390 = vmul.f32 %v1942, %v1748
      %v2391 = vmul.f32 %v1943, %v1748
      %v2392 = vmul.f32 %v1944, %v1748
      %v2393 = vmul.f32 %v1945, %v1751
      %v2394 = vmul.f32 %v1946, %v1751
      %v2395 = vmul.f32 %v1947, %v1751
      %v2396 = vmul.f32 %v1948, %v1751
      %v2397 = vmul.f32 %v1949, %v1751
      %v2398 = vmul.f32 %v1950, %v1751
      %v2399 = vmul.f32 %v1951, %v1751
      %v2400 = vmul.f32 %v1952, %v1754
      %v2401 = vmul.f32 %v1953, %v1754
      %v2402 = vmul.f32 %v1954, %v1754
      %v2403 = vmul.f32 %v1955, %v1754
      %v2404 = vmul.f32 %v1956, %v1754
      %v2405 = vmul.f32 %v1957, %v1754
      %v2406 = vmul.f32 %v1958, %v1754
      %v2407 = vmul.f32 %v1959, %v1757
      %v2408 = vmul.f32 %v1960, %v1757
      %v2409 = vmul.f32 %v1961, %v1757
      %v2410 = vmul.f32 %v1962, %v1757
      %v2411 = vmul.f32 %v1963, %v1757
      %v2412 = vmul.f32 %v1964, %v1757
      %v2413 = vmul.f32 %v1965, %v1757
      %v2414 = vmul.f32 %v1966, %v1760
      %v2415 = vmul.f32 %v1967, %v1760
      %v2416 = vmul.f32 %v1968, %v1760
      %v2417 = vmul.f32 %v1969, %v1760
      %v2418 = vmul.f32 %v1970, %v1760
      %v2419 = vmul.f32 %v1971, %v1760
      %v2420 = vmul.f32 %v1972, %v1760
      %v2421 = vmul.f32 %v1973, %v1763
      %v2422 = vmul.f32 %v1974, %v1763
      %v2423 = vmul.f32 %v1975, %v1763
      %v2424 = vmul.f32 %v1976, %v1763
      %v2425 = vmul.f32 %v1977, %v1763
      %v2426 = vmul.f32 %v1978, %v1763
      %v2427 = vmul.f32 %v1979, %v1763
      %v2428 = vmul.f32 %v1980, %v1766
      %v2429 = vmul.f32 %v1981, %v1766
      %v2430 = vmul.f32 %v1982, %v1766
      %v2431 = vmul.f32 %v1983, %v1766
      %v2432 = vmul.f32 %v1984, %v1766
      %v2433 = vmul.f32 %v1985, %v1766
      %v2434 = vmul.f32 %v1986, %v1766
      %v2435 = vmul.f32 %v1987, %v1769
      %v2436 = vmul.f32 %v1988, %v1769
      %v2437 = vmul.f32 %v1989, %v1769
      %v2438 = vmul.f32 %v1990, %v1769
      %v2439 = vmul.f32 %v1991, %v1769
      %v2440 = vmul.f32 %v1992, %v1769
      %v2441 = vmul.f32 %v1993, %v1769
      %v2442 = vmul.f32 %v1994, %v1772
      %v2443 = vmul.f32 %v1995, %v1772
      %v2444 = vmul.f32 %v1996, %v1772
      %v2445 = vmul.f32 %v1997, %v1772
      %v2446 = vmul.f32 %v1998, %v1772
      %v2447 = vmul.f32 %v1999, %v1772
      %v2448 = vmul.f32 %v2000, %v1772
      %v2449 = vmul.f32 %v2001, %v1775
      %v2450 = vmul.f32 %v2002, %v1775
      %v2451 = vmul.f32 %v2003, %v1775
      %v2452 = vmul.f32 %v2004, %v1775
      %v2453 = vmul.f32 %v2005, %v1775
      %v2454 = vmul.f32 %v2006, %v1775
      %v2455 = vmul.f32 %v2007, %v1775
      %v2456 = vmul.f32 %v2008, %v1778
      %v2457 = vmul.f32 %v2009, %v1778
      %v2458 = vmul.f32 %v2010, %v1778
      %v2459 = vmul.f32 %v2011, %v1778
      %v2460 = vmul.f32 %v2012, %v1778
      %v2461 = vmul.f32 %v2013, %v1778
      %v2462 = vmul.f32 %v2014, %v1778
      %v2463 = vmul.f32 %v2015, %v1781
      %v2464 = vmul.f32 %v2016, %v1781
      %v2465 = vmul.f32 %v2017, %v1781
      %v2466 = vmul.f32 %v2018, %v1781
      %v2467 = vmul.f32 %v2019, %v1781
      %v2468 = vmul.f32 %v2020, %v1781
      %v2469 = vmul.f32 %v2021, %v1781
      %v2470 = vmul.f32 %v2022, %v1784
      %v2471 = vmul.f32 %v2023, %v1784
      %v2472 = vmul.f32 %v2024, %v1784
      %v2473 = vmul.f32 %v2025, %v1784
      %v2474 = vmul.f32 %v2026, %v1784
      %v2475 = vmul.f32 %v2027, %v1784
      %v2476 = vmul.f32 %v2028, %v1784
      %v2477 = vmul.f32 %v2029, %v1787
      %v2478 = vmul.f32 %v2030, %v1787
      %v2479 = vmul.f32 %v2031, %v1787
      %v2480 = vmul.f32 %v2032, %v1787
      %v2481 = vmul.f32 %v2033, %v1787
      %v2482 = vmul.f32 %v2034, %v1787
      %v2483 = vmul.f32 %v2035, %v1787
      %v2484 = vmul.f32 %v2036, %v1790
      %v2485 = vmul.f32 %v2037, %v1790
      %v2486 = vmul.f32 %v2038, %v1790
      %v2487 = vmul.f32 %v2039, %v1790
      %v2488 = vmul.f32 %v2040, %v1790
      %v2489 = vmul.f32 %v2041, %v1790
      %v2490 = vmul.f32 %v2042, %v1790
      %v2491 = vmul.f32 %v2043, %v1793
      %v2492 = vmul.f32 %v2044, %v1793
      %v2493 = vmul.f32 %v2045, %v1793
      %v2494 = vmul.f32 %v2046, %v1793
      %v2495 = vmul.f32 %v2047, %v1793
      %v2496 = vmul.f32 %v2048, %v1793
      %v2497 = vmul.f32 %v2049, %v1793
      %v2498 = vmul.f32 %v2050, %v1796
      %v2499 = vmul.f32 %v2051, %v1796
      %v2500 = vmul.f32 %v2052, %v1796
      %v2501 = vmul.f32 %v2053, %v1796
      %v2502 = vmul.f32 %v2054, %v1796
      %v2503 = vmul.f32 %v2055, %v1796
      %v2504 = vmul.f32 %v2056, %v1796
      %v2505 = vmul.f32 %v2057, %v1799
      %v2506 = vmul.f32 %v2058, %v1799
      %v2507 = vmul.f32 %v2059, %v1799
      %v2508 = vmul.f32 %v2060, %v1799
      %v2509 = vmul.f32 %v2061, %v1799
      %v2510 = vmul.f32 %v2062, %v1799
      %v2511 = vmul.f32 %v2063, %v1799
      %v2512 = vmul.f32 %v2064, %v1802
      %v2513 = vmul.f32 %v2065, %v1802
      %v2514 = vmul.f32 %v2066, %v1802
      %v2515 = vmul.f32 %v2067, %v1802
      %v2516 = vmul.f32 %v2068, %v1802
      %v2517 = vmul.f32 %v2069, %v1802
      %v2518 = vmul.f32 %v2070, %v1802
      %v2519 = vmul.f32 %v2071, %v1805
      %v2520 = vmul.f32 %v2072, %v1805
      %v2521 = vmul.f32 %v2073, %v1805
      %v2522 = vmul.f32 %v2074, %v1805
      %v2523 = vmul.f32 %v2075, %v1805
      %v2524 = vmul.f32 %v2076, %v1805
      %v2525 = vmul.f32 %v2077, %v1805
      %v2526 = vmul.f32 %v2078, %v1808
      %v2527 = vmul.f32 %v2079, %v1808
      %v2528 = vmul.f32 %v2080, %v1808
      %v2529 = vmul.f32 %v2081, %v1808
      %v2530 = vmul.f32 %v2082, %v1808
      %v2531 = vmul.f32 %v2083, %v1808
      %v2532 = vmul.f32 %v2084, %v1808
      %v2533 = vmul.f32 %v2085, %v1811
      %v2534 = vmul.f32 %v2086, %v1811
      %v2535 = vmul.f32 %v2087, %v1811
      %v2536 = vmul.f32 %v2088, %v1811
      %v2537 = vmul.f32 %v2089, %v1811
      %v2538 = vmul.f32 %v2090, %v1811
      %v2539 = vmul.f32 %v2091, %v1811
      %v2540 = vmul.f32 %v2092, %v1814
      %v2541 = vmul.f32 %v2093, %v1814
      %v2542 = vmul.f32 %v2094, %v1814
      %v2543 = vmul.f32 %v2095, %v1814
      %v2544 = vmul.f32 %v2096, %v1814
      %v2545 = vmul.f32 %v2097, %v1814
      %v2546 = vmul.f32 %v2098, %v1814
      %v2547 = vmul.f32 %v2099, %v1817
      %v2548 = vmul.f32 %v2100, %v1817
      %v2549 = vmul.f32 %v2101, %v1817
      %v2550 = vmul.f32 %v2102, %v1817
      %v2551 = vmul.f32 %v2103, %v1817
      %v2552 = vmul.f32 %v2104, %v1817
      %v2553 = vmul.f32 %v2105, %v1817
      %v2554 = vmul.f32 %v2106, %v1820
      %v2555 = vmul.f32 %v2107, %v1820
      %v2556 = vmul.f32 %v2108, %v1820
      %v2557 = vmul.f32 %v2109, %v1820
      %v2558 = vmul.f32 %v2110, %v1820
      %v2559 = vmul.f32 %v2111, %v1820
      %v2560 = vmul.f32 %v2112, %v1820
      %v2561 = vmul.f32 %v2113, %v1823
      %v2562 = vmul.f32 %v2114, %v1823
      %v2563 = vmul.f32 %v2115, %v1823
      %v2564 = vmul.f32 %v2116, %v1823
      %v2565 = vmul.f32 %v2117, %v1823
      %v2566 = vmul.f32 %v2118, %v1823
      %v2567 = vmul.f32 %v2119, %v1823
      %v2568 = vmul.f32 %v2120, %v1826
      %v2569 = vmul.f32 %v2121, %v1826
      %v2570 = vmul.f32 %v2122, %v1826
      %v2571 = vmul.f32 %v2123, %v1826
      %v2572 = vmul.f32 %v2124, %v1826
      %v2573 = vmul.f32 %v2125, %v1826
      %v2574 = vmul.f32 %v2126, %v1826
      %v2575 = vmul.f32 %v2127, %v1829
      %v2576 = vmul.f32 %v2128, %v1829
      %v2577 = vmul.f32 %v2129, %v1829
      %v2578 = vmul.f32 %v2130, %v1829
      %v2579 = vmul.f32 %v2131, %v1829
      %v2580 = vmul.f32 %v2132, %v1829
      %v2581 = vmul.f32 %v2133, %v1829
      %v2582 = vmul.f32 %v2134, %v1832
      %v2583 = vmul.f32 %v2135, %v1832
      %v2584 = vmul.f32 %v2136, %v1832
      %v2585 = vmul.f32 %v2137, %v1832
      %v2586 = vmul.f32 %v2138, %v1832
      %v2587 = vmul.f32 %v2139, %v1832
      %v2588 = vmul.f32 %v2140, %v1832
      %v2589 = vmul.f32 %v2141, %v1835
      %v2590 = vmul.f32 %v2142, %v1835
      %v2591 = vmul.f32 %v2143, %v1835
      %v2592 = vmul.f32 %v2144, %v1835
      %v2593 = vmul.f32 %v2145, %v1835
      %v2594 = vmul.f32 %v2146, %v1835
      %v2595 = vmul.f32 %v2147, %v1835
      %v2596 = vmul.f32 %v2148, %v1838
      %v2597 = vmul.f32 %v2149, %v1838
      %v2598 = vmul.f32 %v2150, %v1838
      %v2599 = vmul.f32 %v2151, %v1838
      %v2600 = vmul.f32 %v2152, %v1838
      %v2601 = vmul.f32 %v2153, %v1838
      %v2602 = vmul.f32 %v2154, %v1838
      %v2603 = vmul.f32 %v2155, %v1841
      %v2604 = vmul.f32 %v2156, %v1841
      %v2605 = vmul.f32 %v2157, %v1841
      %v2606 = vmul.f32 %v2158, %v1841
      %v2607 = vmul.f32 %v2159, %v1841
      %v2608 = vmul.f32 %v2160, %v1841
      %v2609 = vmul.f32 %v2161, %v1841
      %v2610 = vmul.f32 %v2162, %v1844
      %v2611 = vmul.f32 %v2163, %v1844
      %v2612 = vmul.f32 %v2164, %v1844
      %v2613 = vmul.f32 %v2165, %v1844
      %v2614 = vmul.f32 %v2166, %v1844
      %v2615 = vmul.f32 %v2167, %v1844
      %v2616 = vmul.f32 %v2168, %v1844
      %v2617 = vmul.f32 %v2169, %v1847
      %v2618 = vmul.f32 %v2170, %v1847
      %v2619 = vmul.f32 %v2171, %v1847
      %v2620 = vmul.f32 %v2172, %v1847
      %v2621 = vmul.f32 %v2173, %v1847
      %v2622 = vmul.f32 %v2174, %v1847
      %v2623 = vmul.f32 %v2175, %v1847
      %v2624 = vmul.f32 %v2176, %v1850
      %v2625 = vmul.f32 %v2177, %v1850
      %v2626 = vmul.f32 %v2178, %v1850
      %v2627 = vmul.f32 %v2179, %v1850
      %v2628 = vmul.f32 %v2180, %v1850
      %v2629 = vmul.f32 %v2181, %v1850
      %v2630 = vmul.f32 %v2182, %v1850
      %v2631 = vmul.f32 %v2183, %v1853
      %v2632 = vmul.f32 %v2184, %v1853
      %v2633 = vmul.f32 %v2185, %v1853
      %v2634 = vmul.f32 %v2186, %v1853
      %v2635 = vmul.f32 %v2187, %v1853
      %v2636 = vmul.f32 %v2188, %v1853
      %v2637 = vmul.f32 %v2189, %v1853
      %v2638 = vmul.f32 %v2190, %v1856
      %v2639 = vmul.f32 %v2191, %v1856
      %v2640 = vmul.f32 %v2192, %v1856
      %v2641 = vmul.f32 %v2193, %v1856
      %v2642 = vmul.f32 %v2194, %v1856
      %v2643 = vmul.f32 %v2195, %v1856
      %v2644 = vmul.f32 %v2196, %v1856
      %v2645 = vmul.f32 %v2197, %v1859
      %v2646 = vmul.f32 %v2198, %v1859
      %v2647 = vmul.f32 %v2199, %v1859
      %v2648 = vmul.f32 %v2200, %v1859
      %v2649 = vmul.f32 %v2201, %v1859
      %v2650 = vmul.f32 %v2202, %v1859
      %v2651 = vmul.f32 %v2203, %v1859
      %v2652 = vmul.f32 %v2204, %v1862
      %v2653 = vmul.f32 %v2205, %v1862
      %v2654 = vmul.f32 %v2206, %v1862
      %v2655 = vmul.f32 %v2207, %v1862
      %v2656 = vmul.f32 %v2208, %v1862
      %v2657 = vmul.f32 %v2209, %v1862
      %v2658 = vmul.f32 %v2210, %v1862
      %v2659 = vmul.f32 %v2211, %v1865
      %v2660 = vmul.f32 %v2212, %v1865
      %v2661 = vmul.f32 %v2213, %v1865
      %v2662 = vmul.f32 %v2214, %v1865
      %v2663 = vmul.f32 %v2215, %v1865
      %v2664 = vmul.f32 %v2216, %v1865
      %v2665 = vmul.f32 %v2217, %v1865
      %v2666 = vmul.f32 %v2218, %v1868
      %v2667 = vmul.f32 %v2219, %v1868
      %v2668 = vmul.f32 %v2220, %v1868
      %v2669 = vmul.f32 %v2221, %v1868
      %v2670 = vmul.f32 %v2222, %v1868
      %v2671 = vmul.f32 %v2223, %v1868
      %v2672 = vmul.f32 %v2224, %v1868
      %v2673 = vmul.f32 %v2225, %v1871
      %v2674 = vmul.f32 %v2226, %v1871
      %v2675 = vmul.f32 %v2227, %v1871
      %v2676 = vmul.f32 %v2228, %v1871
      %v2677 = vmul.f32 %v2229, %v1871
      %v2678 = vmul.f32 %v2230, %v1871
      %v2679 = vmul.f32 %v2231, %v1871
      %v2680 = vmul.f32 %v2232, %v1874
      %v2681 = vmul.f32 %v2233, %v1874
      %v2682 = vmul.f32 %v2234, %v1874
      %v2683 = vmul.f32 %v2235, %v1874
      %v2684 = vmul.f32 %v2236, %v1874
      %v2685 = vmul.f32 %v2237, %v1874
      %v2686 = vmul.f32 %v2238, %v1874
      %v2687 = vmul.f32 %v2239, %v1877
      %v2688 = vmul.f32 %v2240, %v1877
      %v2689 = vmul.f32 %v2241, %v1877
      %v2690 = vmul.f32 %v2242, %v1877
      %v2691 = vmul.f32 %v2243, %v1877
      %v2692 = vmul.f32 %v2244, %v1877
      %v2693 = vmul.f32 %v2245, %v1877
      %v2694 = vmul.f32 %v2246, %v1880
      %v2695 = vmul.f32 %v2247, %v1880
      %v2696 = vmul.f32 %v2248, %v1880
      %v2697 = vmul.f32 %v2249, %v1880
      %v2698 = vmul.f32 %v2250, %v1880
      %v2699 = vmul.f32 %v2251, %v1880
      %v2700 = vmul.f32 %v2252, %v1880
      %v2701 = vmul.f32 %v2253, %v1883
      %v2702 = vmul.f32 %v2254, %v1883
      %v2703 = vmul.f32 %v2255, %v1883
      %v2704 = vmul.f32 %v2256, %v1883
      %v2705 = vmul.f32 %v2257, %v1883
      %v2706 = vmul.f32 %v2258, %v1883
      %v2707 = vmul.f32 %v2259, %v1883
      %v2708 = vmul.f32 %v2260, %v1886
      %v2709 = vmul.f32 %v2261, %v1886
      %v2710 = vmul.f32 %v2262, %v1886
      %v2711 = vmul.f32 %v2263, %v1886
      %v2712 = vmul.f32 %v2264, %v1886
      %v2713 = vmul.f32 %v2265, %v1886
      %v2714 = vmul.f32 %v2266, %v1886
      %v2715 = vmul.f32 %v2267, %v1889
      %v2716 = vmul.f32 %v2268, %v1889
      %v2717 = vmul.f32 %v2269, %v1889
      %v2718 = vmul.f32 %v2270, %v1889
      %v2719 = vmul.f32 %v2271, %v1889
      %v2720 = vmul.f32 %v2272, %v1889
      %v2721 = vmul.f32 %v2273, %v1889
      %v2722 = vmul.f32 %v2274, %v1892
      %v2723 = vmul.f32 %v2275, %v1892
      %v2724 = vmul.f32 %v2276, %v1892
      %v2725 = vmul.f32 %v2277, %v1892
      %v2726 = vmul.f32 %v2278, %v1892
      %v2727 = vmul.f32 %v2279, %v1892
      %v2728 = vmul.f32 %v2280, %v1892
      %v2729 = vmul.f32 %v2281, %v1895
      %v2730 = vmul.f32 %v2282, %v1895
      %v2731 = vmul.f32 %v2283, %v1895
      %v2732 = vmul.f32 %v2284, %v1895
      %v2733 = vmul.f32 %v2285, %v1895
      %v2734 = vmul.f32 %v2286, %v1895
      %v2735 = vmul.f32 %v2287, %v1895
      %v2736 = vmul.f32 %v2288, %v1898
      %v2737 = vmul.f32 %v2289, %v1898
      %v2738 = vmul.f32 %v2290, %v1898
      %v2739 = vmul.f32 %v2291, %v1898
      %v2740 = vmul.f32 %v2292, %v1898
      %v2741 = vmul.f32 %v2293, %v1898
      %v2742 = vmul.f32 %v2294, %v1898
      %v2743 = vmul.f32 %v2295, %v1901
      %v2744 = vmul.f32 %v2296, %v1901
      %v2745 = vmul.f32 %v2297, %v1901
      %v2746 = vmul.f32 %v2298, %v1901
      %v2747 = vmul.f32 %v2299, %v1901
      %v2748 = vmul.f32 %v2300, %v1901
      %v2749 = vmul.f32 %v2301, %v1901
      %v2750 = vmul.f32 %v2302, %v1904
      %v2751 = vmul.f32 %v2303, %v1904
      %v2752 = vmul.f32 %v2304, %v1904
      %v2753 = vmul.f32 %v2305, %v1904
      %v2754 = vmul.f32 %v2306, %v1904
      %v2755 = vmul.f32 %v2307, %v1904
      %v2756 = vmul.f32 %v2308, %v1904
      %v2757 = vmul.f32 %v2309, %v1907
      %v2758 = vmul.f32 %v2310, %v1907
      %v2759 = vmul.f32 %v2311, %v1907
      %v2760 = vmul.f32 %v2312, %v1907
      %v2761 = vmul.f32 %v2313, %v1907
      %v2762 = vmul.f32 %v2314, %v1907
      %v2763 = vmul.f32 %v2315, %v1907
      %v2764 = vmul.f32 %v2316, %v1910
      %v2765 = vmul.f32 %v2317, %v1910
      %v2766 = vmul.f32 %v2318, %v1910
      %v2767 = vmul.f32 %v2319, %v1910
      %v2768 = vmul.f32 %v2320, %v1910
      %v2769 = vmul.f32 %v2321, %v1910
      %v2770 = vmul.f32 %v2322, %v1910
      %v2771 = vmul.f32 %v2323, %v1913
      %v2772 = vmul.f32 %v2324, %v1913
      %v2773 = vmul.f32 %v2325, %v1913
      %v2774 = vmul.f32 %v2326, %v1913
      %v2775 = vmul.f32 %v2327, %v1913
      %v2776 = vmul.f32 %v2328, %v1913
      %v2777 = vmul.f32 %v2329, %v1913
      %v2778 = vmul.f32 %v2330, %v1916
      %v2779 = vmul.f32 %v2331, %v1916
      %v2780 = vmul.f32 %v2332, %v1916
      %v2781 = vmul.f32 %v2333, %v1916
      %v2782 = vmul.f32 %v2334, %v1916
      %v2783 = vmul.f32 %v2335, %v1916
      %v2784 = vmul.f32 %v2336, %v1916
      %v2785 = vmul.f32 %v2337, %v1919
      %v2786 = vmul.f32 %v2338, %v1919
      %v2787 = vmul.f32 %v2339, %v1919
      %v2788 = vmul.f32 %v2340, %v1919
      %v2789 = vmul.f32 %v2341, %v1919
      %v2790 = vmul.f32 %v2342, %v1919
      %v2791 = vmul.f32 %v2343, %v1919
      %v2792 = vmul.f32 %v2344, %v1922
      %v2793 = vmul.f32 %v2345, %v1922
      %v2794 = vmul.f32 %v2346, %v1922
      %v2795 = vmul.f32 %v2347, %v1922
      %v2796 = vmul.f32 %v2348, %v1922
      %v2797 = vmul.f32 %v2349, %v1922
      %v2798 = vmul.f32 %v2350, %v1922
      %v2799 = vmul.f32 %v2351, %v1925
      %v2800 = vmul.f32 %v2352, %v1925
      %v2801 = vmul.f32 %v2353, %v1925
      %v2802 = vmul.f32 %v2354, %v1925
      %v2803 = vmul.f32 %v2355, %v1925
      %v2804 = vmul.f32 %v2356, %v1925
      %v2805 = vmul.f32 %v2357, %v1925
      %v2806 = vmul.f32 %v2358, %v1928
      %v2807 = vmul.f32 %v2359, %v1928
      %v2808 = vmul.f32 %v2360, %v1928
      %v2809 = vmul.f32 %v2361, %v1928
      %v2810 = vmul.f32 %v2362, %v1928
      %v2811 = vmul.f32 %v2363, %v1928
      %v2812 = vmul.f32 %v2364, %v1928
      %v2813 = vmul.f32 %v2365, %v1931
      %v2814 = vmul.f32 %v2366, %v1931
      %v2815 = vmul.f32 %v2367, %v1931
      %v2816 = vmul.f32 %v2368, %v1931
      %v2817 = vmul.f32 %v2369, %v1931
      %v2818 = vmul.f32 %v2370, %v1931
      %v2819 = vmul.f32 %v2371, %v1931
      %v2820 = vmul.f32 %v2372, %v1934
      %v2821 = vmul.f32 %v2373, %v1934
      %v2822 = vmul.f32 %v2374, %v1934
      %v2823 = vmul.f32 %v2375, %v1934
      %v2824 = vmul.f32 %v2376, %v1934
      %v2825 = vmul.f32 %v2377, %v1934
      %v2826 = vmul.f32 %v2378, %v1934
      %v2827 = vmul.f32 %v2379, %v1937
      %v2828 = vmul.f32 %v2380, %v1937
      %v2829 = vmul.f32 %v2381, %v1937
      %v2830 = vmul.f32 %v2382, %v1937
      %v2831 = vmul.f32 %v2383, %v1937
      %v2832 = vmul.f32 %v2384, %v1937
      %v2833 = vmul.f32 %v2385, %v1937
      %2834 = vst [vmem:[%s431] sm:$0xff] %v2386
      %2835 = vst [vmem:[%s431 + $0x8] sm:$0xff] %v2387
      %2836 = vst [vmem:[%s431 + $0x10] sm:$0xff] %v2388
      %2837 = vst [vmem:[%s431 + $0x18] sm:$0xff] %v2389
      %2838 = vst [vmem:[%s431 + $0x20] sm:$0xff] %v2390
      %2839 = vst [vmem:[%s431 + $0x28] sm:$0xff] %v2391
      %2840 = vst.msk [vmem:[%s431 + $0x30] sm:$0xff] %vm1556, %v2392
      %2841 = vst [vmem:[%s431 + $0x38] sm:$0xff] %v2393
      %2842 = vst [vmem:[%s431 + $0x40] sm:$0xff] %v2394
      %2843 = vst [vmem:[%s431 + $0x48] sm:$0xff] %v2395
      %2844 = vst [vmem:[%s431 + $0x50] sm:$0xff] %v2396
      %2845 = vst [vmem:[%s431 + $0x58] sm:$0xff] %v2397
      %2846 = vst [vmem:[%s431 + $0x60] sm:$0xff] %v2398
      %2847 = vst.msk [vmem:[%s431 + $0x68] sm:$0xff] %vm1556, %v2399
      %2848 = vst [vmem:[%s431 + $0x70] sm:$0xff] %v2400
      %2849 = vst [vmem:[%s431 + $0x78] sm:$0xff] %v2401
      %2850 = vst [vmem:[%s431 + $0x80] sm:$0xff] %v2402
      %2851 = vst [vmem:[%s431 + $0x88] sm:$0xff] %v2403
      %2852 = vst [vmem:[%s431 + $0x90] sm:$0xff] %v2404
      %2853 = vst [vmem:[%s431 + $0x98] sm:$0xff] %v2405
      %2854 = vst.msk [vmem:[%s431 + $0xa0] sm:$0xff] %vm1556, %v2406
      %2855 = vst [vmem:[%s431 + $0xa8] sm:$0xff] %v2407
      %2856 = vst [vmem:[%s431 + $0xb0] sm:$0xff] %v2408
      %2857 = vst [vmem:[%s431 + $0xb8] sm:$0xff] %v2409
      %2858 = vst [vmem:[%s431 + $0xc0] sm:$0xff] %v2410
      %2859 = vst [vmem:[%s431 + $0xc8] sm:$0xff] %v2411
      %2860 = vst [vmem:[%s431 + $0xd0] sm:$0xff] %v2412
      %2861 = vst.msk [vmem:[%s431 + $0xd8] sm:$0xff] %vm1556, %v2413
      %2862 = vst [vmem:[%s431 + $0xe0] sm:$0xff] %v2414
      %2863 = vst [vmem:[%s431 + $0xe8] sm:$0xff] %v2415
      %2864 = vst [vmem:[%s431 + $0xf0] sm:$0xff] %v2416
      %2865 = vst [vmem:[%s431 + $0xf8] sm:$0xff] %v2417
      %2866 = vst [vmem:[%s431 + $0x100] sm:$0xff] %v2418
      %2867 = vst [vmem:[%s431 + $0x108] sm:$0xff] %v2419
      %2868 = vst.msk [vmem:[%s431 + $0x110] sm:$0xff] %vm1556, %v2420
      %2869 = vst [vmem:[%s431 + $0x118] sm:$0xff] %v2421
      %2870 = vst [vmem:[%s431 + $0x120] sm:$0xff] %v2422
      %2871 = vst [vmem:[%s431 + $0x128] sm:$0xff] %v2423
      %2872 = vst [vmem:[%s431 + $0x130] sm:$0xff] %v2424
      %2873 = vst [vmem:[%s431 + $0x138] sm:$0xff] %v2425
      %2874 = vst [vmem:[%s431 + $0x140] sm:$0xff] %v2426
      %2875 = vst.msk [vmem:[%s431 + $0x148] sm:$0xff] %vm1556, %v2427
      %2876 = vst [vmem:[%s431 + $0x150] sm:$0xff] %v2428
      %2877 = vst [vmem:[%s431 + $0x158] sm:$0xff] %v2429
      %2878 = vst [vmem:[%s431 + $0x160] sm:$0xff] %v2430
      %2879 = vst [vmem:[%s431 + $0x168] sm:$0xff] %v2431
      %2880 = vst [vmem:[%s431 + $0x170] sm:$0xff] %v2432
      %2881 = vst [vmem:[%s431 + $0x178] sm:$0xff] %v2433
      %2882 = vst.msk [vmem:[%s431 + $0x180] sm:$0xff] %vm1556, %v2434
      %2883 = vst [vmem:[%s431 + $0x188] sm:$0xff] %v2435
      %2884 = vst [vmem:[%s431 + $0x190] sm:$0xff] %v2436
      %2885 = vst [vmem:[%s431 + $0x198] sm:$0xff] %v2437
      %2886 = vst [vmem:[%s431 + $0x1a0] sm:$0xff] %v2438
      %2887 = vst [vmem:[%s431 + $0x1a8] sm:$0xff] %v2439
      %2888 = vst [vmem:[%s431 + $0x1b0] sm:$0xff] %v2440
      %2889 = vst.msk [vmem:[%s431 + $0x1b8] sm:$0xff] %vm1556, %v2441
      %2890 = vst [vmem:[%s431 + $0x1c0] sm:$0xff] %v2442
      %2891 = vst [vmem:[%s431 + $0x1c8] sm:$0xff] %v2443
      %2892 = vst [vmem:[%s431 + $0x1d0] sm:$0xff] %v2444
      %2893 = vst [vmem:[%s431 + $0x1d8] sm:$0xff] %v2445
      %2894 = vst [vmem:[%s431 + $0x1e0] sm:$0xff] %v2446
      %2895 = vst [vmem:[%s431 + $0x1e8] sm:$0xff] %v2447
      %2896 = vst.msk [vmem:[%s431 + $0x1f0] sm:$0xff] %vm1556, %v2448
      %2897 = vst [vmem:[%s431 + $0x1f8] sm:$0xff] %v2449
      %2898 = vst [vmem:[%s431 + $0x200] sm:$0xff] %v2450
      %2899 = vst [vmem:[%s431 + $0x208] sm:$0xff] %v2451
      %2900 = vst [vmem:[%s431 + $0x210] sm:$0xff] %v2452
      %2901 = vst [vmem:[%s431 + $0x218] sm:$0xff] %v2453
      %2902 = vst [vmem:[%s431 + $0x220] sm:$0xff] %v2454
      %2903 = vst.msk [vmem:[%s431 + $0x228] sm:$0xff] %vm1556, %v2455
      %2904 = vst [vmem:[%s431 + $0x230] sm:$0xff] %v2456
      %2905 = vst [vmem:[%s431 + $0x238] sm:$0xff] %v2457
      %2906 = vst [vmem:[%s431 + $0x240] sm:$0xff] %v2458
      %2907 = vst [vmem:[%s431 + $0x248] sm:$0xff] %v2459
      %2908 = vst [vmem:[%s431 + $0x250] sm:$0xff] %v2460
      %2909 = vst [vmem:[%s431 + $0x258] sm:$0xff] %v2461
      %2910 = vst.msk [vmem:[%s431 + $0x260] sm:$0xff] %vm1556, %v2462
      %2911 = vst [vmem:[%s431 + $0x268] sm:$0xff] %v2463
      %2912 = vst [vmem:[%s431 + $0x270] sm:$0xff] %v2464
      %2913 = vst [vmem:[%s431 + $0x278] sm:$0xff] %v2465
      %2914 = vst [vmem:[%s431 + $0x280] sm:$0xff] %v2466
      %2915 = vst [vmem:[%s431 + $0x288] sm:$0xff] %v2467
      %2916 = vst [vmem:[%s431 + $0x290] sm:$0xff] %v2468
      %2917 = vst.msk [vmem:[%s431 + $0x298] sm:$0xff] %vm1556, %v2469
      %2918 = vst [vmem:[%s431 + $0x2a0] sm:$0xff] %v2470
      %2919 = vst [vmem:[%s431 + $0x2a8] sm:$0xff] %v2471
      %2920 = vst [vmem:[%s431 + $0x2b0] sm:$0xff] %v2472
      %2921 = vst [vmem:[%s431 + $0x2b8] sm:$0xff] %v2473
      %2922 = vst [vmem:[%s431 + $0x2c0] sm:$0xff] %v2474
      %2923 = vst [vmem:[%s431 + $0x2c8] sm:$0xff] %v2475
      %2924 = vst.msk [vmem:[%s431 + $0x2d0] sm:$0xff] %vm1556, %v2476
      %2925 = vst [vmem:[%s431 + $0x2d8] sm:$0xff] %v2477
      %2926 = vst [vmem:[%s431 + $0x2e0] sm:$0xff] %v2478
      %2927 = vst [vmem:[%s431 + $0x2e8] sm:$0xff] %v2479
      %2928 = vst [vmem:[%s431 + $0x2f0] sm:$0xff] %v2480
      %2929 = vst [vmem:[%s431 + $0x2f8] sm:$0xff] %v2481
      %2930 = vst [vmem:[%s431 + $0x300] sm:$0xff] %v2482
      %2931 = vst.msk [vmem:[%s431 + $0x308] sm:$0xff] %vm1556, %v2483
      %2932 = vst [vmem:[%s431 + $0x310] sm:$0xff] %v2484
      %2933 = vst [vmem:[%s431 + $0x318] sm:$0xff] %v2485
      %2934 = vst [vmem:[%s431 + $0x320] sm:$0xff] %v2486
      %2935 = vst [vmem:[%s431 + $0x328] sm:$0xff] %v2487
      %2936 = vst [vmem:[%s431 + $0x330] sm:$0xff] %v2488
      %2937 = vst [vmem:[%s431 + $0x338] sm:$0xff] %v2489
      %2938 = vst.msk [vmem:[%s431 + $0x340] sm:$0xff] %vm1556, %v2490
      %2939 = vst [vmem:[%s431 + $0x348] sm:$0xff] %v2491
      %2940 = vst [vmem:[%s431 + $0x350] sm:$0xff] %v2492
      %2941 = vst [vmem:[%s431 + $0x358] sm:$0xff] %v2493
      %2942 = vst [vmem:[%s431 + $0x360] sm:$0xff] %v2494
      %2943 = vst [vmem:[%s431 + $0x368] sm:$0xff] %v2495
      %2944 = vst [vmem:[%s431 + $0x370] sm:$0xff] %v2496
      %2945 = vst.msk [vmem:[%s431 + $0x378] sm:$0xff] %vm1556, %v2497
      %2946 = vst [vmem:[%s431 + $0x380] sm:$0xff] %v2498
      %2947 = vst [vmem:[%s431 + $0x388] sm:$0xff] %v2499
      %2948 = vst [vmem:[%s431 + $0x390] sm:$0xff] %v2500
      %2949 = vst [vmem:[%s431 + $0x398] sm:$0xff] %v2501
      %2950 = vst [vmem:[%s431 + $0x3a0] sm:$0xff] %v2502
      %2951 = vst [vmem:[%s431 + $0x3a8] sm:$0xff] %v2503
      %2952 = vst.msk [vmem:[%s431 + $0x3b0] sm:$0xff] %vm1556, %v2504
      %2953 = vst [vmem:[%s431 + $0x3b8] sm:$0xff] %v2505
      %2954 = vst [vmem:[%s431 + $0x3c0] sm:$0xff] %v2506
      %2955 = vst [vmem:[%s431 + $0x3c8] sm:$0xff] %v2507
      %2956 = vst [vmem:[%s431 + $0x3d0] sm:$0xff] %v2508
      %2957 = vst [vmem:[%s431 + $0x3d8] sm:$0xff] %v2509
      %2958 = vst [vmem:[%s431 + $0x3e0] sm:$0xff] %v2510
      %2959 = vst.msk [vmem:[%s431 + $0x3e8] sm:$0xff] %vm1556, %v2511
      %2960 = vst [vmem:[%s431 + $0x3f0] sm:$0xff] %v2512
      %2961 = vst [vmem:[%s431 + $0x3f8] sm:$0xff] %v2513
      %2962 = vst [vmem:[%s431 + $0x400] sm:$0xff] %v2514
      %2963 = vst [vmem:[%s431 + $0x408] sm:$0xff] %v2515
      %2964 = vst [vmem:[%s431 + $0x410] sm:$0xff] %v2516
      %2965 = vst [vmem:[%s431 + $0x418] sm:$0xff] %v2517
      %2966 = vst.msk [vmem:[%s431 + $0x420] sm:$0xff] %vm1556, %v2518
      %2967 = vst [vmem:[%s431 + $0x428] sm:$0xff] %v2519
      %2968 = vst [vmem:[%s431 + $0x430] sm:$0xff] %v2520
      %2969 = vst [vmem:[%s431 + $0x438] sm:$0xff] %v2521
      %2970 = vst [vmem:[%s431 + $0x440] sm:$0xff] %v2522
      %2971 = vst [vmem:[%s431 + $0x448] sm:$0xff] %v2523
      %2972 = vst [vmem:[%s431 + $0x450] sm:$0xff] %v2524
      %2973 = vst.msk [vmem:[%s431 + $0x458] sm:$0xff] %vm1556, %v2525
      %2974 = vst [vmem:[%s431 + $0x460] sm:$0xff] %v2526
      %2975 = vst [vmem:[%s431 + $0x468] sm:$0xff] %v2527
      %2976 = vst [vmem:[%s431 + $0x470] sm:$0xff] %v2528
      %2977 = vst [vmem:[%s431 + $0x478] sm:$0xff] %v2529
      %2978 = vst [vmem:[%s431 + $0x480] sm:$0xff] %v2530
      %2979 = vst [vmem:[%s431 + $0x488] sm:$0xff] %v2531
      %2980 = vst.msk [vmem:[%s431 + $0x490] sm:$0xff] %vm1556, %v2532
      %2981 = vst [vmem:[%s431 + $0x498] sm:$0xff] %v2533
      %2982 = vst [vmem:[%s431 + $0x4a0] sm:$0xff] %v2534
      %2983 = vst [vmem:[%s431 + $0x4a8] sm:$0xff] %v2535
      %2984 = vst [vmem:[%s431 + $0x4b0] sm:$0xff] %v2536
      %2985 = vst [vmem:[%s431 + $0x4b8] sm:$0xff] %v2537
      %2986 = vst [vmem:[%s431 + $0x4c0] sm:$0xff] %v2538
      %2987 = vst.msk [vmem:[%s431 + $0x4c8] sm:$0xff] %vm1556, %v2539
      %2988 = vst [vmem:[%s431 + $0x4d0] sm:$0xff] %v2540
      %2989 = vst [vmem:[%s431 + $0x4d8] sm:$0xff] %v2541
      %2990 = vst [vmem:[%s431 + $0x4e0] sm:$0xff] %v2542
      %2991 = vst [vmem:[%s431 + $0x4e8] sm:$0xff] %v2543
      %2992 = vst [vmem:[%s431 + $0x4f0] sm:$0xff] %v2544
      %2993 = vst [vmem:[%s431 + $0x4f8] sm:$0xff] %v2545
      %2994 = vst.msk [vmem:[%s431 + $0x500] sm:$0xff] %vm1556, %v2546
      %2995 = vst [vmem:[%s431 + $0x508] sm:$0xff] %v2547
      %2996 = vst [vmem:[%s431 + $0x510] sm:$0xff] %v2548
      %2997 = vst [vmem:[%s431 + $0x518] sm:$0xff] %v2549
      %2998 = vst [vmem:[%s431 + $0x520] sm:$0xff] %v2550
      %2999 = vst [vmem:[%s431 + $0x528] sm:$0xff] %v2551
      %3000 = vst [vmem:[%s431 + $0x530] sm:$0xff] %v2552
      %3001 = vst.msk [vmem:[%s431 + $0x538] sm:$0xff] %vm1556, %v2553
      %3002 = vst [vmem:[%s431 + $0x540] sm:$0xff] %v2554
      %3003 = vst [vmem:[%s431 + $0x548] sm:$0xff] %v2555
      %3004 = vst [vmem:[%s431 + $0x550] sm:$0xff] %v2556
      %3005 = vst [vmem:[%s431 + $0x558] sm:$0xff] %v2557
      %3006 = vst [vmem:[%s431 + $0x560] sm:$0xff] %v2558
      %3007 = vst [vmem:[%s431 + $0x568] sm:$0xff] %v2559
      %3008 = vst.msk [vmem:[%s431 + $0x570] sm:$0xff] %vm1556, %v2560
      %3009 = vst [vmem:[%s431 + $0x578] sm:$0xff] %v2561
      %3010 = vst [vmem:[%s431 + $0x580] sm:$0xff] %v2562
      %3011 = vst [vmem:[%s431 + $0x588] sm:$0xff] %v2563
      %3012 = vst [vmem:[%s431 + $0x590] sm:$0xff] %v2564
      %3013 = vst [vmem:[%s431 + $0x598] sm:$0xff] %v2565
      %3014 = vst [vmem:[%s431 + $0x5a0] sm:$0xff] %v2566
      %3015 = vst.msk [vmem:[%s431 + $0x5a8] sm:$0xff] %vm1556, %v2567
      %3016 = vst [vmem:[%s431 + $0x5b0] sm:$0xff] %v2568
      %3017 = vst [vmem:[%s431 + $0x5b8] sm:$0xff] %v2569
      %3018 = vst [vmem:[%s431 + $0x5c0] sm:$0xff] %v2570
      %3019 = vst [vmem:[%s431 + $0x5c8] sm:$0xff] %v2571
      %3020 = vst [vmem:[%s431 + $0x5d0] sm:$0xff] %v2572
      %3021 = vst [vmem:[%s431 + $0x5d8] sm:$0xff] %v2573
      %3022 = vst.msk [vmem:[%s431 + $0x5e0] sm:$0xff] %vm1556, %v2574
      %3023 = vst [vmem:[%s431 + $0x5e8] sm:$0xff] %v2575
      %3024 = vst [vmem:[%s431 + $0x5f0] sm:$0xff] %v2576
      %3025 = vst [vmem:[%s431 + $0x5f8] sm:$0xff] %v2577
      %3026 = vst [vmem:[%s431 + $0x600] sm:$0xff] %v2578
      %3027 = vst [vmem:[%s431 + $0x608] sm:$0xff] %v2579
      %3028 = vst [vmem:[%s431 + $0x610] sm:$0xff] %v2580
      %3029 = vst.msk [vmem:[%s431 + $0x618] sm:$0xff] %vm1556, %v2581
      %3030 = vst [vmem:[%s431 + $0x620] sm:$0xff] %v2582
      %3031 = vst [vmem:[%s431 + $0x628] sm:$0xff] %v2583
      %3032 = vst [vmem:[%s431 + $0x630] sm:$0xff] %v2584
      %3033 = vst [vmem:[%s431 + $0x638] sm:$0xff] %v2585
      %3034 = vst [vmem:[%s431 + $0x640] sm:$0xff] %v2586
      %3035 = vst [vmem:[%s431 + $0x648] sm:$0xff] %v2587
      %3036 = vst.msk [vmem:[%s431 + $0x650] sm:$0xff] %vm1556, %v2588
      %3037 = vst [vmem:[%s431 + $0x658] sm:$0xff] %v2589
      %3038 = vst [vmem:[%s431 + $0x660] sm:$0xff] %v2590
      %3039 = vst [vmem:[%s431 + $0x668] sm:$0xff] %v2591
      %3040 = vst [vmem:[%s431 + $0x670] sm:$0xff] %v2592
      %3041 = vst [vmem:[%s431 + $0x678] sm:$0xff] %v2593
      %3042 = vst [vmem:[%s431 + $0x680] sm:$0xff] %v2594
      %3043 = vst.msk [vmem:[%s431 + $0x688] sm:$0xff] %vm1556, %v2595
      %3044 = vst [vmem:[%s431 + $0x690] sm:$0xff] %v2596
      %3045 = vst [vmem:[%s431 + $0x698] sm:$0xff] %v2597
      %3046 = vst [vmem:[%s431 + $0x6a0] sm:$0xff] %v2598
      %3047 = vst [vmem:[%s431 + $0x6a8] sm:$0xff] %v2599
      %3048 = vst [vmem:[%s431 + $0x6b0] sm:$0xff] %v2600
      %3049 = vst [vmem:[%s431 + $0x6b8] sm:$0xff] %v2601
      %3050 = vst.msk [vmem:[%s431 + $0x6c0] sm:$0xff] %vm1556, %v2602
      %3051 = vst [vmem:[%s431 + $0x6c8] sm:$0xff] %v2603
      %3052 = vst [vmem:[%s431 + $0x6d0] sm:$0xff] %v2604
      %3053 = vst [vmem:[%s431 + $0x6d8] sm:$0xff] %v2605
      %3054 = vst [vmem:[%s431 + $0x6e0] sm:$0xff] %v2606
      %3055 = vst [vmem:[%s431 + $0x6e8] sm:$0xff] %v2607
      %3056 = vst [vmem:[%s431 + $0x6f0] sm:$0xff] %v2608
      %3057 = vst.msk [vmem:[%s431 + $0x6f8] sm:$0xff] %vm1556, %v2609
      %3058 = vst [vmem:[%s431 + $0x700] sm:$0xff] %v2610
      %3059 = vst [vmem:[%s431 + $0x708] sm:$0xff] %v2611
      %3060 = vst [vmem:[%s431 + $0x710] sm:$0xff] %v2612
      %3061 = vst [vmem:[%s431 + $0x718] sm:$0xff] %v2613
      %3062 = vst [vmem:[%s431 + $0x720] sm:$0xff] %v2614
      %3063 = vst [vmem:[%s431 + $0x728] sm:$0xff] %v2615
      %3064 = vst.msk [vmem:[%s431 + $0x730] sm:$0xff] %vm1556, %v2616
      %3065 = vst [vmem:[%s431 + $0x738] sm:$0xff] %v2617
      %3066 = vst [vmem:[%s431 + $0x740] sm:$0xff] %v2618
      %3067 = vst [vmem:[%s431 + $0x748] sm:$0xff] %v2619
      %3068 = vst [vmem:[%s431 + $0x750] sm:$0xff] %v2620
      %3069 = vst [vmem:[%s431 + $0x758] sm:$0xff] %v2621
      %3070 = vst [vmem:[%s431 + $0x760] sm:$0xff] %v2622
      %3071 = vst.msk [vmem:[%s431 + $0x768] sm:$0xff] %vm1556, %v2623
      %3072 = vst [vmem:[%s431 + $0x770] sm:$0xff] %v2624
      %3073 = vst [vmem:[%s431 + $0x778] sm:$0xff] %v2625
      %3074 = vst [vmem:[%s431 + $0x780] sm:$0xff] %v2626
      %3075 = vst [vmem:[%s431 + $0x788] sm:$0xff] %v2627
      %3076 = vst [vmem:[%s431 + $0x790] sm:$0xff] %v2628
      %3077 = vst [vmem:[%s431 + $0x798] sm:$0xff] %v2629
      %3078 = vst.msk [vmem:[%s431 + $0x7a0] sm:$0xff] %vm1556, %v2630
      %3079 = vst [vmem:[%s431 + $0x7a8] sm:$0xff] %v2631
      %3080 = vst [vmem:[%s431 + $0x7b0] sm:$0xff] %v2632
      %3081 = vst [vmem:[%s431 + $0x7b8] sm:$0xff] %v2633
      %3082 = vst [vmem:[%s431 + $0x7c0] sm:$0xff] %v2634
      %3083 = vst [vmem:[%s431 + $0x7c8] sm:$0xff] %v2635
      %3084 = vst [vmem:[%s431 + $0x7d0] sm:$0xff] %v2636
      %3085 = vst.msk [vmem:[%s431 + $0x7d8] sm:$0xff] %vm1556, %v2637
      %3086 = vst [vmem:[%s431 + $0x7e0] sm:$0xff] %v2638
      %3087 = vst [vmem:[%s431 + $0x7e8] sm:$0xff] %v2639
      %3088 = vst [vmem:[%s431 + $0x7f0] sm:$0xff] %v2640
      %3089 = vst [vmem:[%s431 + $0x7f8] sm:$0xff] %v2641
      %3090 = vst [vmem:[%s431 + $0x800] sm:$0xff] %v2642
      %3091 = vst [vmem:[%s431 + $0x808] sm:$0xff] %v2643
      %3092 = vst.msk [vmem:[%s431 + $0x810] sm:$0xff] %vm1556, %v2644
      %3093 = vst [vmem:[%s431 + $0x818] sm:$0xff] %v2645
      %3094 = vst [vmem:[%s431 + $0x820] sm:$0xff] %v2646
      %3095 = vst [vmem:[%s431 + $0x828] sm:$0xff] %v2647
      %3096 = vst [vmem:[%s431 + $0x830] sm:$0xff] %v2648
      %3097 = vst [vmem:[%s431 + $0x838] sm:$0xff] %v2649
      %3098 = vst [vmem:[%s431 + $0x840] sm:$0xff] %v2650
      %3099 = vst.msk [vmem:[%s431 + $0x848] sm:$0xff] %vm1556, %v2651
      %3100 = vst [vmem:[%s431 + $0x850] sm:$0xff] %v2652
      %3101 = vst [vmem:[%s431 + $0x858] sm:$0xff] %v2653
      %3102 = vst [vmem:[%s431 + $0x860] sm:$0xff] %v2654
      %3103 = vst [vmem:[%s431 + $0x868] sm:$0xff] %v2655
      %3104 = vst [vmem:[%s431 + $0x870] sm:$0xff] %v2656
      %3105 = vst [vmem:[%s431 + $0x878] sm:$0xff] %v2657
      %3106 = vst.msk [vmem:[%s431 + $0x880] sm:$0xff] %vm1556, %v2658
      %3107 = vst [vmem:[%s431 + $0x888] sm:$0xff] %v2659
      %3108 = vst [vmem:[%s431 + $0x890] sm:$0xff] %v2660
      %3109 = vst [vmem:[%s431 + $0x898] sm:$0xff] %v2661
      %3110 = vst [vmem:[%s431 + $0x8a0] sm:$0xff] %v2662
      %3111 = vst [vmem:[%s431 + $0x8a8] sm:$0xff] %v2663
      %3112 = vst [vmem:[%s431 + $0x8b0] sm:$0xff] %v2664
      %3113 = vst.msk [vmem:[%s431 + $0x8b8] sm:$0xff] %vm1556, %v2665
      %3114 = vst [vmem:[%s431 + $0x8c0] sm:$0xff] %v2666
      %3115 = vst [vmem:[%s431 + $0x8c8] sm:$0xff] %v2667
      %3116 = vst [vmem:[%s431 + $0x8d0] sm:$0xff] %v2668
      %3117 = vst [vmem:[%s431 + $0x8d8] sm:$0xff] %v2669
      %3118 = vst [vmem:[%s431 + $0x8e0] sm:$0xff] %v2670
      %3119 = vst [vmem:[%s431 + $0x8e8] sm:$0xff] %v2671
      %3120 = vst.msk [vmem:[%s431 + $0x8f0] sm:$0xff] %vm1556, %v2672
      %3121 = vst [vmem:[%s431 + $0x8f8] sm:$0xff] %v2673
      %3122 = vst [vmem:[%s431 + $0x900] sm:$0xff] %v2674
      %3123 = vst [vmem:[%s431 + $0x908] sm:$0xff] %v2675
      %3124 = vst [vmem:[%s431 + $0x910] sm:$0xff] %v2676
      %3125 = vst [vmem:[%s431 + $0x918] sm:$0xff] %v2677
      %3126 = vst [vmem:[%s431 + $0x920] sm:$0xff] %v2678
      %3127 = vst.msk [vmem:[%s431 + $0x928] sm:$0xff] %vm1556, %v2679
      %3128 = vst [vmem:[%s431 + $0x930] sm:$0xff] %v2680
      %3129 = vst [vmem:[%s431 + $0x938] sm:$0xff] %v2681
      %3130 = vst [vmem:[%s431 + $0x940] sm:$0xff] %v2682
      %3131 = vst [vmem:[%s431 + $0x948] sm:$0xff] %v2683
      %3132 = vst [vmem:[%s431 + $0x950] sm:$0xff] %v2684
      %3133 = vst [vmem:[%s431 + $0x958] sm:$0xff] %v2685
      %3134 = vst.msk [vmem:[%s431 + $0x960] sm:$0xff] %vm1556, %v2686
      %3135 = vst [vmem:[%s431 + $0x968] sm:$0xff] %v2687
      %3136 = vst [vmem:[%s431 + $0x970] sm:$0xff] %v2688
      %3137 = vst [vmem:[%s431 + $0x978] sm:$0xff] %v2689
      %3138 = vst [vmem:[%s431 + $0x980] sm:$0xff] %v2690
      %3139 = vst [vmem:[%s431 + $0x988] sm:$0xff] %v2691
      %3140 = vst [vmem:[%s431 + $0x990] sm:$0xff] %v2692
      %3141 = vst.msk [vmem:[%s431 + $0x998] sm:$0xff] %vm1556, %v2693
      %3142 = vst [vmem:[%s431 + $0x9a0] sm:$0xff] %v2694
      %3143 = vst [vmem:[%s431 + $0x9a8] sm:$0xff] %v2695
      %3144 = vst [vmem:[%s431 + $0x9b0] sm:$0xff] %v2696
      %3145 = vst [vmem:[%s431 + $0x9b8] sm:$0xff] %v2697
      %3146 = vst [vmem:[%s431 + $0x9c0] sm:$0xff] %v2698
      %3147 = vst [vmem:[%s431 + $0x9c8] sm:$0xff] %v2699
      %3148 = vst.msk [vmem:[%s431 + $0x9d0] sm:$0xff] %vm1556, %v2700
      %3149 = vst [vmem:[%s431 + $0x9d8] sm:$0xff] %v2701
      %3150 = vst [vmem:[%s431 + $0x9e0] sm:$0xff] %v2702
      %3151 = vst [vmem:[%s431 + $0x9e8] sm:$0xff] %v2703
      %3152 = vst [vmem:[%s431 + $0x9f0] sm:$0xff] %v2704
      %3153 = vst [vmem:[%s431 + $0x9f8] sm:$0xff] %v2705
      %3154 = vst [vmem:[%s431 + $0xa00] sm:$0xff] %v2706
      %3155 = vst.msk [vmem:[%s431 + $0xa08] sm:$0xff] %vm1556, %v2707
      %3156 = vst [vmem:[%s431 + $0xa10] sm:$0xff] %v2708
      %3157 = vst [vmem:[%s431 + $0xa18] sm:$0xff] %v2709
      %3158 = vst [vmem:[%s431 + $0xa20] sm:$0xff] %v2710
      %3159 = vst [vmem:[%s431 + $0xa28] sm:$0xff] %v2711
      %3160 = vst [vmem:[%s431 + $0xa30] sm:$0xff] %v2712
      %3161 = vst [vmem:[%s431 + $0xa38] sm:$0xff] %v2713
      %3162 = vst.msk [vmem:[%s431 + $0xa40] sm:$0xff] %vm1556, %v2714
      %3163 = vst [vmem:[%s431 + $0xa48] sm:$0xff] %v2715
      %3164 = vst [vmem:[%s431 + $0xa50] sm:$0xff] %v2716
      %3165 = vst [vmem:[%s431 + $0xa58] sm:$0xff] %v2717
      %3166 = vst [vmem:[%s431 + $0xa60] sm:$0xff] %v2718
      %3167 = vst [vmem:[%s431 + $0xa68] sm:$0xff] %v2719
      %3168 = vst [vmem:[%s431 + $0xa70] sm:$0xff] %v2720
      %3169 = vst.msk [vmem:[%s431 + $0xa78] sm:$0xff] %vm1556, %v2721
      %3170 = vst [vmem:[%s431 + $0xa80] sm:$0xff] %v2722
      %3171 = vst [vmem:[%s431 + $0xa88] sm:$0xff] %v2723
      %3172 = vst [vmem:[%s431 + $0xa90] sm:$0xff] %v2724
      %3173 = vst [vmem:[%s431 + $0xa98] sm:$0xff] %v2725
      %3174 = vst [vmem:[%s431 + $0xaa0] sm:$0xff] %v2726
      %3175 = vst [vmem:[%s431 + $0xaa8] sm:$0xff] %v2727
      %3176 = vst.msk [vmem:[%s431 + $0xab0] sm:$0xff] %vm1556, %v2728
      %3177 = vst [vmem:[%s431 + $0xab8] sm:$0xff] %v2729
      %3178 = vst [vmem:[%s431 + $0xac0] sm:$0xff] %v2730
      %3179 = vst [vmem:[%s431 + $0xac8] sm:$0xff] %v2731
      %3180 = vst [vmem:[%s431 + $0xad0] sm:$0xff] %v2732
      %3181 = vst [vmem:[%s431 + $0xad8] sm:$0xff] %v2733
      %3182 = vst [vmem:[%s431 + $0xae0] sm:$0xff] %v2734
      %3183 = vst.msk [vmem:[%s431 + $0xae8] sm:$0xff] %vm1556, %v2735
      %3184 = vst [vmem:[%s431 + $0xaf0] sm:$0xff] %v2736
      %3185 = vst [vmem:[%s431 + $0xaf8] sm:$0xff] %v2737
      %3186 = vst [vmem:[%s431 + $0xb00] sm:$0xff] %v2738
      %3187 = vst [vmem:[%s431 + $0xb08] sm:$0xff] %v2739
      %3188 = vst [vmem:[%s431 + $0xb10] sm:$0xff] %v2740
      %3189 = vst [vmem:[%s431 + $0xb18] sm:$0xff] %v2741
      %3190 = vst.msk [vmem:[%s431 + $0xb20] sm:$0xff] %vm1556, %v2742
      %3191 = vst [vmem:[%s431 + $0xb28] sm:$0xff] %v2743
      %3192 = vst [vmem:[%s431 + $0xb30] sm:$0xff] %v2744
      %3193 = vst [vmem:[%s431 + $0xb38] sm:$0xff] %v2745
      %3194 = vst [vmem:[%s431 + $0xb40] sm:$0xff] %v2746
      %3195 = vst [vmem:[%s431 + $0xb48] sm:$0xff] %v2747
      %3196 = vst [vmem:[%s431 + $0xb50] sm:$0xff] %v2748
      %3197 = vst.msk [vmem:[%s431 + $0xb58] sm:$0xff] %vm1556, %v2749
      %3198 = vst [vmem:[%s431 + $0xb60] sm:$0xff] %v2750
      %3199 = vst [vmem:[%s431 + $0xb68] sm:$0xff] %v2751
      %3200 = vst [vmem:[%s431 + $0xb70] sm:$0xff] %v2752
      %3201 = vst [vmem:[%s431 + $0xb78] sm:$0xff] %v2753
      %3202 = vst [vmem:[%s431 + $0xb80] sm:$0xff] %v2754
      %3203 = vst [vmem:[%s431 + $0xb88] sm:$0xff] %v2755
      %3204 = vst.msk [vmem:[%s431 + $0xb90] sm:$0xff] %vm1556, %v2756
      %3205 = vst [vmem:[%s431 + $0xb98] sm:$0xff] %v2757
      %3206 = vst [vmem:[%s431 + $0xba0] sm:$0xff] %v2758
      %3207 = vst [vmem:[%s431 + $0xba8] sm:$0xff] %v2759
      %3208 = vst [vmem:[%s431 + $0xbb0] sm:$0xff] %v2760
      %3209 = vst [vmem:[%s431 + $0xbb8] sm:$0xff] %v2761
      %3210 = vst [vmem:[%s431 + $0xbc0] sm:$0xff] %v2762
      %3211 = vst.msk [vmem:[%s431 + $0xbc8] sm:$0xff] %vm1556, %v2763
      %3212 = vst [vmem:[%s431 + $0xbd0] sm:$0xff] %v2764
      %3213 = vst [vmem:[%s431 + $0xbd8] sm:$0xff] %v2765
      %3214 = vst [vmem:[%s431 + $0xbe0] sm:$0xff] %v2766
      %3215 = vst [vmem:[%s431 + $0xbe8] sm:$0xff] %v2767
      %3216 = vst [vmem:[%s431 + $0xbf0] sm:$0xff] %v2768
      %3217 = vst [vmem:[%s431 + $0xbf8] sm:$0xff] %v2769
      %3218 = vst.msk [vmem:[%s431 + $0xc00] sm:$0xff] %vm1556, %v2770
      %3219 = vst [vmem:[%s431 + $0xc08] sm:$0xff] %v2771
      %3220 = vst [vmem:[%s431 + $0xc10] sm:$0xff] %v2772
      %3221 = vst [vmem:[%s431 + $0xc18] sm:$0xff] %v2773
      %3222 = vst [vmem:[%s431 + $0xc20] sm:$0xff] %v2774
      %3223 = vst [vmem:[%s431 + $0xc28] sm:$0xff] %v2775
      %3224 = vst [vmem:[%s431 + $0xc30] sm:$0xff] %v2776
      %3225 = vst.msk [vmem:[%s431 + $0xc38] sm:$0xff] %vm1556, %v2777
      %3226 = vst [vmem:[%s431 + $0xc40] sm:$0xff] %v2778
      %3227 = vst [vmem:[%s431 + $0xc48] sm:$0xff] %v2779
      %3228 = vst [vmem:[%s431 + $0xc50] sm:$0xff] %v2780
      %3229 = vst [vmem:[%s431 + $0xc58] sm:$0xff] %v2781
      %3230 = vst [vmem:[%s431 + $0xc60] sm:$0xff] %v2782
      %3231 = vst [vmem:[%s431 + $0xc68] sm:$0xff] %v2783
      %3232 = vst.msk [vmem:[%s431 + $0xc70] sm:$0xff] %vm1556, %v2784
      %3233 = vst [vmem:[%s431 + $0xc78] sm:$0xff] %v2785
      %3234 = vst [vmem:[%s431 + $0xc80] sm:$0xff] %v2786
      %3235 = vst [vmem:[%s431 + $0xc88] sm:$0xff] %v2787
      %3236 = vst [vmem:[%s431 + $0xc90] sm:$0xff] %v2788
      %3237 = vst [vmem:[%s431 + $0xc98] sm:$0xff] %v2789
      %3238 = vst [vmem:[%s431 + $0xca0] sm:$0xff] %v2790
      %3239 = vst.msk [vmem:[%s431 + $0xca8] sm:$0xff] %vm1556, %v2791
      %3240 = vst [vmem:[%s431 + $0xcb0] sm:$0xff] %v2792
      %3241 = vst [vmem:[%s431 + $0xcb8] sm:$0xff] %v2793
      %3242 = vst [vmem:[%s431 + $0xcc0] sm:$0xff] %v2794
      %3243 = vst [vmem:[%s431 + $0xcc8] sm:$0xff] %v2795
      %3244 = vst [vmem:[%s431 + $0xcd0] sm:$0xff] %v2796
      %3245 = vst [vmem:[%s431 + $0xcd8] sm:$0xff] %v2797
      %3246 = vst.msk [vmem:[%s431 + $0xce0] sm:$0xff] %vm1556, %v2798
      %3247 = vst [vmem:[%s431 + $0xce8] sm:$0xff] %v2799
      %3248 = vst [vmem:[%s431 + $0xcf0] sm:$0xff] %v2800
      %3249 = vst [vmem:[%s431 + $0xcf8] sm:$0xff] %v2801
      %3250 = vst [vmem:[%s431 + $0xd00] sm:$0xff] %v2802
      %3251 = vst [vmem:[%s431 + $0xd08] sm:$0xff] %v2803
      %3252 = vst [vmem:[%s431 + $0xd10] sm:$0xff] %v2804
      %3253 = vst.msk [vmem:[%s431 + $0xd18] sm:$0xff] %vm1556, %v2805
      %3254 = vst [vmem:[%s431 + $0xd20] sm:$0xff] %v2806
      %3255 = vst [vmem:[%s431 + $0xd28] sm:$0xff] %v2807
      %3256 = vst [vmem:[%s431 + $0xd30] sm:$0xff] %v2808
      %3257 = vst [vmem:[%s431 + $0xd38] sm:$0xff] %v2809
      %3258 = vst [vmem:[%s431 + $0xd40] sm:$0xff] %v2810
      %3259 = vst [vmem:[%s431 + $0xd48] sm:$0xff] %v2811
      %3260 = vst.msk [vmem:[%s431 + $0xd50] sm:$0xff] %vm1556, %v2812
      %3261 = vst [vmem:[%s431 + $0xd58] sm:$0xff] %v2813
      %3262 = vst [vmem:[%s431 + $0xd60] sm:$0xff] %v2814
      %3263 = vst [vmem:[%s431 + $0xd68] sm:$0xff] %v2815
      %3264 = vst [vmem:[%s431 + $0xd70] sm:$0xff] %v2816
      %3265 = vst [vmem:[%s431 + $0xd78] sm:$0xff] %v2817
      %3266 = vst [vmem:[%s431 + $0xd80] sm:$0xff] %v2818
      %3267 = vst.msk [vmem:[%s431 + $0xd88] sm:$0xff] %vm1556, %v2819
      %3268 = vst [vmem:[%s431 + $0xd90] sm:$0xff] %v2820
      %3269 = vst [vmem:[%s431 + $0xd98] sm:$0xff] %v2821
      %3270 = vst [vmem:[%s431 + $0xda0] sm:$0xff] %v2822
      %3271 = vst [vmem:[%s431 + $0xda8] sm:$0xff] %v2823
      %3272 = vst [vmem:[%s431 + $0xdb0] sm:$0xff] %v2824
      %3273 = vst [vmem:[%s431 + $0xdb8] sm:$0xff] %v2825
      %3274 = vst.msk [vmem:[%s431 + $0xdc0] sm:$0xff] %vm1556, %v2826
      %3275 = vst [vmem:[%s431 + $0xdc8] sm:$0xff] %v2827
      %3276 = vst [vmem:[%s431 + $0xdd0] sm:$0xff] %v2828
      %3277 = vst [vmem:[%s431 + $0xdd8] sm:$0xff] %v2829
      %3278 = vst [vmem:[%s431 + $0xde0] sm:$0xff] %v2830
      %3279 = vst [vmem:[%s431 + $0xde8] sm:$0xff] %v2831
      %3280 = vst [vmem:[%s431 + $0xdf0] sm:$0xff] %v2832
      %3281 = vst.msk [vmem:[%s431 + $0xdf8] sm:$0xff] %vm1556, %v2833
      // Predicated region
      $region49: #{classifer_forward.1} parent=43 // pred_check
        %p3282 = pneg %p1587
      $region50: #{classifer_forward.1} parent=43 // pred_check_branch
        %3284 = sbr.rel (%p3282) target = $region52
      $region51: #{classifer_forward.1} parent=43 // pred_region
        %v3285 = vld [vmem:[#allocation2] sm:$0xff]
        %v3286 = vld [vmem:[#allocation2 + $0x8] sm:$0xff]
        %v3287 = vld [vmem:[#allocation2 + $0x10] sm:$0xf]
        %v3288 = vmul.f32 %v3285, 0.0012755102
        %v3289 = vmul.f32 %v3286, 0.0012755102
        %v3290 = vmul.f32 %v3287, 0.0012755102
        %v3291 = vld [vmem:[%s4] sm:$0xff]
        %v3292 = vld [vmem:[%s4 + $0x8] sm:$0xff]
        %v3293 = vld [vmem:[%s4 + $0x10] sm:$0xf]
        %v3294 = vadd.f32 %v3288, %v3291
        %v3295 = vadd.f32 %v3289, %v3292
        %v3296 = vadd.f32 %v3290, %v3293
        %3297 = vst.msk [vmem:[%s421] sm:$0xff] %vm1602, %v3294
        %3298 = vst.msk [vmem:[%s421 + $0x8] sm:$0xff] %vm1602, %v3295
        %3299 = vst.msk [vmem:[%s421 + $0x10] sm:$0xf] %vm1605, %v3296
      $region52: #{classifer_forward.1} parent=43 // pred_fallthru
        _
      %p3300 = scmp.lt.s32.totalorder %s23, 1
      %s3301 = scalar_select %p3300, %s23, 1
      %s3302 = smul.addr %s3301, 3
      %s3303 = smul.addr %s3302, 8
      %s3304 = scalar_lea.vmem %s6, %s3303
      %s3305 = smul.u32 64, %s24
      %p3306 = scmp.lt.s32.totalorder %s23, 1
      %s3307 = scalar_select %p3306, %s23, 1
      %p3308 = scmp.lt.s32.totalorder %s3305, 63
      %s3309 = scalar_select %p3308, %s3305, 63
      %s3310 = smul.addr %s3309, 7
      %s3311 = smul.addr %s3307, 448
      %s3312 = sadd.s32 %s3310, %s3311
      %s3313 = smul.addr %s3312, 8
      %s3314 = scalar_lea.vmem %s7, %s3313
      // Predicated region
      $region53: #{classifer_forward.1} parent=43 // pred_check
        %p3315 = pneg %p204
      $region54: #{classifer_forward.1} parent=43 // pred_check_branch
        %3317 = sbr.rel (%p3315) target = $region56
      $region55: #{classifer_forward.1} parent=43 // pred_region
        _
      $region56: #{classifer_forward.1} parent=43 // pred_fallthru
        _
      // Predicated region
      $region57: #{classifer_forward.1} parent=43 // pred_check
        %p3318 = pneg %p232
      $region58: #{classifer_forward.1} parent=43 // pred_check_branch
        %3320 = sbr.rel (%p3318) target = $region60
      $region59: #{classifer_forward.1} parent=43 // pred_region
        %s3321 = smul.u32 64, %s24
      $region60: #{classifer_forward.1} parent=43 // pred_fallthru
        _
    $region44: #{classifer_forward.1} parent=5 // pred_fallthru
      _
    %p3322 = scmp.le.s32.totalorder 2, %s14
    // Predicated region
    $region61: #{classifer_forward.1} parent=5 // pred_check
      %p3323 = pneg %p3322
    $region62: #{classifer_forward.1} parent=5 // pred_check_branch
      %3325 = sbr.rel (%p3323) target = $region64
    $region63: #{classifer_forward.1} parent=5 // pred_region
      %s3326 = ssub.s32 %s14, 2
      // Predicated region
      $region65: #{classifer_forward.1} parent=63 // pred_check
        %p3327 = pneg %p210
      $region66: #{classifer_forward.1} parent=63 // pred_check_branch
        %3329 = sbr.rel (%p3327) target = $region68
      $region67: #{classifer_forward.1} parent=63 // pred_region
        %p3330 = scmp.lt.s32.totalorder %s25, 1
        %s3331 = scalar_select %p3330, %s25, 1
        %s3332 = smul.addr %s3331, 3
        %s3333 = smul.addr %s3332, 8
        %s3334 = scalar_lea.vmem %s6, %s3333
      $region68: #{classifer_forward.1} parent=63 // pred_fallthru
        _
      // Predicated region
      $region69: #{classifer_forward.1} parent=63 // pred_check
        %p3335 = pneg %p238
      $region70: #{classifer_forward.1} parent=63 // pred_check_branch
        %3337 = sbr.rel (%p3335) target = $region72
      $region71: #{classifer_forward.1} parent=63 // pred_region
        %s3338 = smul.u32 64, %s26
        %p3339 = scmp.lt.s32.totalorder %s25, 1
        %s3340 = scalar_select %p3339, %s25, 1
        %p3341 = scmp.lt.s32.totalorder %s3338, 63
        %s3342 = scalar_select %p3341, %s3338, 63
        %s3343 = smul.addr %s3342, 7
        %s3344 = smul.addr %s3340, 448
        %s3345 = sadd.s32 %s3343, %s3344
        %s3346 = smul.addr %s3345, 8
        %s3347 = scalar_lea.vmem %s7, %s3346
      $region72: #{classifer_forward.1} parent=63 // pred_fallthru
        _
    $region64: #{classifer_forward.1} parent=5 // pred_fallthru
      _
  $region6: #{classifer_forward.1} parent=0 // loop_footer
    %s18 = sadd.s32 1, %s14
  $region7: #{classifer_forward.1} parent=0 // loop_footer_branch
    %13 = sbr.rel target = $region3
  $region8: #{classifer_forward.1} parent=0 // loop_exit
    _

</llo_original>
